<compile_context>
chip_gen: v7x
topology: tpu7x:2x2x1
jax: 0.10.0
libtpu: 0.0.40
codegen_flags: <defaults>
</compile_context>

<pallas_src>
import functools

import jax
import jax.numpy as jnp
from jax import lax
from jax.experimental import pallas as pl
from jax.experimental.pallas import tpu as pltpu


def _cdiv(a, b):
    return -(-a // b)


def _chunk_target_rows():
    """~256-row attention chunks on v6e/v7x (256-wide MXU), 128 on v5-class."""
    try:
        kind = jax.devices()[0].device_kind.lower()
    except Exception:
        return 256
    return 128 if "v5" in kind else 256


def _plan_tiling(batch, n_members, chunk_target, slab_target_rows=2048):
    """Pick (chunk_rows, chunks_per_slab, slab_rows, n_slabs).

    chunk_rows is a whole number of batch elements (so every attention chunk
    starts exactly at a batch-element boundary -- required by the precomputed
    member-index bias and block-diagonal mask) and a multiple of 8 (sublane
    alignment of the x slab).
    """
    total_rows = batch * n_members
    cb = min(batch, max(1, chunk_target // n_members))
    while (cb * n_members) % 8 != 0:
        cb += 1
    chunk_rows = cb * n_members
    assert chunk_rows % n_members == 0 and chunk_rows % 8 == 0

    chunks_needed = _cdiv(total_rows, chunk_rows)
    if chunks_needed == 1:
        cps = 1
    else:
        # Big slabs (amortize per-step overhead), but keep >= 2 grid steps so a
        # 2-TensorCore chip (v7x) can shard the "parallel" axis.
        cps = max(1, min(slab_target_rows // chunk_rows, _cdiv(chunks_needed, 2)))
    slab_rows = cps * chunk_rows
    n_slabs = _cdiv(chunks_needed, cps)
    return chunk_rows, cps, slab_rows, n_slabs


def _postpro_kernel(x_ref, w1m_ref, bias1_ref, mask_ref, w2t_ref, b2_ref, ot_ref,
                    *, n_chunks, chunk_rows, slab_rows, total_rows, needs_row_mask):
    # x_ref    : (slab_rows, C)            input rows (batch-major, member-minor)
    # w1m_ref  : (C, H)                    first C rows of linear1 weight
    # bias1_ref: (chunk_rows, H)           b1 + member_idx * w1[C, :]  (hoisted)
    # mask_ref : (chunk_rows, chunk_rows)  additive block-diag mask (0 / -1e30)
    # w2t_ref  : (C, H)                    linear2 weight, transposed
    # b2_ref   : (C, 1)
    # ot_ref   : (n_chunks, C, chunk_rows) transposed, lane-dense output chunks
    w1m = w1m_ref[...]
    bias1 = bias1_ref[...]
    mask_add = mask_ref[...]
    w2t = w2t_ref[...]
    b2 = b2_ref[...]
    n_classes = w1m.shape[0]
    slab_start = pl.program_id(0) * slab_rows

    # Static loop over attention chunks inside the slab.  Every chunk covers a
    # whole number of batch elements (chunk_rows % n_members == 0 and slabs are
    # chunk-aligned), so the precomputed member-index bias and block-diagonal
    # mask line up exactly with the rows of the chunk.
    for ci in range(n_chunks):
        r0 = ci * chunk_rows
        x = x_ref[r0:r0 + chunk_rows, :]                      # (chunk, C)

        # linear1 + relu.  Contraction dim is only n_classes (tiny), so a short
        # FMA chain on the VPU is used instead of an MXU pass; the member-index
        # feature and bias are already folded into bias1.
        hidden = bias1
        for c in range(n_classes):
            hidden = hidden + x[:, c:c + 1] * w1m[c:c + 1, :]
        hidden = jnp.maximum(hidden, 0.0)                     # (chunk, H) f32

        if needs_row_mask:
            # Rows past the real end of the batch (partial last slab) contain
            # stale VMEM; zero their hidden so they cannot poison the matmuls.
            # Their outputs land in padded chunk slots sliced off on the host.
            ridx = slab_start + r0 + lax.broadcasted_iota(
                jnp.int32, (chunk_rows, 1), 0)
            hidden = jnp.where(ridx < total_rows, hidden, 0.0)

        # Attention: bf16 MXU inputs, f32 accumulation.  Members attend only
        # within their own batch element via the additive block-diagonal mask.
        h16 = hidden.astype(jnp.bfloat16)
        scores = lax.dot_general(h16, h16, (((1,), (1,)), ((), ())),
                                 preferred_element_type=jnp.float32)
        scores = scores + mask_add                            # (chunk, chunk)
        m = jnp.max(scores, axis=-1, keepdims=True)
        p = jnp.exp(scores - m)
        inv = 1.0 / jnp.sum(p, axis=-1, keepdims=True)        # exact, (chunk,1)
        attended = lax.dot_general(p.astype(jnp.bfloat16), h16,
                                   (((1,), (0,)), ((), ())),
                                   preferred_element_type=jnp.float32) * inv

        # linear2, computed transposed so the store is lane-dense:
        # (C, chunk_rows) with chunk_rows along lanes.
        out_t = lax.dot_general(w2t, attended, (((1,), (1,)), ((), ())),
                                preferred_element_type=jnp.float32) + b2
        ot_ref[ci] = out_t.astype(ot_ref.dtype)


def postpro_forward(prob, w1, b1, w2, b2):
    """prob: (B, n_members, n_classes) f32 -> (B, n_members, n_classes) f32."""
    B, M, C = prob.shape
    input_dim, H = w1.shape
    assert input_dim == C + 1

    total_rows = B * M
    chunk_rows, cps, slab_rows, n_slabs = _plan_tiling(B, M, _chunk_target_rows())
    padded_chunks = n_slabs * cps
    needs_row_mask = padded_chunks * chunk_rows != total_rows

    # Host-side constants (constant index maps -> DMA'd once, kept in VMEM).
    x2d = prob.reshape(total_rows, C)                         # no pad/concat copy
    w1m = w1[:C, :]                                           # (C, H)
    member_idx = (jnp.arange(chunk_rows, dtype=jnp.int32) % M).astype(jnp.float32)
    bias1 = b1[None, :] + member_idx[:, None] * w1[C, :][None, :]   # (chunk, H)
    blk = jnp.arange(chunk_rows, dtype=jnp.int32) // M
    mask_add = jnp.where(blk[:, None] == blk[None, :],
                         jnp.float32(0.0), jnp.float32(-1e30))       # (chunk, chunk)
    w2t = w2.T                                                # (C, H)
    b2c = b2.reshape(C, 1)

    kernel = functools.partial(
        _postpro_kernel,
        n_chunks=cps, chunk_rows=chunk_rows, slab_rows=slab_rows,
        total_rows=total_rows, needs_row_mask=needs_row_mask)

    # Advisory cost hint for the XLA scheduler.
    flops = padded_chunks * (2 * chunk_rows * C * H
                             + 4 * chunk_rows * chunk_rows * H
                             + 2 * chunk_rows * H * C)
    cost = pl.CostEstimate(
        flops=int(flops),
        transcendentals=int(padded_chunks * chunk_rows * chunk_rows),
        bytes_accessed=int(2 * total_rows * C * 4
                           + 4 * (w1m.size + bias1.size + mask_add.size
                                  + w2t.size + C)))

    grid_spec = pltpu.PrefetchScalarGridSpec(
        num_scalar_prefetch=0,
        grid=(n_slabs,),
        in_specs=[
            pl.BlockSpec((slab_rows, C), lambda s: (s, 0)),           # x slab
            pl.BlockSpec((C, H), lambda s: (0, 0)),                   # w1m
            pl.BlockSpec((chunk_rows, H), lambda s: (0, 0)),          # bias1
            pl.BlockSpec((chunk_rows, chunk_rows), lambda s: (0, 0)),  # mask
            pl.BlockSpec((C, H), lambda s: (0, 0)),                   # w2^T
            pl.BlockSpec((C, 1), lambda s: (0, 0)),                   # b2
        ],
        out_specs=pl.BlockSpec((cps, C, chunk_rows), lambda s: (s, 0, 0)),
    )

    out_t = pl.pallas_call(
        kernel,
        out_shape=jax.ShapeDtypeStruct((padded_chunks, C, chunk_rows), jnp.float32),
        grid_spec=grid_spec,
        compiler_params=pltpu.CompilerParams(dimension_semantics=("parallel",)),
        cost_estimate=cost,
    )(x2d, w1m, bias1, mask_add, w2t, b2c)

    # (chunks, C, rows_per_chunk) -> (rows, C): pure layout plumbing in XLA.
    out = out_t.transpose(0, 2, 1).reshape(padded_chunks * chunk_rows, C)
    return out[:total_rows].reshape(B, M, C)


def init_params(key, n_classes, hidden_dim):
    """Deterministic init mimicking nn.Linear default (uniform +-1/sqrt(fan_in))."""
    input_dim = n_classes + 1
    k1, k2, k3, k4 = jax.random.split(key, 4)
    lim1 = 1.0 / jnp.sqrt(input_dim)
    lim2 = 1.0 / jnp.sqrt(hidden_dim)
    w1 = jax.random.uniform(k1, (input_dim, hidden_dim), jnp.float32, -lim1, lim1)
    b1 = jax.random.uniform(k2, (hidden_dim,), jnp.float32, -lim1, lim1)
    w2 = jax.random.uniform(k3, (hidden_dim, n_classes), jnp.float32, -lim2, lim2)
    b2 = jax.random.uniform(k4, (n_classes,), jnp.float32, -lim2, lim2)
    return w1, b1, w2, b2


def reference_forward(prob, w1, b1, w2, b2):
    """Spec-faithful pure-f32 reference of the PyTorch forward."""
    B, M, C = prob.shape
    hi = lax.Precision.HIGHEST
    idx = jnp.broadcast_to(jnp.arange(M, dtype=prob.dtype)[None, :, None], (B, M, 1))
    x = jnp.concatenate([prob, idx], axis=-1)
    hidden = jax.nn.relu(jnp.einsum("bmi,ih->bmh", x, w1, precision=hi) + b1)
    attn = jax.nn.softmax(
        jnp.einsum("bmh,bnh->bmn", hidden, hidden, precision=hi), axis=-1)
    attended = jnp.einsum("bmn,bnh->bmh", attn, hidden, precision=hi)
    return jnp.einsum("bmh,hc->bmc", attended, w2, precision=hi) + b2


def matched_reference(prob, w1, b1, w2, b2):
    """Reference mirroring the kernel's precision choices (bf16 MXU inputs for
    the attention matmuls, f32 elsewhere) so the kernel can be checked at a
    tight tolerance."""
    B, M, C = prob.shape
    H = w1.shape[1]
    x = prob.reshape(B * M, C)
    member_idx = (jnp.arange(B * M, dtype=jnp.int32) % M).astype(jnp.float32)
    bias1 = b1[None, :] + member_idx[:, None] * w1[C, :][None, :]
    pre = bias1
    for c in range(C):
        pre = pre + x[:, c:c + 1] * w1[c][None, :]
    hidden = jnp.maximum(pre, 0.0).reshape(B, M, H)
    h16 = hidden.astype(jnp.bfloat16)
    scores = jnp.einsum("bmh,bnh->bmn", h16, h16,
                        preferred_element_type=jnp.float32)
    m = scores.max(-1, keepdims=True)
    p = jnp.exp(scores - m)
    inv = 1.0 / p.sum(-1, keepdims=True)
    attended = jnp.einsum("bmn,bnh->bmh", p.astype(jnp.bfloat16), h16,
                          preferred_element_type=jnp.float32) * inv
    return jnp.einsum("bmh,hc->bmc", attended, w2,
                      precision=lax.Precision.HIGHEST,
                      preferred_element_type=jnp.float32) + b2


if __name__ == "__main__":
    n_classes = 4
    n_members = 8
    hidden_dim = 32
    # batch=70 exercises multi-chunk slabs, a partial last slab (row masking)
    # and a fully-padded trailing chunk, while staying tiny.
    batch = 70

    key = jax.random.PRNGKey(0)
    k_prob, k_params = jax.random.split(key)
    prob = jax.random.uniform(k_prob, (batch, n_members, n_classes), jnp.float32)
    w1, b1, w2, b2 = init_params(k_params, n_classes, hidden_dim)

    out = postpro_forward(prob, w1, b1, w2, b2)
    out = jax.block_until_ready(out)
    assert out.shape == (batch, n_members, n_classes)

    # Tight check vs the precision-matched reference (same bf16 MXU inputs):
    # residual differences come only from MXU-vs-XLA accumulation order.
    matched = matched_reference(prob, w1, b1, w2, b2)
    assert jnp.allclose(out, matched, atol=3e-3, rtol=3e-3), float(
        jnp.max(jnp.abs(out - matched)))

    # Loose sanity check vs the spec-faithful full-f32 reference (the gap is
    # the intentional bf16 rounding on the attention matmul inputs).
    ref = reference_forward(prob, w1, b1, w2, b2)
    assert jnp.allclose(out, ref, atol=5e-2, rtol=5e-2), float(
        jnp.max(jnp.abs(out - ref)))

    print("KERNEL_OK")
</pallas_src>

<mosaic_0001>
module attributes {stable_mosaic.version = 11 : i64} {
  func.func @_postpro_kernel(%arg0: i32, %arg1: memref<512x4xf32, #tpu.memory_space<vmem>>, %arg2: memref<4x32xf32, #tpu.memory_space<vmem>>, %arg3: memref<256x32xf32, #tpu.memory_space<vmem>>, %arg4: memref<256x256xf32, #tpu.memory_space<vmem>>, %arg5: memref<4x32xf32, #tpu.memory_space<vmem>>, %arg6: memref<4x1xf32, #tpu.memory_space<vmem>>, %arg7: memref<2x4x256xf32, #tpu.memory_space<vmem>>) attributes {dimension_semantics = [#tpu.dimension_semantics<parallel>], iteration_bounds = array<i64: 2>, scalar_prefetch = 0 : i64, scratch_operands = 0 : i64, tpu.core_type = #tpu.core_type<tc>, window_params = [{transform_indices = @transform_0, window_bounds = array<i64: 512, 4>}, {pipeline_mode = #tpu.pipeline_mode<synchronous>, transform_indices = @transform_1, window_bounds = array<i64: 4, 32>}, {pipeline_mode = #tpu.pipeline_mode<synchronous>, transform_indices = @transform_2, window_bounds = array<i64: 256, 32>}, {pipeline_mode = #tpu.pipeline_mode<synchronous>, transform_indices = @transform_3, window_bounds = array<i64: 256, 256>}, {pipeline_mode = #tpu.pipeline_mode<synchronous>, transform_indices = @transform_4, window_bounds = array<i64: 4, 32>}, {pipeline_mode = #tpu.pipeline_mode<synchronous>, transform_indices = @transform_5, window_bounds = array<i64: 4, 1>}, {transform_indices = @transform_6, window_bounds = array<i64: 2, 4, 256>}]} {
    %c0 = arith.constant 0 : index
    %c0_0 = arith.constant 0 : index
    %0 = vector.load %arg2[%c0, %c0_0] : memref<4x32xf32, #tpu.memory_space<vmem>>, vector<4x32xf32>
    %c0_1 = arith.constant 0 : index
    %c0_2 = arith.constant 0 : index
    %1 = vector.load %arg3[%c0_1, %c0_2] : memref<256x32xf32, #tpu.memory_space<vmem>>, vector<256x32xf32>
    %c0_3 = arith.constant 0 : index
    %c0_4 = arith.constant 0 : index
    %2 = vector.load %arg4[%c0_3, %c0_4] : memref<256x256xf32, #tpu.memory_space<vmem>>, vector<256x256xf32>
    %c0_5 = arith.constant 0 : index
    %c0_6 = arith.constant 0 : index
    %3 = vector.load %arg5[%c0_5, %c0_6] : memref<4x32xf32, #tpu.memory_space<vmem>>, vector<4x32xf32>
    %c0_7 = arith.constant 0 : index
    %c0_8 = arith.constant 0 : index
    %4 = vector.load %arg6[%c0_7, %c0_8] : memref<4x1xf32, #tpu.memory_space<vmem>>, vector<4x1xf32>
    %c512_i32 = arith.constant 512 : i32
    %5 = arith.muli %arg0, %c512_i32 : i32
    %c0_9 = arith.constant 0 : index
    %c0_10 = arith.constant 0 : index
    %6 = vector.load %arg1[%c0_9, %c0_10] : memref<512x4xf32, #tpu.memory_space<vmem>>, vector<256x4xf32>
    %7 = vector.extract_strided_slice %6 {offsets = [0, 0], sizes = [256, 1], strides = [1, 1]} : vector<256x4xf32> to vector<256x1xf32>
    %8 = vector.extract_strided_slice %0 {offsets = [0, 0], sizes = [1, 32], strides = [1, 1]} : vector<4x32xf32> to vector<1x32xf32>
    %9 = vector.broadcast %7 : vector<256x1xf32> to vector<256x32xf32>
    %10 = vector.broadcast %8 : vector<1x32xf32> to vector<256x32xf32>
    %11 = arith.mulf %9, %10 : vector<256x32xf32>
    %12 = arith.addf %1, %11 : vector<256x32xf32>
    %13 = vector.extract_strided_slice %6 {offsets = [0, 1], sizes = [256, 1], strides = [1, 1]} : vector<256x4xf32> to vector<256x1xf32>
    %14 = vector.extract_strided_slice %0 {offsets = [1, 0], sizes = [1, 32], strides = [1, 1]} : vector<4x32xf32> to vector<1x32xf32>
    %15 = vector.broadcast %13 : vector<256x1xf32> to vector<256x32xf32>
    %16 = vector.broadcast %14 : vector<1x32xf32> to vector<256x32xf32>
    %17 = arith.mulf %15, %16 : vector<256x32xf32>
    %18 = arith.addf %12, %17 : vector<256x32xf32>
    %19 = vector.extract_strided_slice %6 {offsets = [0, 2], sizes = [256, 1], strides = [1, 1]} : vector<256x4xf32> to vector<256x1xf32>
    %20 = vector.extract_strided_slice %0 {offsets = [2, 0], sizes = [1, 32], strides = [1, 1]} : vector<4x32xf32> to vector<1x32xf32>
    %21 = vector.broadcast %19 : vector<256x1xf32> to vector<256x32xf32>
    %22 = vector.broadcast %20 : vector<1x32xf32> to vector<256x32xf32>
    %23 = arith.mulf %21, %22 : vector<256x32xf32>
    %24 = arith.addf %18, %23 : vector<256x32xf32>
    %25 = vector.extract_strided_slice %6 {offsets = [0, 3], sizes = [256, 1], strides = [1, 1]} : vector<256x4xf32> to vector<256x1xf32>
    %26 = vector.extract_strided_slice %0 {offsets = [3, 0], sizes = [1, 32], strides = [1, 1]} : vector<4x32xf32> to vector<1x32xf32>
    %27 = vector.broadcast %25 : vector<256x1xf32> to vector<256x32xf32>
    %28 = vector.broadcast %26 : vector<1x32xf32> to vector<256x32xf32>
    %29 = arith.mulf %27, %28 : vector<256x32xf32>
    %30 = arith.addf %24, %29 : vector<256x32xf32>
    %cst = arith.constant 0.000000e+00 : f32
    %31 = vector.broadcast %cst : f32 to vector<256x32xf32>
    %32 = arith.maximumf %30, %31 : vector<256x32xf32>
    %c0_i32 = arith.constant 0 : i32
    %33 = arith.addi %5, %c0_i32 : i32
    %34 = tpu.iota {dimensions = array<i32: 0>} : vector<256x1xi32>
    %35 = vector.broadcast %33 : i32 to vector<256x1xi32>
    %36 = arith.addi %35, %34 : vector<256x1xi32>
    %c560_i32 = arith.constant 560 : i32
    %37 = vector.broadcast %c560_i32 : i32 to vector<256x1xi32>
    %38 = arith.cmpi slt, %36, %37 : vector<256x1xi32>
    %cst_11 = arith.constant 0.000000e+00 : f32
    %39 = vector.shape_cast %38 : vector<256x1xi1> to vector<256x1xi1>
    %40 = vector.broadcast %39 : vector<256x1xi1> to vector<256x32xi1>
    %41 = vector.broadcast %cst_11 : f32 to vector<256x32xf32>
    %42 = arith.select %40, %32, %41 : vector<256x32xi1>, vector<256x32xf32>
    %43 = arith.truncf %42 : vector<256x32xf32> to vector<256x32xbf16>
    %cst_12 = arith.constant dense<0.000000e+00> : vector<256x256xf32>
    %44 = tpu.matmul %43, %43, %cst_12 {dimension_numbers = #tpu.dot_dimension_numbers<[1], [1], [0], [0], [0, 0, 1, 0], [], []>} : vector<256x32xbf16>, vector<256x32xbf16>, vector<256x256xf32> -> vector<256x256xf32>
    %45 = arith.addf %44, %2 : vector<256x256xf32>
    %cst_13 = arith.constant dense<0xFF800000> : vector<256xf32>
    %46 = vector.multi_reduction <maximumf>, %45, %cst_13 [1] : vector<256x256xf32> to vector<256xf32>
    %47 = vector.shape_cast %46 : vector<256xf32> to vector<256x1xf32>
    %48 = vector.broadcast %47 : vector<256x1xf32> to vector<256x256xf32>
    %49 = arith.subf %45, %48 : vector<256x256xf32>
    %50 = math.exp %49 : vector<256x256xf32>
    %cst_14 = arith.constant dense<0.000000e+00> : vector<256xf32>
    %51 = vector.multi_reduction <add>, %50, %cst_14 [1] : vector<256x256xf32> to vector<256xf32>
    %52 = vector.shape_cast %51 : vector<256xf32> to vector<256x1xf32>
    %cst_15 = arith.constant 1.000000e+00 : f32
    %53 = vector.broadcast %cst_15 : f32 to vector<256x1xf32>
    %54 = arith.divf %53, %52 : vector<256x1xf32>
    %55 = arith.truncf %50 : vector<256x256xf32> to vector<256x256xbf16>
    %cst_16 = arith.constant dense<0.000000e+00> : vector<256x32xf32>
    %56 = tpu.matmul %55, %43, %cst_16 {dimension_numbers = #tpu.dot_dimension_numbers<[1], [0], [0], [1], [0, 0, 1, 1], [], []>} : vector<256x256xbf16>, vector<256x32xbf16>, vector<256x32xf32> -> vector<256x32xf32>
    %57 = vector.broadcast %54 : vector<256x1xf32> to vector<256x32xf32>
    %58 = arith.mulf %56, %57 : vector<256x32xf32>
    %cst_17 = arith.constant dense<0.000000e+00> : vector<4x256xf32>
    %59 = tpu.matmul %3, %58, %cst_17 {dimension_numbers = #tpu.dot_dimension_numbers<[1], [1], [0], [0], [0, 0, 1, 0], [], []>} : vector<4x32xf32>, vector<256x32xf32>, vector<4x256xf32> -> vector<4x256xf32>
    %60 = vector.broadcast %4 : vector<4x1xf32> to vector<4x256xf32>
    %61 = arith.addf %59, %60 : vector<4x256xf32>
    %c0_18 = arith.constant 0 : index
    %c0_19 = arith.constant 0 : index
    %c0_20 = arith.constant 0 : index
    %62 = vector.load %arg7[%c0_18, %c0_19, %c0_20] : memref<2x4x256xf32, #tpu.memory_space<vmem>>, vector<1x4x256xf32>
    %63 = vector.shape_cast %62 : vector<1x4x256xf32> to vector<4x256xf32>
    %64 = vector.shape_cast %61 : vector<4x256xf32> to vector<1x4x256xf32>
    tpu.vector_store %arg7[%c0_18, %c0_19, %c0_20], %64 {strides = array<i32>} : memref<2x4x256xf32, #tpu.memory_space<vmem>>, vector<1x4x256xf32>,
    %c256 = arith.constant 256 : index
    %c0_21 = arith.constant 0 : index
    %65 = vector.load %arg1[%c256, %c0_21] : memref<512x4xf32, #tpu.memory_space<vmem>>, vector<256x4xf32>
    %66 = vector.extract_strided_slice %65 {offsets = [0, 0], sizes = [256, 1], strides = [1, 1]} : vector<256x4xf32> to vector<256x1xf32>
    %67 = vector.extract_strided_slice %0 {offsets = [0, 0], sizes = [1, 32], strides = [1, 1]} : vector<4x32xf32> to vector<1x32xf32>
    %68 = vector.broadcast %66 : vector<256x1xf32> to vector<256x32xf32>
    %69 = vector.broadcast %67 : vector<1x32xf32> to vector<256x32xf32>
    %70 = arith.mulf %68, %69 : vector<256x32xf32>
    %71 = arith.addf %1, %70 : vector<256x32xf32>
    %72 = vector.extract_strided_slice %65 {offsets = [0, 1], sizes = [256, 1], strides = [1, 1]} : vector<256x4xf32> to vector<256x1xf32>
    %73 = vector.extract_strided_slice %0 {offsets = [1, 0], sizes = [1, 32], strides = [1, 1]} : vector<4x32xf32> to vector<1x32xf32>
    %74 = vector.broadcast %72 : vector<256x1xf32> to vector<256x32xf32>
    %75 = vector.broadcast %73 : vector<1x32xf32> to vector<256x32xf32>
    %76 = arith.mulf %74, %75 : vector<256x32xf32>
    %77 = arith.addf %71, %76 : vector<256x32xf32>
    %78 = vector.extract_strided_slice %65 {offsets = [0, 2], sizes = [256, 1], strides = [1, 1]} : vector<256x4xf32> to vector<256x1xf32>
    %79 = vector.extract_strided_slice %0 {offsets = [2, 0], sizes = [1, 32], strides = [1, 1]} : vector<4x32xf32> to vector<1x32xf32>
    %80 = vector.broadcast %78 : vector<256x1xf32> to vector<256x32xf32>
    %81 = vector.broadcast %79 : vector<1x32xf32> to vector<256x32xf32>
    %82 = arith.mulf %80, %81 : vector<256x32xf32>
    %83 = arith.addf %77, %82 : vector<256x32xf32>
    %84 = vector.extract_strided_slice %65 {offsets = [0, 3], sizes = [256, 1], strides = [1, 1]} : vector<256x4xf32> to vector<256x1xf32>
    %85 = vector.extract_strided_slice %0 {offsets = [3, 0], sizes = [1, 32], strides = [1, 1]} : vector<4x32xf32> to vector<1x32xf32>
    %86 = vector.broadcast %84 : vector<256x1xf32> to vector<256x32xf32>
    %87 = vector.broadcast %85 : vector<1x32xf32> to vector<256x32xf32>
    %88 = arith.mulf %86, %87 : vector<256x32xf32>
    %89 = arith.addf %83, %88 : vector<256x32xf32>
    %cst_22 = arith.constant 0.000000e+00 : f32
    %90 = vector.broadcast %cst_22 : f32 to vector<256x32xf32>
    %91 = arith.maximumf %89, %90 : vector<256x32xf32>
    %c256_i32 = arith.constant 256 : i32
    %92 = arith.addi %5, %c256_i32 : i32
    %93 = tpu.iota {dimensions = array<i32: 0>} : vector<256x1xi32>
    %94 = vector.broadcast %92 : i32 to vector<256x1xi32>
    %95 = arith.addi %94, %93 : vector<256x1xi32>
    %c560_i32_23 = arith.constant 560 : i32
    %96 = vector.broadcast %c560_i32_23 : i32 to vector<256x1xi32>
    %97 = arith.cmpi slt, %95, %96 : vector<256x1xi32>
    %cst_24 = arith.constant 0.000000e+00 : f32
    %98 = vector.shape_cast %97 : vector<256x1xi1> to vector<256x1xi1>
    %99 = vector.broadcast %98 : vector<256x1xi1> to vector<256x32xi1>
    %100 = vector.broadcast %cst_24 : f32 to vector<256x32xf32>
    %101 = arith.select %99, %91, %100 : vector<256x32xi1>, vector<256x32xf32>
    %102 = arith.truncf %101 : vector<256x32xf32> to vector<256x32xbf16>
    %cst_25 = arith.constant dense<0.000000e+00> : vector<256x256xf32>
    %103 = tpu.matmul %102, %102, %cst_25 {dimension_numbers = #tpu.dot_dimension_numbers<[1], [1], [0], [0], [0, 0, 1, 0], [], []>} : vector<256x32xbf16>, vector<256x32xbf16>, vector<256x256xf32> -> vector<256x256xf32>
    %104 = arith.addf %103, %2 : vector<256x256xf32>
    %cst_26 = arith.constant dense<0xFF800000> : vector<256xf32>
    %105 = vector.multi_reduction <maximumf>, %104, %cst_26 [1] : vector<256x256xf32> to vector<256xf32>
    %106 = vector.shape_cast %105 : vector<256xf32> to vector<256x1xf32>
    %107 = vector.broadcast %106 : vector<256x1xf32> to vector<256x256xf32>
    %108 = arith.subf %104, %107 : vector<256x256xf32>
    %109 = math.exp %108 : vector<256x256xf32>
    %cst_27 = arith.constant dense<0.000000e+00> : vector<256xf32>
    %110 = vector.multi_reduction <add>, %109, %cst_27 [1] : vector<256x256xf32> to vector<256xf32>
    %111 = vector.shape_cast %110 : vector<256xf32> to vector<256x1xf32>
    %cst_28 = arith.constant 1.000000e+00 : f32
    %112 = vector.broadcast %cst_28 : f32 to vector<256x1xf32>
    %113 = arith.divf %112, %111 : vector<256x1xf32>
    %114 = arith.truncf %109 : vector<256x256xf32> to vector<256x256xbf16>
    %cst_29 = arith.constant dense<0.000000e+00> : vector<256x32xf32>
    %115 = tpu.matmul %114, %102, %cst_29 {dimension_numbers = #tpu.dot_dimension_numbers<[1], [0], [0], [1], [0, 0, 1, 1], [], []>} : vector<256x256xbf16>, vector<256x32xbf16>, vector<256x32xf32> -> vector<256x32xf32>
    %116 = vector.broadcast %113 : vector<256x1xf32> to vector<256x32xf32>
    %117 = arith.mulf %115, %116 : vector<256x32xf32>
    %cst_30 = arith.constant dense<0.000000e+00> : vector<4x256xf32>
    %118 = tpu.matmul %3, %117, %cst_30 {dimension_numbers = #tpu.dot_dimension_numbers<[1], [1], [0], [0], [0, 0, 1, 0], [], []>} : vector<4x32xf32>, vector<256x32xf32>, vector<4x256xf32> -> vector<4x256xf32>
    %119 = vector.broadcast %4 : vector<4x1xf32> to vector<4x256xf32>
    %120 = arith.addf %118, %119 : vector<4x256xf32>
    %c1 = arith.constant 1 : index
    %c0_31 = arith.constant 0 : index
    %c0_32 = arith.constant 0 : index
    %121 = vector.load %arg7[%c1, %c0_31, %c0_32] : memref<2x4x256xf32, #tpu.memory_space<vmem>>, vector<1x4x256xf32>
    %122 = vector.shape_cast %121 : vector<1x4x256xf32> to vector<4x256xf32>
    %123 = vector.shape_cast %120 : vector<4x256xf32> to vector<1x4x256xf32>
    tpu.vector_store %arg7[%c1, %c0_31, %c0_32], %123 {strides = array<i32>} : memref<2x4x256xf32, #tpu.memory_space<vmem>>, vector<1x4x256xf32>,
    return
  }
  func.func @transform_0(%arg0: i32) -> (i32, i32) {
    %c0_i32 = arith.constant 0 : i32
    %c0_i32_0 = arith.constant 0 : i32
    return %arg0, %c0_i32 : i32, i32
  }
  func.func @transform_1(%arg0: i32) -> (i32, i32) {
    %c0_i32 = arith.constant 0 : i32
    %c0_i32_0 = arith.constant 0 : i32
    %c0_i32_1 = arith.constant 0 : i32
    return %c0_i32, %c0_i32_0 : i32, i32
  }
  func.func @transform_2(%arg0: i32) -> (i32, i32) {
    %c0_i32 = arith.constant 0 : i32
    %c0_i32_0 = arith.constant 0 : i32
    %c0_i32_1 = arith.constant 0 : i32
    return %c0_i32, %c0_i32_0 : i32, i32
  }
  func.func @transform_3(%arg0: i32) -> (i32, i32) {
    %c0_i32 = arith.constant 0 : i32
    %c0_i32_0 = arith.constant 0 : i32
    %c0_i32_1 = arith.constant 0 : i32
    return %c0_i32, %c0_i32_0 : i32, i32
  }
  func.func @transform_4(%arg0: i32) -> (i32, i32) {
    %c0_i32 = arith.constant 0 : i32
    %c0_i32_0 = arith.constant 0 : i32
    %c0_i32_1 = arith.constant 0 : i32
    return %c0_i32, %c0_i32_0 : i32, i32
  }
  func.func @transform_5(%arg0: i32) -> (i32, i32) {
    %c0_i32 = arith.constant 0 : i32
    %c0_i32_0 = arith.constant 0 : i32
    %c0_i32_1 = arith.constant 0 : i32
    return %c0_i32, %c0_i32_0 : i32, i32
  }
  func.func @transform_6(%arg0: i32) -> (i32, i32, i32) {
    %c0_i32 = arith.constant 0 : i32
    %c0_i32_0 = arith.constant 0 : i32
    %c0_i32_1 = arith.constant 0 : i32
    return %arg0, %c0_i32, %c0_i32_0 : i32, i32, i32
  }
}

</mosaic_0001>

<llo_original>
// kernel: tpu_custom_call.1
$region0: #{tpu_custom_call.1}
  #allocation0 [shape = 'u32[]', space=smem, size = 0x4, offset = 0x4, fixed_abs, tag = 'smem constant byte address 0x4 - core index']
  #allocation1 [shape = 'u32[144,128]{1,0:T(1,128)}', space=vmem, size = 0x12000, scoped, tag = 'internal scratch']
  %s0 = inlined_call_operand.vmem [shape: f32[560,4], index: 0, kind: input, shape index: {}]
  %s1 = inlined_call_operand.vmem [shape: f32[4,32], index: 1, kind: input, shape index: {}]
  %s2 = inlined_call_operand.vmem [shape: f32[256,32], index: 2, kind: input, shape index: {}]
  %s3 = inlined_call_operand.vmem [shape: f32[256,256], index: 3, kind: input, shape index: {}]
  %s4 = inlined_call_operand.vmem [shape: f32[4,32], index: 4, kind: input, shape index: {}]
  %s5 = inlined_call_operand.vmem [shape: f32[4,1], index: 5, kind: input, shape index: {}]
  %s6 = inlined_call_operand.hbm [shape: f32[4,4,256], index: 6, kind: output, shape index: {}]
  %s7 = sld [smem:[#allocation0]]
  $region57: #{tpu_custom_call.1} parent=0
    _
  %s9 = ssub.s32 1, %s7
  %s10 = scalar_select 0, %s9, %s7
  $region1: #{tpu_custom_call.1} parent=0
    #allocation2 [shape = 'u8[16384]{0}', space=vmem, size = 0x4000, scoped, tag = 'output window, operand 0']
    #allocation3 [shape = 's32[2]{0}', space=sflag, size = 0x8, scoped, tag = 'scoped memory for tpu_custom_call.1']
    %11 = vsyncpa [#allocation3], 0
    %s12 = scalar_lea.sflag [#allocation3], 1
    %13 = vsyncpa %s12, 0
    loop: start=0, step=1, limit=4
    $region2: #{tpu_custom_call.1} parent=1 // loop_pre_header
      _
    $region3: #{tpu_custom_call.1} parent=1 // loop_header
      %s15 = sphi 0, %s19
      %p16 = scmp.ge.s32.totalorder %s15, 4
      %s25 = sphi 0, %s27
      %s28 = sphi 0, %s25
      %s29 = sphi 0, %s28
      %s45 = sphi 0, %s29
      %s49 = sphi 0, %s49
      %s51 = sphi 0, %s49
      %s52 = sphi 0, %s51
      %s66 = sphi 0, %s52
      %s70 = sphi 0, %s70
      %s72 = sphi 0, %s70
      %s73 = sphi 0, %s72
      %s87 = sphi 0, %s73
      %s91 = sphi 0, %s91
      %s93 = sphi 0, %s91
      %s94 = sphi 0, %s93
      %s108 = sphi 0, %s94
      %s112 = sphi 0, %s112
      %s114 = sphi 0, %s112
      %s115 = sphi 0, %s114
      %s129 = sphi 0, %s115
      %s133 = sphi 0, %s133
      %s135 = sphi 0, %s133
      %s136 = sphi 0, %s135
      %s150 = sphi 0, %s136
      %s156 = sphi 0, %s158
      %s159 = sphi 0, %s156
      %s160 = sphi 0, %s159
      %s176 = sphi 0, %s160
    $region4: #{tpu_custom_call.1} parent=1 // loop_header_branch
      %18 = sbr.rel (%p16) target = $region8
    $region5: #{tpu_custom_call.1} parent=1 // loop_body
      %s20 = ssub.s32 %s15, 1
      %s21 = ssub.s32 %s15, 2
      %s22 = sadd.s32 %s15, 1
      %s23 = ssub.s32 %s15, %s22
      %p24 = scmp.eq.s32.totalorder %s23, 0
      %s26 = sadd.s32 %s25, 1
      %s27 = scalar_select %p24, %s25, %s26
      %p30 = pneg %p24
      %p31 = scmp.eq.s32.totalorder %s15, 1
      %p32 = por %p30, %p31
      %p33 = scmp.ne.s32.totalorder %s25, %s28
      %p34 = scmp.eq.s32.totalorder %s15, 0
      %p35 = por %p33, %p34
      %p36 = scmp.ne.s32.totalorder %s25, %s28
      %p37 = scmp.eq.s32.totalorder %s20, 1
      %p38 = por %p36, %p37
      %p39 = scmp.ne.s32.totalorder %s28, %s29
      %p40 = scmp.eq.s32.totalorder %s20, 0
      %p41 = por %p39, %p40
      %p42 = scmp.ne.s32.totalorder %s28, %s29
      %p43 = scmp.eq.s32.totalorder %s21, 1
      %p44 = por %p42, %p43
      %p46 = scmp.ne.s32.totalorder %s29, %s45
      %p47 = scmp.eq.s32.totalorder %s21, 0
      %p48 = por %p46, %p47
      %s50 = sadd.s32 %s49, 1
      %p53 = scmp.eq.s32.totalorder %s15, 1
      %p54 = scmp.ne.s32.totalorder %s49, %s51
      %p55 = scmp.eq.s32.totalorder %s15, 0
      %p56 = por %p54, %p55
      %p57 = scmp.ne.s32.totalorder %s49, %s51
      %p58 = scmp.eq.s32.totalorder %s20, 1
      %p59 = por %p57, %p58
      %p60 = scmp.ne.s32.totalorder %s51, %s52
      %p61 = scmp.eq.s32.totalorder %s20, 0
      %p62 = por %p60, %p61
      %p63 = scmp.ne.s32.totalorder %s51, %s52
      %p64 = scmp.eq.s32.totalorder %s21, 1
      %p65 = por %p63, %p64
      %p67 = scmp.ne.s32.totalorder %s52, %s66
      %p68 = scmp.eq.s32.totalorder %s21, 0
      %p69 = por %p67, %p68
      %s71 = sadd.s32 %s70, 1
      %p74 = scmp.eq.s32.totalorder %s15, 1
      %p75 = scmp.ne.s32.totalorder %s70, %s72
      %p76 = scmp.eq.s32.totalorder %s15, 0
      %p77 = por %p75, %p76
      %p78 = scmp.ne.s32.totalorder %s70, %s72
      %p79 = scmp.eq.s32.totalorder %s20, 1
      %p80 = por %p78, %p79
      %p81 = scmp.ne.s32.totalorder %s72, %s73
      %p82 = scmp.eq.s32.totalorder %s20, 0
      %p83 = por %p81, %p82
      %p84 = scmp.ne.s32.totalorder %s72, %s73
      %p85 = scmp.eq.s32.totalorder %s21, 1
      %p86 = por %p84, %p85
      %p88 = scmp.ne.s32.totalorder %s73, %s87
      %p89 = scmp.eq.s32.totalorder %s21, 0
      %p90 = por %p88, %p89
      %s92 = sadd.s32 %s91, 1
      %p95 = scmp.eq.s32.totalorder %s15, 1
      %p96 = scmp.ne.s32.totalorder %s91, %s93
      %p97 = scmp.eq.s32.totalorder %s15, 0
      %p98 = por %p96, %p97
      %p99 = scmp.ne.s32.totalorder %s91, %s93
      %p100 = scmp.eq.s32.totalorder %s20, 1
      %p101 = por %p99, %p100
      %p102 = scmp.ne.s32.totalorder %s93, %s94
      %p103 = scmp.eq.s32.totalorder %s20, 0
      %p104 = por %p102, %p103
      %p105 = scmp.ne.s32.totalorder %s93, %s94
      %p106 = scmp.eq.s32.totalorder %s21, 1
      %p107 = por %p105, %p106
      %p109 = scmp.ne.s32.totalorder %s94, %s108
      %p110 = scmp.eq.s32.totalorder %s21, 0
      %p111 = por %p109, %p110
      %s113 = sadd.s32 %s112, 1
      %p116 = scmp.eq.s32.totalorder %s15, 1
      %p117 = scmp.ne.s32.totalorder %s112, %s114
      %p118 = scmp.eq.s32.totalorder %s15, 0
      %p119 = por %p117, %p118
      %p120 = scmp.ne.s32.totalorder %s112, %s114
      %p121 = scmp.eq.s32.totalorder %s20, 1
      %p122 = por %p120, %p121
      %p123 = scmp.ne.s32.totalorder %s114, %s115
      %p124 = scmp.eq.s32.totalorder %s20, 0
      %p125 = por %p123, %p124
      %p126 = scmp.ne.s32.totalorder %s114, %s115
      %p127 = scmp.eq.s32.totalorder %s21, 1
      %p128 = por %p126, %p127
      %p130 = scmp.ne.s32.totalorder %s115, %s129
      %p131 = scmp.eq.s32.totalorder %s21, 0
      %p132 = por %p130, %p131
      %s134 = sadd.s32 %s133, 1
      %p137 = scmp.eq.s32.totalorder %s15, 1
      %p138 = scmp.ne.s32.totalorder %s133, %s135
      %p139 = scmp.eq.s32.totalorder %s15, 0
      %p140 = por %p138, %p139
      %p141 = scmp.ne.s32.totalorder %s133, %s135
      %p142 = scmp.eq.s32.totalorder %s20, 1
      %p143 = por %p141, %p142
      %p144 = scmp.ne.s32.totalorder %s135, %s136
      %p145 = scmp.eq.s32.totalorder %s20, 0
      %p146 = por %p144, %p145
      %p147 = scmp.ne.s32.totalorder %s135, %s136
      %p148 = scmp.eq.s32.totalorder %s21, 1
      %p149 = por %p147, %p148
      %p151 = scmp.ne.s32.totalorder %s136, %s150
      %p152 = scmp.eq.s32.totalorder %s21, 0
      %p153 = por %p151, %p152
      %s154 = ssub.s32 %s15, %s22
      %p155 = scmp.eq.s32.totalorder %s154, 0
      %s157 = sadd.s32 %s156, 1
      %s158 = scalar_select %p155, %s156, %s157
      %p161 = pneg %p155
      %p162 = scmp.eq.s32.totalorder %s15, 1
      %p163 = por %p161, %p162
      %p164 = scmp.ne.s32.totalorder %s156, %s159
      %p165 = scmp.eq.s32.totalorder %s15, 0
      %p166 = por %p164, %p165
      %p167 = scmp.ne.s32.totalorder %s156, %s159
      %p168 = scmp.eq.s32.totalorder %s20, 1
      %p169 = por %p167, %p168
      %p170 = scmp.ne.s32.totalorder %s159, %s160
      %p171 = scmp.eq.s32.totalorder %s20, 0
      %p172 = por %p170, %p171
      %p173 = scmp.ne.s32.totalorder %s159, %s160
      %p174 = scmp.eq.s32.totalorder %s21, 1
      %p175 = por %p173, %p174
      %p177 = scmp.ne.s32.totalorder %s160, %s176
      %p178 = scmp.eq.s32.totalorder %s21, 0
      %p179 = por %p177, %p178
      %p180 = scmp.le.s32.totalorder 1, %s15
      %p181 = scmp.lt.s32.totalorder %s15, 3
      %p182 = pnand %p180, %p181
      %p183 = pneg %p182
      // Predicated region
      $region9: #{tpu_custom_call.1} parent=5 // pred_check
        _
      $region10: #{tpu_custom_call.1} parent=5 // pred_check_branch
        %185 = sbr.rel (%p182) target = $region12
      $region11: #{tpu_custom_call.1} parent=5 // pred_region
        %s186 = ssub.s32 %s15, 1
        // Predicated region
        $region13: #{tpu_custom_call.1} parent=11 // pred_check
          %p187 = pneg %p62
        $region14: #{tpu_custom_call.1} parent=11 // pred_check_branch
          %189 = sbr.rel (%p187) target = $region16
        $region15: #{tpu_custom_call.1} parent=11 // pred_region
          _
        $region16: #{tpu_custom_call.1} parent=11 // pred_fallthru
          _
        // Predicated region
        $region17: #{tpu_custom_call.1} parent=11 // pred_check
          %p190 = pneg %p83
        $region18: #{tpu_custom_call.1} parent=11 // pred_check_branch
          %192 = sbr.rel (%p190) target = $region20
        $region19: #{tpu_custom_call.1} parent=11 // pred_region
          _
        $region20: #{tpu_custom_call.1} parent=11 // pred_fallthru
          _
        // Predicated region
        $region21: #{tpu_custom_call.1} parent=11 // pred_check
          %p193 = pneg %p104
        $region22: #{tpu_custom_call.1} parent=11 // pred_check_branch
          %195 = sbr.rel (%p193) target = $region24
        $region23: #{tpu_custom_call.1} parent=11 // pred_region
          _
        $region24: #{tpu_custom_call.1} parent=11 // pred_fallthru
          _
        // Predicated region
        $region25: #{tpu_custom_call.1} parent=11 // pred_check
          %p196 = pneg %p125
        $region26: #{tpu_custom_call.1} parent=11 // pred_check_branch
          %198 = sbr.rel (%p196) target = $region28
        $region27: #{tpu_custom_call.1} parent=11 // pred_region
          _
        $region28: #{tpu_custom_call.1} parent=11 // pred_fallthru
          _
        // Predicated region
        $region29: #{tpu_custom_call.1} parent=11 // pred_check
          %p199 = pneg %p146
        $region30: #{tpu_custom_call.1} parent=11 // pred_check_branch
          %201 = sbr.rel (%p199) target = $region32
        $region31: #{tpu_custom_call.1} parent=11 // pred_region
          _
        $region32: #{tpu_custom_call.1} parent=11 // pred_fallthru
          _
      $region12: #{tpu_custom_call.1} parent=5 // pred_fallthru
        _
      %p202 = scmp.lt.s32.totalorder %s15, 2
      // Predicated region
      $region33: #{tpu_custom_call.1} parent=5 // pred_check
        %p203 = pneg %p202
      $region34: #{tpu_custom_call.1} parent=5 // pred_check_branch
        %205 = sbr.rel (%p203) target = $region36
      $region35: #{tpu_custom_call.1} parent=5 // pred_region
        // Predicated region
        $region37: #{tpu_custom_call.1} parent=35 // pred_check
          %p206 = pneg %p35
        $region38: #{tpu_custom_call.1} parent=35 // pred_check_branch
          %208 = sbr.rel (%p206) target = $region40
        $region39: #{tpu_custom_call.1} parent=35 // pred_region
          %s209 = smul.u32 64, %s15
          %s210 = ssub.s32 70, %s209
          %p211 = scmp.lt.s32.totalorder %s210, 64
          %s212 = scalar_select %p211, %s210, 64
          %s213 = smul.u32 128, %s212
          %p214 = scmp.lt.s32.totalorder %s209, 69
          %s215 = scalar_select %p214, %s209, 69
          %s216 = smul.addr %s215, 8
          %s217 = scalar_lea.vmem %s0, %s216
          %s218 = smul.u32 64, %s15
          %s219 = ssub.s32 70, %s218
          %p220 = scmp.lt.s32.totalorder %s219, 64
          %s221 = scalar_select %p220, %s219, 64
          %s222 = smul.u32 128, %s221
        $region40: #{tpu_custom_call.1} parent=35 // pred_fallthru
          _
      $region36: #{tpu_custom_call.1} parent=5 // pred_fallthru
        _
      %p223 = scmp.le.s32.totalorder 1, %s15
      %p224 = scmp.lt.s32.totalorder %s15, 3
      %p225 = pnand %p223, %p224
      %p226 = pneg %p225
      // Predicated region
      $region41: #{tpu_custom_call.1} parent=5 // pred_check
        _
      $region42: #{tpu_custom_call.1} parent=5 // pred_check_branch
        %228 = sbr.rel (%p225) target = $region44
      $region43: #{tpu_custom_call.1} parent=5 // pred_region
        %s229 = ssub.s32 %s15, 1
        %s230 = smul.u32 64, %s20
        %s231 = ssub.s32 70, %s230
        %p232 = scmp.lt.s32.totalorder %s231, 64
        %s233 = scalar_select %p232, %s231, 64
        %s234 = smul.u32 128, %s233
        %p235 = scmp.lt.s32.totalorder %s230, 69
        %s236 = scalar_select %p235, %s230, 69
        %s237 = smul.addr %s236, 8
        %s238 = scalar_lea.vmem %s0, %s237
        %p239 = pneg %p41
        %p240 = pneg %p38
        %p241 = pneg %p62
        %p242 = pneg %p59
        %p243 = pneg %p83
        %p244 = pneg %p80
        %p245 = pneg %p104
        %p246 = pneg %p101
        %p247 = pneg %p125
        %p248 = pneg %p122
        %p249 = pneg %p146
        %p250 = pneg %p143
        %p251 = pneg %p172
        %p252 = pneg %p169
        %s253 = sand.u32 %s159, 1
        %s254 = scalar_lea.sflag [#allocation3], %s253
        %s255 = sand.u32 %s159, 1
        %s256 = smul.addr %s255, 16
        %s257 = scalar_lea.vmem [#allocation2], %s256
        %s258 = smul.u32 64, %s20
        %s259 = ssub.s32 70, %s258
        %p260 = scmp.lt.s32.totalorder %s259, 64
        %s261 = scalar_select %p260, %s259, 64
        %s262 = smul.u32 128, %s261
        %p263 = scmp.lt.s32.totalorder %s258, 69
        %s264 = scalar_select %p263, %s258, 69
        %s265 = smul.addr %s264, 8
        %s266 = scalar_lea.vmem %s0, %s265
        %s267 = smul.u32 64, %s20
        %s268 = ssub.s32 70, %s267
        %p269 = scmp.lt.s32.totalorder %s268, 64
        %s270 = scalar_select %p269, %s268, 64
        %s271 = smul.u32 128, %s270
        %s272 = smul.u32 2, %s20
        %v274 = vld [vmem:[%s1] sm:$0xf]
        %v275 = vld [vmem:[%s2] sm:$0xff]
        %v276 = vld [vmem:[%s2 + $0x8] sm:$0xff]
        %v277 = vld [vmem:[%s2 + $0x10] sm:$0xff]
        %v278 = vld [vmem:[%s2 + $0x18] sm:$0xff]
        %v279 = vld [vmem:[%s2 + $0x20] sm:$0xff]
        %v280 = vld [vmem:[%s2 + $0x28] sm:$0xff]
        %v281 = vld [vmem:[%s2 + $0x30] sm:$0xff]
        %v282 = vld [vmem:[%s2 + $0x38] sm:$0xff]
        %v283 = vld [vmem:[%s2 + $0x40] sm:$0xff]
        %v284 = vld [vmem:[%s2 + $0x48] sm:$0xff]
        %v285 = vld [vmem:[%s2 + $0x50] sm:$0xff]
        %v286 = vld [vmem:[%s2 + $0x58] sm:$0xff]
        %v287 = vld [vmem:[%s2 + $0x60] sm:$0xff]
        %v288 = vld [vmem:[%s2 + $0x68] sm:$0xff]
        %v289 = vld [vmem:[%s2 + $0x70] sm:$0xff]
        %v290 = vld [vmem:[%s2 + $0x78] sm:$0xff]
        %v291 = vld [vmem:[%s2 + $0x80] sm:$0xff]
        %v292 = vld [vmem:[%s2 + $0x88] sm:$0xff]
        %v293 = vld [vmem:[%s2 + $0x90] sm:$0xff]
        %v294 = vld [vmem:[%s2 + $0x98] sm:$0xff]
        %v295 = vld [vmem:[%s2 + $0xa0] sm:$0xff]
        %v296 = vld [vmem:[%s2 + $0xa8] sm:$0xff]
        %v297 = vld [vmem:[%s2 + $0xb0] sm:$0xff]
        %v298 = vld [vmem:[%s2 + $0xb8] sm:$0xff]
        %v299 = vld [vmem:[%s2 + $0xc0] sm:$0xff]
        %v300 = vld [vmem:[%s2 + $0xc8] sm:$0xff]
        %v301 = vld [vmem:[%s2 + $0xd0] sm:$0xff]
        %v302 = vld [vmem:[%s2 + $0xd8] sm:$0xff]
        %v303 = vld [vmem:[%s2 + $0xe0] sm:$0xff]
        %v304 = vld [vmem:[%s2 + $0xe8] sm:$0xff]
        %v305 = vld [vmem:[%s2 + $0xf0] sm:$0xff]
        %v306 = vld [vmem:[%s2 + $0xf8] sm:$0xff]
        %v307 = vld [vmem:[%s3] sm:$0xff]
        %v308 = vld [vmem:[%s3 + $0x8] sm:$0xff]
        %v309 = vld [vmem:[%s3 + $0x10] sm:$0xff]
        %v310 = vld [vmem:[%s3 + $0x18] sm:$0xff]
        %v311 = vld [vmem:[%s3 + $0x20] sm:$0xff]
        %v312 = vld [vmem:[%s3 + $0x28] sm:$0xff]
        %v313 = vld [vmem:[%s3 + $0x30] sm:$0xff]
        %v314 = vld [vmem:[%s3 + $0x38] sm:$0xff]
        %v315 = vld [vmem:[%s3 + $0x40] sm:$0xff]
        %v316 = vld [vmem:[%s3 + $0x48] sm:$0xff]
        %v317 = vld [vmem:[%s3 + $0x50] sm:$0xff]
        %v318 = vld [vmem:[%s3 + $0x58] sm:$0xff]
        %v319 = vld [vmem:[%s3 + $0x60] sm:$0xff]
        %v320 = vld [vmem:[%s3 + $0x68] sm:$0xff]
        %v321 = vld [vmem:[%s3 + $0x70] sm:$0xff]
        %v322 = vld [vmem:[%s3 + $0x78] sm:$0xff]
        %v323 = vld [vmem:[%s3 + $0x80] sm:$0xff]
        %v324 = vld [vmem:[%s3 + $0x88] sm:$0xff]
        %v325 = vld [vmem:[%s3 + $0x90] sm:$0xff]
        %v326 = vld [vmem:[%s3 + $0x98] sm:$0xff]
        %v327 = vld [vmem:[%s3 + $0xa0] sm:$0xff]
        %v328 = vld [vmem:[%s3 + $0xa8] sm:$0xff]
        %v329 = vld [vmem:[%s3 + $0xb0] sm:$0xff]
        %v330 = vld [vmem:[%s3 + $0xb8] sm:$0xff]
        %v331 = vld [vmem:[%s3 + $0xc0] sm:$0xff]
        %v332 = vld [vmem:[%s3 + $0xc8] sm:$0xff]
        %v333 = vld [vmem:[%s3 + $0xd0] sm:$0xff]
        %v334 = vld [vmem:[%s3 + $0xd8] sm:$0xff]
        %v335 = vld [vmem:[%s3 + $0xe0] sm:$0xff]
        %v336 = vld [vmem:[%s3 + $0xe8] sm:$0xff]
        %v337 = vld [vmem:[%s3 + $0xf0] sm:$0xff]
        %v338 = vld [vmem:[%s3 + $0xf8] sm:$0xff]
        %v339 = vld [vmem:[%s3 + $0x100] sm:$0xff]
        %v340 = vld [vmem:[%s3 + $0x108] sm:$0xff]
        %v341 = vld [vmem:[%s3 + $0x110] sm:$0xff]
        %v342 = vld [vmem:[%s3 + $0x118] sm:$0xff]
        %v343 = vld [vmem:[%s3 + $0x120] sm:$0xff]
        %v344 = vld [vmem:[%s3 + $0x128] sm:$0xff]
        %v345 = vld [vmem:[%s3 + $0x130] sm:$0xff]
        %v346 = vld [vmem:[%s3 + $0x138] sm:$0xff]
        %v347 = vld [vmem:[%s3 + $0x140] sm:$0xff]
        %v348 = vld [vmem:[%s3 + $0x148] sm:$0xff]
        %v349 = vld [vmem:[%s3 + $0x150] sm:$0xff]
        %v350 = vld [vmem:[%s3 + $0x158] sm:$0xff]
        %v351 = vld [vmem:[%s3 + $0x160] sm:$0xff]
        %v352 = vld [vmem:[%s3 + $0x168] sm:$0xff]
        %v353 = vld [vmem:[%s3 + $0x170] sm:$0xff]
        %v354 = vld [vmem:[%s3 + $0x178] sm:$0xff]
        %v355 = vld [vmem:[%s3 + $0x180] sm:$0xff]
        %v356 = vld [vmem:[%s3 + $0x188] sm:$0xff]
        %v357 = vld [vmem:[%s3 + $0x190] sm:$0xff]
        %v358 = vld [vmem:[%s3 + $0x198] sm:$0xff]
        %v359 = vld [vmem:[%s3 + $0x1a0] sm:$0xff]
        %v360 = vld [vmem:[%s3 + $0x1a8] sm:$0xff]
        %v361 = vld [vmem:[%s3 + $0x1b0] sm:$0xff]
        %v362 = vld [vmem:[%s3 + $0x1b8] sm:$0xff]
        %v363 = vld [vmem:[%s3 + $0x1c0] sm:$0xff]
        %v364 = vld [vmem:[%s3 + $0x1c8] sm:$0xff]
        %v365 = vld [vmem:[%s3 + $0x1d0] sm:$0xff]
        %v366 = vld [vmem:[%s3 + $0x1d8] sm:$0xff]
        %v367 = vld [vmem:[%s3 + $0x1e0] sm:$0xff]
        %v368 = vld [vmem:[%s3 + $0x1e8] sm:$0xff]
        %v369 = vld [vmem:[%s3 + $0x1f0] sm:$0xff]
        %v370 = vld [vmem:[%s3 + $0x1f8] sm:$0xff]
        %v371 = vld [vmem:[%s4] sm:$0xf]
        %v372 = vld [vmem:[%s5] sm:$0xf]
        %s373 = smul.u32 %s20, 512
        %v374 = vld [vmem:[%s266] sm:$0xff]
        %v375 = vld [vmem:[%s266 + $0x8] sm:$0xff]
        %v376 = vld [vmem:[%s266 + $0x10] sm:$0xff]
        %v377 = vld [vmem:[%s266 + $0x18] sm:$0xff]
        %v378 = vld [vmem:[%s266 + $0x20] sm:$0xff]
        %v379 = vld [vmem:[%s266 + $0x28] sm:$0xff]
        %v380 = vld [vmem:[%s266 + $0x30] sm:$0xff]
        %v381 = vld [vmem:[%s266 + $0x38] sm:$0xff]
        %v382 = vld [vmem:[%s266 + $0x40] sm:$0xff]
        %v383 = vld [vmem:[%s266 + $0x48] sm:$0xff]
        %v384 = vld [vmem:[%s266 + $0x50] sm:$0xff]
        %v385 = vld [vmem:[%s266 + $0x58] sm:$0xff]
        %v386 = vld [vmem:[%s266 + $0x60] sm:$0xff]
        %v387 = vld [vmem:[%s266 + $0x68] sm:$0xff]
        %v388 = vld [vmem:[%s266 + $0x70] sm:$0xff]
        %v389 = vld [vmem:[%s266 + $0x78] sm:$0xff]
        %v390 = vld [vmem:[%s266 + $0x80] sm:$0xff]
        %v391 = vld [vmem:[%s266 + $0x88] sm:$0xff]
        %v392 = vld [vmem:[%s266 + $0x90] sm:$0xff]
        %v393 = vld [vmem:[%s266 + $0x98] sm:$0xff]
        %v394 = vld [vmem:[%s266 + $0xa0] sm:$0xff]
        %v395 = vld [vmem:[%s266 + $0xa8] sm:$0xff]
        %v396 = vld [vmem:[%s266 + $0xb0] sm:$0xff]
        %v397 = vld [vmem:[%s266 + $0xb8] sm:$0xff]
        %v398 = vld [vmem:[%s266 + $0xc0] sm:$0xff]
        %v399 = vld [vmem:[%s266 + $0xc8] sm:$0xff]
        %v400 = vld [vmem:[%s266 + $0xd0] sm:$0xff]
        %v401 = vld [vmem:[%s266 + $0xd8] sm:$0xff]
        %v402 = vld [vmem:[%s266 + $0xe0] sm:$0xff]
        %v403 = vld [vmem:[%s266 + $0xe8] sm:$0xff]
        %v404 = vld [vmem:[%s266 + $0xf0] sm:$0xff]
        %v405 = vld [vmem:[%s266 + $0xf8] sm:$0xff]
        %407 = vset.pattern.permute.xlu0 0
        %408 = vperm.xlu0 %407, %v374
        %v409 = vpop.permute.xlu0 %408
        %412 = vset.pattern.permute.xlu0 0
        %413 = vperm.xlu0 %412, %v375
        %v414 = vpop.permute.xlu0 %413
        %417 = vset.pattern.permute.xlu0 0
        %418 = vperm.xlu0 %417, %v376
        %v419 = vpop.permute.xlu0 %418
        %422 = vset.pattern.permute.xlu0 0
        %423 = vperm.xlu0 %422, %v377
        %v424 = vpop.permute.xlu0 %423
        %427 = vset.pattern.permute.xlu0 0
        %428 = vperm.xlu0 %427, %v378
        %v429 = vpop.permute.xlu0 %428
        %432 = vset.pattern.permute.xlu0 0
        %433 = vperm.xlu0 %432, %v379
        %v434 = vpop.permute.xlu0 %433
        %437 = vset.pattern.permute.xlu0 0
        %438 = vperm.xlu0 %437, %v380
        %v439 = vpop.permute.xlu0 %438
        %442 = vset.pattern.permute.xlu0 0
        %443 = vperm.xlu0 %442, %v381
        %v444 = vpop.permute.xlu0 %443
        %447 = vset.pattern.permute.xlu0 0
        %448 = vperm.xlu0 %447, %v382
        %v449 = vpop.permute.xlu0 %448
        %452 = vset.pattern.permute.xlu0 0
        %453 = vperm.xlu0 %452, %v383
        %v454 = vpop.permute.xlu0 %453
        %457 = vset.pattern.permute.xlu0 0
        %458 = vperm.xlu0 %457, %v384
        %v459 = vpop.permute.xlu0 %458
        %462 = vset.pattern.permute.xlu0 0
        %463 = vperm.xlu0 %462, %v385
        %v464 = vpop.permute.xlu0 %463
        %467 = vset.pattern.permute.xlu0 0
        %468 = vperm.xlu0 %467, %v386
        %v469 = vpop.permute.xlu0 %468
        %472 = vset.pattern.permute.xlu0 0
        %473 = vperm.xlu0 %472, %v387
        %v474 = vpop.permute.xlu0 %473
        %477 = vset.pattern.permute.xlu0 0
        %478 = vperm.xlu0 %477, %v388
        %v479 = vpop.permute.xlu0 %478
        %482 = vset.pattern.permute.xlu0 0
        %483 = vperm.xlu0 %482, %v389
        %v484 = vpop.permute.xlu0 %483
        %487 = vset.pattern.permute.xlu0 0
        %488 = vperm.xlu0 %487, %v390
        %v489 = vpop.permute.xlu0 %488
        %492 = vset.pattern.permute.xlu0 0
        %493 = vperm.xlu0 %492, %v391
        %v494 = vpop.permute.xlu0 %493
        %497 = vset.pattern.permute.xlu0 0
        %498 = vperm.xlu0 %497, %v392
        %v499 = vpop.permute.xlu0 %498
        %502 = vset.pattern.permute.xlu0 0
        %503 = vperm.xlu0 %502, %v393
        %v504 = vpop.permute.xlu0 %503
        %507 = vset.pattern.permute.xlu0 0
        %508 = vperm.xlu0 %507, %v394
        %v509 = vpop.permute.xlu0 %508
        %512 = vset.pattern.permute.xlu0 0
        %513 = vperm.xlu0 %512, %v395
        %v514 = vpop.permute.xlu0 %513
        %517 = vset.pattern.permute.xlu0 0
        %518 = vperm.xlu0 %517, %v396
        %v519 = vpop.permute.xlu0 %518
        %522 = vset.pattern.permute.xlu0 0
        %523 = vperm.xlu0 %522, %v397
        %v524 = vpop.permute.xlu0 %523
        %527 = vset.pattern.permute.xlu0 0
        %528 = vperm.xlu0 %527, %v398
        %v529 = vpop.permute.xlu0 %528
        %532 = vset.pattern.permute.xlu0 0
        %533 = vperm.xlu0 %532, %v399
        %v534 = vpop.permute.xlu0 %533
        %537 = vset.pattern.permute.xlu0 0
        %538 = vperm.xlu0 %537, %v400
        %v539 = vpop.permute.xlu0 %538
        %542 = vset.pattern.permute.xlu0 0
        %543 = vperm.xlu0 %542, %v401
        %v544 = vpop.permute.xlu0 %543
        %547 = vset.pattern.permute.xlu0 0
        %548 = vperm.xlu0 %547, %v402
        %v549 = vpop.permute.xlu0 %548
        %552 = vset.pattern.permute.xlu0 0
        %553 = vperm.xlu0 %552, %v403
        %v554 = vpop.permute.xlu0 %553
        %557 = vset.pattern.permute.xlu0 0
        %558 = vperm.xlu0 %557, %v404
        %v559 = vpop.permute.xlu0 %558
        %562 = vset.pattern.permute.xlu0 0
        %563 = vperm.xlu0 %562, %v405
        %v564 = vpop.permute.xlu0 %563
        %v566 = vlaneseq
        %v567 = vshrl.u32 %v566, 7
        %v568 = vsub.s32 0, %v567
        %v569 = vrot.slane %v274, %v568
        %v570 = vmul.f32 %v409, %v569
        %v571 = vmul.f32 %v414, %v569
        %v572 = vmul.f32 %v419, %v569
        %v573 = vmul.f32 %v424, %v569
        %v574 = vmul.f32 %v429, %v569
        %v575 = vmul.f32 %v434, %v569
        %v576 = vmul.f32 %v439, %v569
        %v577 = vmul.f32 %v444, %v569
        %v578 = vmul.f32 %v449, %v569
        %v579 = vmul.f32 %v454, %v569
        %v580 = vmul.f32 %v459, %v569
        %v581 = vmul.f32 %v464, %v569
        %v582 = vmul.f32 %v469, %v569
        %v583 = vmul.f32 %v474, %v569
        %v584 = vmul.f32 %v479, %v569
        %v585 = vmul.f32 %v484, %v569
        %v586 = vmul.f32 %v489, %v569
        %v587 = vmul.f32 %v494, %v569
        %v588 = vmul.f32 %v499, %v569
        %v589 = vmul.f32 %v504, %v569
        %v590 = vmul.f32 %v509, %v569
        %v591 = vmul.f32 %v514, %v569
        %v592 = vmul.f32 %v519, %v569
        %v593 = vmul.f32 %v524, %v569
        %v594 = vmul.f32 %v529, %v569
        %v595 = vmul.f32 %v534, %v569
        %v596 = vmul.f32 %v539, %v569
        %v597 = vmul.f32 %v544, %v569
        %v598 = vmul.f32 %v549, %v569
        %v599 = vmul.f32 %v554, %v569
        %v600 = vmul.f32 %v559, %v569
        %v601 = vmul.f32 %v564, %v569
        %v602 = vadd.f32 %v275, %v570
        %v603 = vadd.f32 %v276, %v571
        %v604 = vadd.f32 %v277, %v572
        %v605 = vadd.f32 %v278, %v573
        %v606 = vadd.f32 %v279, %v574
        %v607 = vadd.f32 %v280, %v575
        %v608 = vadd.f32 %v281, %v576
        %v609 = vadd.f32 %v282, %v577
        %v610 = vadd.f32 %v283, %v578
        %v611 = vadd.f32 %v284, %v579
        %v612 = vadd.f32 %v285, %v580
        %v613 = vadd.f32 %v286, %v581
        %v614 = vadd.f32 %v287, %v582
        %v615 = vadd.f32 %v288, %v583
        %v616 = vadd.f32 %v289, %v584
        %v617 = vadd.f32 %v290, %v585
        %v618 = vadd.f32 %v291, %v586
        %v619 = vadd.f32 %v292, %v587
        %v620 = vadd.f32 %v293, %v588
        %v621 = vadd.f32 %v294, %v589
        %v622 = vadd.f32 %v295, %v590
        %v623 = vadd.f32 %v296, %v591
        %v624 = vadd.f32 %v297, %v592
        %v625 = vadd.f32 %v298, %v593
        %v626 = vadd.f32 %v299, %v594
        %v627 = vadd.f32 %v300, %v595
        %v628 = vadd.f32 %v301, %v596
        %v629 = vadd.f32 %v302, %v597
        %v630 = vadd.f32 %v303, %v598
        %v631 = vadd.f32 %v304, %v599
        %v632 = vadd.f32 %v305, %v600
        %v633 = vadd.f32 %v306, %v601
        %634 = vset.pattern.permute.xlu0 1
        %635 = vperm.xlu0 %634, %v374
        %v636 = vpop.permute.xlu0 %635
        %638 = vset.pattern.permute.xlu0 1
        %639 = vperm.xlu0 %638, %v375
        %v640 = vpop.permute.xlu0 %639
        %642 = vset.pattern.permute.xlu0 1
        %643 = vperm.xlu0 %642, %v376
        %v644 = vpop.permute.xlu0 %643
        %646 = vset.pattern.permute.xlu0 1
        %647 = vperm.xlu0 %646, %v377
        %v648 = vpop.permute.xlu0 %647
        %650 = vset.pattern.permute.xlu0 1
        %651 = vperm.xlu0 %650, %v378
        %v652 = vpop.permute.xlu0 %651
        %654 = vset.pattern.permute.xlu0 1
        %655 = vperm.xlu0 %654, %v379
        %v656 = vpop.permute.xlu0 %655
        %658 = vset.pattern.permute.xlu0 1
        %659 = vperm.xlu0 %658, %v380
        %v660 = vpop.permute.xlu0 %659
        %662 = vset.pattern.permute.xlu0 1
        %663 = vperm.xlu0 %662, %v381
        %v664 = vpop.permute.xlu0 %663
        %666 = vset.pattern.permute.xlu0 1
        %667 = vperm.xlu0 %666, %v382
        %v668 = vpop.permute.xlu0 %667
        %670 = vset.pattern.permute.xlu0 1
        %671 = vperm.xlu0 %670, %v383
        %v672 = vpop.permute.xlu0 %671
        %674 = vset.pattern.permute.xlu0 1
        %675 = vperm.xlu0 %674, %v384
        %v676 = vpop.permute.xlu0 %675
        %678 = vset.pattern.permute.xlu0 1
        %679 = vperm.xlu0 %678, %v385
        %v680 = vpop.permute.xlu0 %679
        %682 = vset.pattern.permute.xlu0 1
        %683 = vperm.xlu0 %682, %v386
        %v684 = vpop.permute.xlu0 %683
        %686 = vset.pattern.permute.xlu0 1
        %687 = vperm.xlu0 %686, %v387
        %v688 = vpop.permute.xlu0 %687
        %690 = vset.pattern.permute.xlu0 1
        %691 = vperm.xlu0 %690, %v388
        %v692 = vpop.permute.xlu0 %691
        %694 = vset.pattern.permute.xlu0 1
        %695 = vperm.xlu0 %694, %v389
        %v696 = vpop.permute.xlu0 %695
        %698 = vset.pattern.permute.xlu0 1
        %699 = vperm.xlu0 %698, %v390
        %v700 = vpop.permute.xlu0 %699
        %702 = vset.pattern.permute.xlu0 1
        %703 = vperm.xlu0 %702, %v391
        %v704 = vpop.permute.xlu0 %703
        %706 = vset.pattern.permute.xlu0 1
        %707 = vperm.xlu0 %706, %v392
        %v708 = vpop.permute.xlu0 %707
        %710 = vset.pattern.permute.xlu0 1
        %711 = vperm.xlu0 %710, %v393
        %v712 = vpop.permute.xlu0 %711
        %714 = vset.pattern.permute.xlu0 1
        %715 = vperm.xlu0 %714, %v394
        %v716 = vpop.permute.xlu0 %715
        %718 = vset.pattern.permute.xlu0 1
        %719 = vperm.xlu0 %718, %v395
        %v720 = vpop.permute.xlu0 %719
        %722 = vset.pattern.permute.xlu0 1
        %723 = vperm.xlu0 %722, %v396
        %v724 = vpop.permute.xlu0 %723
        %726 = vset.pattern.permute.xlu0 1
        %727 = vperm.xlu0 %726, %v397
        %v728 = vpop.permute.xlu0 %727
        %730 = vset.pattern.permute.xlu0 1
        %731 = vperm.xlu0 %730, %v398
        %v732 = vpop.permute.xlu0 %731
        %734 = vset.pattern.permute.xlu0 1
        %735 = vperm.xlu0 %734, %v399
        %v736 = vpop.permute.xlu0 %735
        %738 = vset.pattern.permute.xlu0 1
        %739 = vperm.xlu0 %738, %v400
        %v740 = vpop.permute.xlu0 %739
        %742 = vset.pattern.permute.xlu0 1
        %743 = vperm.xlu0 %742, %v401
        %v744 = vpop.permute.xlu0 %743
        %746 = vset.pattern.permute.xlu0 1
        %747 = vperm.xlu0 %746, %v402
        %v748 = vpop.permute.xlu0 %747
        %750 = vset.pattern.permute.xlu0 1
        %751 = vperm.xlu0 %750, %v403
        %v752 = vpop.permute.xlu0 %751
        %754 = vset.pattern.permute.xlu0 1
        %755 = vperm.xlu0 %754, %v404
        %v756 = vpop.permute.xlu0 %755
        %758 = vset.pattern.permute.xlu0 1
        %759 = vperm.xlu0 %758, %v405
        %v760 = vpop.permute.xlu0 %759
        %v762 = vlaneseq
        %v763 = vshrl.u32 %v762, 7
        %v764 = vsub.s32 1, %v763
        %v765 = vrot.slane %v274, %v764
        %v766 = vmul.f32 %v636, %v765
        %v767 = vmul.f32 %v640, %v765
        %v768 = vmul.f32 %v644, %v765
        %v769 = vmul.f32 %v648, %v765
        %v770 = vmul.f32 %v652, %v765
        %v771 = vmul.f32 %v656, %v765
        %v772 = vmul.f32 %v660, %v765
        %v773 = vmul.f32 %v664, %v765
        %v774 = vmul.f32 %v668, %v765
        %v775 = vmul.f32 %v672, %v765
        %v776 = vmul.f32 %v676, %v765
        %v777 = vmul.f32 %v680, %v765
        %v778 = vmul.f32 %v684, %v765
        %v779 = vmul.f32 %v688, %v765
        %v780 = vmul.f32 %v692, %v765
        %v781 = vmul.f32 %v696, %v765
        %v782 = vmul.f32 %v700, %v765
        %v783 = vmul.f32 %v704, %v765
        %v784 = vmul.f32 %v708, %v765
        %v785 = vmul.f32 %v712, %v765
        %v786 = vmul.f32 %v716, %v765
        %v787 = vmul.f32 %v720, %v765
        %v788 = vmul.f32 %v724, %v765
        %v789 = vmul.f32 %v728, %v765
        %v790 = vmul.f32 %v732, %v765
        %v791 = vmul.f32 %v736, %v765
        %v792 = vmul.f32 %v740, %v765
        %v793 = vmul.f32 %v744, %v765
        %v794 = vmul.f32 %v748, %v765
        %v795 = vmul.f32 %v752, %v765
        %v796 = vmul.f32 %v756, %v765
        %v797 = vmul.f32 %v760, %v765
        %v798 = vadd.f32 %v602, %v766
        %v799 = vadd.f32 %v603, %v767
        %v800 = vadd.f32 %v604, %v768
        %v801 = vadd.f32 %v605, %v769
        %v802 = vadd.f32 %v606, %v770
        %v803 = vadd.f32 %v607, %v771
        %v804 = vadd.f32 %v608, %v772
        %v805 = vadd.f32 %v609, %v773
        %v806 = vadd.f32 %v610, %v774
        %v807 = vadd.f32 %v611, %v775
        %v808 = vadd.f32 %v612, %v776
        %v809 = vadd.f32 %v613, %v777
        %v810 = vadd.f32 %v614, %v778
        %v811 = vadd.f32 %v615, %v779
        %v812 = vadd.f32 %v616, %v780
        %v813 = vadd.f32 %v617, %v781
        %v814 = vadd.f32 %v618, %v782
        %v815 = vadd.f32 %v619, %v783
        %v816 = vadd.f32 %v620, %v784
        %v817 = vadd.f32 %v621, %v785
        %v818 = vadd.f32 %v622, %v786
        %v819 = vadd.f32 %v623, %v787
        %v820 = vadd.f32 %v624, %v788
        %v821 = vadd.f32 %v625, %v789
        %v822 = vadd.f32 %v626, %v790
        %v823 = vadd.f32 %v627, %v791
        %v824 = vadd.f32 %v628, %v792
        %v825 = vadd.f32 %v629, %v793
        %v826 = vadd.f32 %v630, %v794
        %v827 = vadd.f32 %v631, %v795
        %v828 = vadd.f32 %v632, %v796
        %v829 = vadd.f32 %v633, %v797
        %830 = vset.pattern.permute.xlu0 2
        %831 = vperm.xlu0 %830, %v374
        %v832 = vpop.permute.xlu0 %831
        %834 = vset.pattern.permute.xlu0 2
        %835 = vperm.xlu0 %834, %v375
        %v836 = vpop.permute.xlu0 %835
        %838 = vset.pattern.permute.xlu0 2
        %839 = vperm.xlu0 %838, %v376
        %v840 = vpop.permute.xlu0 %839
        %842 = vset.pattern.permute.xlu0 2
        %843 = vperm.xlu0 %842, %v377
        %v844 = vpop.permute.xlu0 %843
        %846 = vset.pattern.permute.xlu0 2
        %847 = vperm.xlu0 %846, %v378
        %v848 = vpop.permute.xlu0 %847
        %850 = vset.pattern.permute.xlu0 2
        %851 = vperm.xlu0 %850, %v379
        %v852 = vpop.permute.xlu0 %851
        %854 = vset.pattern.permute.xlu0 2
        %855 = vperm.xlu0 %854, %v380
        %v856 = vpop.permute.xlu0 %855
        %858 = vset.pattern.permute.xlu0 2
        %859 = vperm.xlu0 %858, %v381
        %v860 = vpop.permute.xlu0 %859
        %862 = vset.pattern.permute.xlu0 2
        %863 = vperm.xlu0 %862, %v382
        %v864 = vpop.permute.xlu0 %863
        %866 = vset.pattern.permute.xlu0 2
        %867 = vperm.xlu0 %866, %v383
        %v868 = vpop.permute.xlu0 %867
        %870 = vset.pattern.permute.xlu0 2
        %871 = vperm.xlu0 %870, %v384
        %v872 = vpop.permute.xlu0 %871
        %874 = vset.pattern.permute.xlu0 2
        %875 = vperm.xlu0 %874, %v385
        %v876 = vpop.permute.xlu0 %875
        %878 = vset.pattern.permute.xlu0 2
        %879 = vperm.xlu0 %878, %v386
        %v880 = vpop.permute.xlu0 %879
        %882 = vset.pattern.permute.xlu0 2
        %883 = vperm.xlu0 %882, %v387
        %v884 = vpop.permute.xlu0 %883
        %886 = vset.pattern.permute.xlu0 2
        %887 = vperm.xlu0 %886, %v388
        %v888 = vpop.permute.xlu0 %887
        %890 = vset.pattern.permute.xlu0 2
        %891 = vperm.xlu0 %890, %v389
        %v892 = vpop.permute.xlu0 %891
        %894 = vset.pattern.permute.xlu0 2
        %895 = vperm.xlu0 %894, %v390
        %v896 = vpop.permute.xlu0 %895
        %898 = vset.pattern.permute.xlu0 2
        %899 = vperm.xlu0 %898, %v391
        %v900 = vpop.permute.xlu0 %899
        %902 = vset.pattern.permute.xlu0 2
        %903 = vperm.xlu0 %902, %v392
        %v904 = vpop.permute.xlu0 %903
        %906 = vset.pattern.permute.xlu0 2
        %907 = vperm.xlu0 %906, %v393
        %v908 = vpop.permute.xlu0 %907
        %910 = vset.pattern.permute.xlu0 2
        %911 = vperm.xlu0 %910, %v394
        %v912 = vpop.permute.xlu0 %911
        %914 = vset.pattern.permute.xlu0 2
        %915 = vperm.xlu0 %914, %v395
        %v916 = vpop.permute.xlu0 %915
        %918 = vset.pattern.permute.xlu0 2
        %919 = vperm.xlu0 %918, %v396
        %v920 = vpop.permute.xlu0 %919
        %922 = vset.pattern.permute.xlu0 2
        %923 = vperm.xlu0 %922, %v397
        %v924 = vpop.permute.xlu0 %923
        %926 = vset.pattern.permute.xlu0 2
        %927 = vperm.xlu0 %926, %v398
        %v928 = vpop.permute.xlu0 %927
        %930 = vset.pattern.permute.xlu0 2
        %931 = vperm.xlu0 %930, %v399
        %v932 = vpop.permute.xlu0 %931
        %934 = vset.pattern.permute.xlu0 2
        %935 = vperm.xlu0 %934, %v400
        %v936 = vpop.permute.xlu0 %935
        %938 = vset.pattern.permute.xlu0 2
        %939 = vperm.xlu0 %938, %v401
        %v940 = vpop.permute.xlu0 %939
        %942 = vset.pattern.permute.xlu0 2
        %943 = vperm.xlu0 %942, %v402
        %v944 = vpop.permute.xlu0 %943
        %946 = vset.pattern.permute.xlu0 2
        %947 = vperm.xlu0 %946, %v403
        %v948 = vpop.permute.xlu0 %947
        %950 = vset.pattern.permute.xlu0 2
        %951 = vperm.xlu0 %950, %v404
        %v952 = vpop.permute.xlu0 %951
        %954 = vset.pattern.permute.xlu0 2
        %955 = vperm.xlu0 %954, %v405
        %v956 = vpop.permute.xlu0 %955
        %v958 = vlaneseq
        %v959 = vshrl.u32 %v958, 7
        %v960 = vsub.s32 2, %v959
        %v961 = vrot.slane %v274, %v960
        %v962 = vmul.f32 %v832, %v961
        %v963 = vmul.f32 %v836, %v961
        %v964 = vmul.f32 %v840, %v961
        %v965 = vmul.f32 %v844, %v961
        %v966 = vmul.f32 %v848, %v961
        %v967 = vmul.f32 %v852, %v961
        %v968 = vmul.f32 %v856, %v961
        %v969 = vmul.f32 %v860, %v961
        %v970 = vmul.f32 %v864, %v961
        %v971 = vmul.f32 %v868, %v961
        %v972 = vmul.f32 %v872, %v961
        %v973 = vmul.f32 %v876, %v961
        %v974 = vmul.f32 %v880, %v961
        %v975 = vmul.f32 %v884, %v961
        %v976 = vmul.f32 %v888, %v961
        %v977 = vmul.f32 %v892, %v961
        %v978 = vmul.f32 %v896, %v961
        %v979 = vmul.f32 %v900, %v961
        %v980 = vmul.f32 %v904, %v961
        %v981 = vmul.f32 %v908, %v961
        %v982 = vmul.f32 %v912, %v961
        %v983 = vmul.f32 %v916, %v961
        %v984 = vmul.f32 %v920, %v961
        %v985 = vmul.f32 %v924, %v961
        %v986 = vmul.f32 %v928, %v961
        %v987 = vmul.f32 %v932, %v961
        %v988 = vmul.f32 %v936, %v961
        %v989 = vmul.f32 %v940, %v961
        %v990 = vmul.f32 %v944, %v961
        %v991 = vmul.f32 %v948, %v961
        %v992 = vmul.f32 %v952, %v961
        %v993 = vmul.f32 %v956, %v961
        %v994 = vadd.f32 %v798, %v962
        %v995 = vadd.f32 %v799, %v963
        %v996 = vadd.f32 %v800, %v964
        %v997 = vadd.f32 %v801, %v965
        %v998 = vadd.f32 %v802, %v966
        %v999 = vadd.f32 %v803, %v967
        %v1000 = vadd.f32 %v804, %v968
        %v1001 = vadd.f32 %v805, %v969
        %v1002 = vadd.f32 %v806, %v970
        %v1003 = vadd.f32 %v807, %v971
        %v1004 = vadd.f32 %v808, %v972
        %v1005 = vadd.f32 %v809, %v973
        %v1006 = vadd.f32 %v810, %v974
        %v1007 = vadd.f32 %v811, %v975
        %v1008 = vadd.f32 %v812, %v976
        %v1009 = vadd.f32 %v813, %v977
        %v1010 = vadd.f32 %v814, %v978
        %v1011 = vadd.f32 %v815, %v979
        %v1012 = vadd.f32 %v816, %v980
        %v1013 = vadd.f32 %v817, %v981
        %v1014 = vadd.f32 %v818, %v982
        %v1015 = vadd.f32 %v819, %v983
        %v1016 = vadd.f32 %v820, %v984
        %v1017 = vadd.f32 %v821, %v985
        %v1018 = vadd.f32 %v822, %v986
        %v1019 = vadd.f32 %v823, %v987
        %v1020 = vadd.f32 %v824, %v988
        %v1021 = vadd.f32 %v825, %v989
        %v1022 = vadd.f32 %v826, %v990
        %v1023 = vadd.f32 %v827, %v991
        %v1024 = vadd.f32 %v828, %v992
        %v1025 = vadd.f32 %v829, %v993
        %1026 = vset.pattern.permute.xlu0 3
        %1027 = vperm.xlu0 %1026, %v374
        %v1028 = vpop.permute.xlu0 %1027
        %1030 = vset.pattern.permute.xlu0 3
        %1031 = vperm.xlu0 %1030, %v375
        %v1032 = vpop.permute.xlu0 %1031
        %1034 = vset.pattern.permute.xlu0 3
        %1035 = vperm.xlu0 %1034, %v376
        %v1036 = vpop.permute.xlu0 %1035
        %1038 = vset.pattern.permute.xlu0 3
        %1039 = vperm.xlu0 %1038, %v377
        %v1040 = vpop.permute.xlu0 %1039
        %1042 = vset.pattern.permute.xlu0 3
        %1043 = vperm.xlu0 %1042, %v378
        %v1044 = vpop.permute.xlu0 %1043
        %1046 = vset.pattern.permute.xlu0 3
        %1047 = vperm.xlu0 %1046, %v379
        %v1048 = vpop.permute.xlu0 %1047
        %1050 = vset.pattern.permute.xlu0 3
        %1051 = vperm.xlu0 %1050, %v380
        %v1052 = vpop.permute.xlu0 %1051
        %1054 = vset.pattern.permute.xlu0 3
        %1055 = vperm.xlu0 %1054, %v381
        %v1056 = vpop.permute.xlu0 %1055
        %1058 = vset.pattern.permute.xlu0 3
        %1059 = vperm.xlu0 %1058, %v382
        %v1060 = vpop.permute.xlu0 %1059
        %1062 = vset.pattern.permute.xlu0 3
        %1063 = vperm.xlu0 %1062, %v383
        %v1064 = vpop.permute.xlu0 %1063
        %1066 = vset.pattern.permute.xlu0 3
        %1067 = vperm.xlu0 %1066, %v384
        %v1068 = vpop.permute.xlu0 %1067
        %1070 = vset.pattern.permute.xlu0 3
        %1071 = vperm.xlu0 %1070, %v385
        %v1072 = vpop.permute.xlu0 %1071
        %1074 = vset.pattern.permute.xlu0 3
        %1075 = vperm.xlu0 %1074, %v386
        %v1076 = vpop.permute.xlu0 %1075
        %1078 = vset.pattern.permute.xlu0 3
        %1079 = vperm.xlu0 %1078, %v387
        %v1080 = vpop.permute.xlu0 %1079
        %1082 = vset.pattern.permute.xlu0 3
        %1083 = vperm.xlu0 %1082, %v388
        %v1084 = vpop.permute.xlu0 %1083
        %1086 = vset.pattern.permute.xlu0 3
        %1087 = vperm.xlu0 %1086, %v389
        %v1088 = vpop.permute.xlu0 %1087
        %1090 = vset.pattern.permute.xlu0 3
        %1091 = vperm.xlu0 %1090, %v390
        %v1092 = vpop.permute.xlu0 %1091
        %1094 = vset.pattern.permute.xlu0 3
        %1095 = vperm.xlu0 %1094, %v391
        %v1096 = vpop.permute.xlu0 %1095
        %1098 = vset.pattern.permute.xlu0 3
        %1099 = vperm.xlu0 %1098, %v392
        %v1100 = vpop.permute.xlu0 %1099
        %1102 = vset.pattern.permute.xlu0 3
        %1103 = vperm.xlu0 %1102, %v393
        %v1104 = vpop.permute.xlu0 %1103
        %1106 = vset.pattern.permute.xlu0 3
        %1107 = vperm.xlu0 %1106, %v394
        %v1108 = vpop.permute.xlu0 %1107
        %1110 = vset.pattern.permute.xlu0 3
        %1111 = vperm.xlu0 %1110, %v395
        %v1112 = vpop.permute.xlu0 %1111
        %1114 = vset.pattern.permute.xlu0 3
        %1115 = vperm.xlu0 %1114, %v396
        %v1116 = vpop.permute.xlu0 %1115
        %1118 = vset.pattern.permute.xlu0 3
        %1119 = vperm.xlu0 %1118, %v397
        %v1120 = vpop.permute.xlu0 %1119
        %1122 = vset.pattern.permute.xlu0 3
        %1123 = vperm.xlu0 %1122, %v398
        %v1124 = vpop.permute.xlu0 %1123
        %1126 = vset.pattern.permute.xlu0 3
        %1127 = vperm.xlu0 %1126, %v399
        %v1128 = vpop.permute.xlu0 %1127
        %1130 = vset.pattern.permute.xlu0 3
        %1131 = vperm.xlu0 %1130, %v400
        %v1132 = vpop.permute.xlu0 %1131
        %1134 = vset.pattern.permute.xlu0 3
        %1135 = vperm.xlu0 %1134, %v401
        %v1136 = vpop.permute.xlu0 %1135
        %1138 = vset.pattern.permute.xlu0 3
        %1139 = vperm.xlu0 %1138, %v402
        %v1140 = vpop.permute.xlu0 %1139
        %1142 = vset.pattern.permute.xlu0 3
        %1143 = vperm.xlu0 %1142, %v403
        %v1144 = vpop.permute.xlu0 %1143
        %1146 = vset.pattern.permute.xlu0 3
        %1147 = vperm.xlu0 %1146, %v404
        %v1148 = vpop.permute.xlu0 %1147
        %1150 = vset.pattern.permute.xlu0 3
        %1151 = vperm.xlu0 %1150, %v405
        %v1152 = vpop.permute.xlu0 %1151
        %v1154 = vlaneseq
        %v1155 = vshrl.u32 %v1154, 7
        %v1156 = vsub.s32 3, %v1155
        %v1157 = vrot.slane %v274, %v1156
        %v1158 = vmul.f32 %v1028, %v1157
        %v1159 = vmul.f32 %v1032, %v1157
        %v1160 = vmul.f32 %v1036, %v1157
        %v1161 = vmul.f32 %v1040, %v1157
        %v1162 = vmul.f32 %v1044, %v1157
        %v1163 = vmul.f32 %v1048, %v1157
        %v1164 = vmul.f32 %v1052, %v1157
        %v1165 = vmul.f32 %v1056, %v1157
        %v1166 = vmul.f32 %v1060, %v1157
        %v1167 = vmul.f32 %v1064, %v1157
        %v1168 = vmul.f32 %v1068, %v1157
        %v1169 = vmul.f32 %v1072, %v1157
        %v1170 = vmul.f32 %v1076, %v1157
        %v1171 = vmul.f32 %v1080, %v1157
        %v1172 = vmul.f32 %v1084, %v1157
        %v1173 = vmul.f32 %v1088, %v1157
        %v1174 = vmul.f32 %v1092, %v1157
        %v1175 = vmul.f32 %v1096, %v1157
        %v1176 = vmul.f32 %v1100, %v1157
        %v1177 = vmul.f32 %v1104, %v1157
        %v1178 = vmul.f32 %v1108, %v1157
        %v1179 = vmul.f32 %v1112, %v1157
        %v1180 = vmul.f32 %v1116, %v1157
        %v1181 = vmul.f32 %v1120, %v1157
        %v1182 = vmul.f32 %v1124, %v1157
        %v1183 = vmul.f32 %v1128, %v1157
        %v1184 = vmul.f32 %v1132, %v1157
        %v1185 = vmul.f32 %v1136, %v1157
        %v1186 = vmul.f32 %v1140, %v1157
        %v1187 = vmul.f32 %v1144, %v1157
        %v1188 = vmul.f32 %v1148, %v1157
        %v1189 = vmul.f32 %v1152, %v1157
        %v1190 = vadd.f32 %v994, %v1158
        %v1191 = vadd.f32 %v995, %v1159
        %v1192 = vadd.f32 %v996, %v1160
        %v1193 = vadd.f32 %v997, %v1161
        %v1194 = vadd.f32 %v998, %v1162
        %v1195 = vadd.f32 %v999, %v1163
        %v1196 = vadd.f32 %v1000, %v1164
        %v1197 = vadd.f32 %v1001, %v1165
        %v1198 = vadd.f32 %v1002, %v1166
        %v1199 = vadd.f32 %v1003, %v1167
        %v1200 = vadd.f32 %v1004, %v1168
        %v1201 = vadd.f32 %v1005, %v1169
        %v1202 = vadd.f32 %v1006, %v1170
        %v1203 = vadd.f32 %v1007, %v1171
        %v1204 = vadd.f32 %v1008, %v1172
        %v1205 = vadd.f32 %v1009, %v1173
        %v1206 = vadd.f32 %v1010, %v1174
        %v1207 = vadd.f32 %v1011, %v1175
        %v1208 = vadd.f32 %v1012, %v1176
        %v1209 = vadd.f32 %v1013, %v1177
        %v1210 = vadd.f32 %v1014, %v1178
        %v1211 = vadd.f32 %v1015, %v1179
        %v1212 = vadd.f32 %v1016, %v1180
        %v1213 = vadd.f32 %v1017, %v1181
        %v1214 = vadd.f32 %v1018, %v1182
        %v1215 = vadd.f32 %v1019, %v1183
        %v1216 = vadd.f32 %v1020, %v1184
        %v1217 = vadd.f32 %v1021, %v1185
        %v1218 = vadd.f32 %v1022, %v1186
        %v1219 = vadd.f32 %v1023, %v1187
        %v1220 = vadd.f32 %v1024, %v1188
        %v1221 = vadd.f32 %v1025, %v1189
        %v1222 = vmax.f32 %v1190, 0.0
        %v1223 = vmax.f32 %v1191, 0.0
        %v1224 = vmax.f32 %v1192, 0.0
        %v1225 = vmax.f32 %v1193, 0.0
        %v1226 = vmax.f32 %v1194, 0.0
        %v1227 = vmax.f32 %v1195, 0.0
        %v1228 = vmax.f32 %v1196, 0.0
        %v1229 = vmax.f32 %v1197, 0.0
        %v1230 = vmax.f32 %v1198, 0.0
        %v1231 = vmax.f32 %v1199, 0.0
        %v1232 = vmax.f32 %v1200, 0.0
        %v1233 = vmax.f32 %v1201, 0.0
        %v1234 = vmax.f32 %v1202, 0.0
        %v1235 = vmax.f32 %v1203, 0.0
        %v1236 = vmax.f32 %v1204, 0.0
        %v1237 = vmax.f32 %v1205, 0.0
        %v1238 = vmax.f32 %v1206, 0.0
        %v1239 = vmax.f32 %v1207, 0.0
        %v1240 = vmax.f32 %v1208, 0.0
        %v1241 = vmax.f32 %v1209, 0.0
        %v1242 = vmax.f32 %v1210, 0.0
        %v1243 = vmax.f32 %v1211, 0.0
        %v1244 = vmax.f32 %v1212, 0.0
        %v1245 = vmax.f32 %v1213, 0.0
        %v1246 = vmax.f32 %v1214, 0.0
        %v1247 = vmax.f32 %v1215, 0.0
        %v1248 = vmax.f32 %v1216, 0.0
        %v1249 = vmax.f32 %v1217, 0.0
        %v1250 = vmax.f32 %v1218, 0.0
        %v1251 = vmax.f32 %v1219, 0.0
        %v1252 = vmax.f32 %v1220, 0.0
        %v1253 = vmax.f32 %v1221, 0.0
        %v1254 = vlaneseq
        %v1255 = vshrl.u32 %v1254, 7
        %v1256 = vadd.s32 %v1255, 8
        %v1257 = vadd.s32 %v1255, 16
        %v1258 = vadd.s32 %v1255, 24
        %v1259 = vadd.s32 %v1255, 32
        %v1260 = vadd.s32 %v1255, 40
        %v1261 = vadd.s32 %v1255, 48
        %v1262 = vadd.s32 %v1255, 56
        %v1263 = vadd.s32 %v1255, 64
        %v1264 = vadd.s32 %v1255, 72
        %v1265 = vadd.s32 %v1255, 80
        %v1266 = vadd.s32 %v1255, 88
        %v1267 = vadd.s32 %v1255, 96
        %v1268 = vadd.s32 %v1255, 104
        %v1269 = vadd.s32 %v1255, 112
        %v1270 = vadd.s32 %v1255, 120
        %v1271 = vadd.s32 %v1255, 128
        %v1272 = vadd.s32 %v1255, 136
        %v1273 = vadd.s32 %v1255, 144
        %v1274 = vadd.s32 %v1255, 152
        %v1275 = vadd.s32 %v1255, 160
        %v1276 = vadd.s32 %v1255, 168
        %v1277 = vadd.s32 %v1255, 176
        %v1278 = vadd.s32 %v1255, 184
        %v1279 = vadd.s32 %v1255, 192
        %v1280 = vadd.s32 %v1255, 200
        %v1281 = vadd.s32 %v1255, 208
        %v1282 = vadd.s32 %v1255, 216
        %v1283 = vadd.s32 %v1255, 224
        %v1284 = vadd.s32 %v1255, 232
        %v1285 = vadd.s32 %v1255, 240
        %v1286 = vadd.s32 %v1255, 248
        %v1287 = vstv %s373
        %v1288 = vadd.s32 %v1287, %v1255
        %v1289 = vadd.s32 %v1287, %v1256
        %v1290 = vadd.s32 %v1287, %v1257
        %v1291 = vadd.s32 %v1287, %v1258
        %v1292 = vadd.s32 %v1287, %v1259
        %v1293 = vadd.s32 %v1287, %v1260
        %v1294 = vadd.s32 %v1287, %v1261
        %v1295 = vadd.s32 %v1287, %v1262
        %v1296 = vadd.s32 %v1287, %v1263
        %v1297 = vadd.s32 %v1287, %v1264
        %v1298 = vadd.s32 %v1287, %v1265
        %v1299 = vadd.s32 %v1287, %v1266
        %v1300 = vadd.s32 %v1287, %v1267
        %v1301 = vadd.s32 %v1287, %v1268
        %v1302 = vadd.s32 %v1287, %v1269
        %v1303 = vadd.s32 %v1287, %v1270
        %v1304 = vadd.s32 %v1287, %v1271
        %v1305 = vadd.s32 %v1287, %v1272
        %v1306 = vadd.s32 %v1287, %v1273
        %v1307 = vadd.s32 %v1287, %v1274
        %v1308 = vadd.s32 %v1287, %v1275
        %v1309 = vadd.s32 %v1287, %v1276
        %v1310 = vadd.s32 %v1287, %v1277
        %v1311 = vadd.s32 %v1287, %v1278
        %v1312 = vadd.s32 %v1287, %v1279
        %v1313 = vadd.s32 %v1287, %v1280
        %v1314 = vadd.s32 %v1287, %v1281
        %v1315 = vadd.s32 %v1287, %v1282
        %v1316 = vadd.s32 %v1287, %v1283
        %v1317 = vadd.s32 %v1287, %v1284
        %v1318 = vadd.s32 %v1287, %v1285
        %v1319 = vadd.s32 %v1287, %v1286
        %vm1320 = vcmp.lt.s32.totalorder %v1288, 560
        %vm1321 = vcmp.lt.s32.totalorder %v1289, 560
        %vm1322 = vcmp.lt.s32.totalorder %v1290, 560
        %vm1323 = vcmp.lt.s32.totalorder %v1291, 560
        %vm1324 = vcmp.lt.s32.totalorder %v1292, 560
        %vm1325 = vcmp.lt.s32.totalorder %v1293, 560
        %vm1326 = vcmp.lt.s32.totalorder %v1294, 560
        %vm1327 = vcmp.lt.s32.totalorder %v1295, 560
        %vm1328 = vcmp.lt.s32.totalorder %v1296, 560
        %vm1329 = vcmp.lt.s32.totalorder %v1297, 560
        %vm1330 = vcmp.lt.s32.totalorder %v1298, 560
        %vm1331 = vcmp.lt.s32.totalorder %v1299, 560
        %vm1332 = vcmp.lt.s32.totalorder %v1300, 560
        %vm1333 = vcmp.lt.s32.totalorder %v1301, 560
        %vm1334 = vcmp.lt.s32.totalorder %v1302, 560
        %vm1335 = vcmp.lt.s32.totalorder %v1303, 560
        %vm1336 = vcmp.lt.s32.totalorder %v1304, 560
        %vm1337 = vcmp.lt.s32.totalorder %v1305, 560
        %vm1338 = vcmp.lt.s32.totalorder %v1306, 560
        %vm1339 = vcmp.lt.s32.totalorder %v1307, 560
        %vm1340 = vcmp.lt.s32.totalorder %v1308, 560
        %vm1341 = vcmp.lt.s32.totalorder %v1309, 560
        %vm1342 = vcmp.lt.s32.totalorder %v1310, 560
        %vm1343 = vcmp.lt.s32.totalorder %v1311, 560
        %vm1344 = vcmp.lt.s32.totalorder %v1312, 560
        %vm1345 = vcmp.lt.s32.totalorder %v1313, 560
        %vm1346 = vcmp.lt.s32.totalorder %v1314, 560
        %vm1347 = vcmp.lt.s32.totalorder %v1315, 560
        %vm1348 = vcmp.lt.s32.totalorder %v1316, 560
        %vm1349 = vcmp.lt.s32.totalorder %v1317, 560
        %vm1350 = vcmp.lt.s32.totalorder %v1318, 560
        %vm1351 = vcmp.lt.s32.totalorder %v1319, 560
        %v1352 = vsel %vm1320, 1, 0
        %v1353 = vsel %vm1321, 1, 0
        %v1354 = vsel %vm1322, 1, 0
        %v1355 = vsel %vm1323, 1, 0
        %v1356 = vsel %vm1324, 1, 0
        %v1357 = vsel %vm1325, 1, 0
        %v1358 = vsel %vm1326, 1, 0
        %v1359 = vsel %vm1327, 1, 0
        %v1360 = vsel %vm1328, 1, 0
        %v1361 = vsel %vm1329, 1, 0
        %v1362 = vsel %vm1330, 1, 0
        %v1363 = vsel %vm1331, 1, 0
        %v1364 = vsel %vm1332, 1, 0
        %v1365 = vsel %vm1333, 1, 0
        %v1366 = vsel %vm1334, 1, 0
        %v1367 = vsel %vm1335, 1, 0
        %v1368 = vsel %vm1336, 1, 0
        %v1369 = vsel %vm1337, 1, 0
        %v1370 = vsel %vm1338, 1, 0
        %v1371 = vsel %vm1339, 1, 0
        %v1372 = vsel %vm1340, 1, 0
        %v1373 = vsel %vm1341, 1, 0
        %v1374 = vsel %vm1342, 1, 0
        %v1375 = vsel %vm1343, 1, 0
        %v1376 = vsel %vm1344, 1, 0
        %v1377 = vsel %vm1345, 1, 0
        %v1378 = vsel %vm1346, 1, 0
        %v1379 = vsel %vm1347, 1, 0
        %v1380 = vsel %vm1348, 1, 0
        %v1381 = vsel %vm1349, 1, 0
        %v1382 = vsel %vm1350, 1, 0
        %v1383 = vsel %vm1351, 1, 0
        %vm1384 = vcmp.eq.s32.totalorder %v1352, 1
        %vm1385 = vcmp.eq.s32.totalorder %v1353, 1
        %vm1386 = vcmp.eq.s32.totalorder %v1354, 1
        %vm1387 = vcmp.eq.s32.totalorder %v1355, 1
        %vm1388 = vcmp.eq.s32.totalorder %v1356, 1
        %vm1389 = vcmp.eq.s32.totalorder %v1357, 1
        %vm1390 = vcmp.eq.s32.totalorder %v1358, 1
        %vm1391 = vcmp.eq.s32.totalorder %v1359, 1
        %vm1392 = vcmp.eq.s32.totalorder %v1360, 1
        %vm1393 = vcmp.eq.s32.totalorder %v1361, 1
        %vm1394 = vcmp.eq.s32.totalorder %v1362, 1
        %vm1395 = vcmp.eq.s32.totalorder %v1363, 1
        %vm1396 = vcmp.eq.s32.totalorder %v1364, 1
        %vm1397 = vcmp.eq.s32.totalorder %v1365, 1
        %vm1398 = vcmp.eq.s32.totalorder %v1366, 1
        %vm1399 = vcmp.eq.s32.totalorder %v1367, 1
        %vm1400 = vcmp.eq.s32.totalorder %v1368, 1
        %vm1401 = vcmp.eq.s32.totalorder %v1369, 1
        %vm1402 = vcmp.eq.s32.totalorder %v1370, 1
        %vm1403 = vcmp.eq.s32.totalorder %v1371, 1
        %vm1404 = vcmp.eq.s32.totalorder %v1372, 1
        %vm1405 = vcmp.eq.s32.totalorder %v1373, 1
        %vm1406 = vcmp.eq.s32.totalorder %v1374, 1
        %vm1407 = vcmp.eq.s32.totalorder %v1375, 1
        %vm1408 = vcmp.eq.s32.totalorder %v1376, 1
        %vm1409 = vcmp.eq.s32.totalorder %v1377, 1
        %vm1410 = vcmp.eq.s32.totalorder %v1378, 1
        %vm1411 = vcmp.eq.s32.totalorder %v1379, 1
        %vm1412 = vcmp.eq.s32.totalorder %v1380, 1
        %vm1413 = vcmp.eq.s32.totalorder %v1381, 1
        %vm1414 = vcmp.eq.s32.totalorder %v1382, 1
        %vm1415 = vcmp.eq.s32.totalorder %v1383, 1
        %v1416 = vsel %vm1384, %v1222, 0.0
        %v1417 = vsel %vm1385, %v1223, 0.0
        %v1418 = vsel %vm1386, %v1224, 0.0
        %v1419 = vsel %vm1387, %v1225, 0.0
        %v1420 = vsel %vm1388, %v1226, 0.0
        %v1421 = vsel %vm1389, %v1227, 0.0
        %v1422 = vsel %vm1390, %v1228, 0.0
        %v1423 = vsel %vm1391, %v1229, 0.0
        %v1424 = vsel %vm1392, %v1230, 0.0
        %v1425 = vsel %vm1393, %v1231, 0.0
        %v1426 = vsel %vm1394, %v1232, 0.0
        %v1427 = vsel %vm1395, %v1233, 0.0
        %v1428 = vsel %vm1396, %v1234, 0.0
        %v1429 = vsel %vm1397, %v1235, 0.0
        %v1430 = vsel %vm1398, %v1236, 0.0
        %v1431 = vsel %vm1399, %v1237, 0.0
        %v1432 = vsel %vm1400, %v1238, 0.0
        %v1433 = vsel %vm1401, %v1239, 0.0
        %v1434 = vsel %vm1402, %v1240, 0.0
        %v1435 = vsel %vm1403, %v1241, 0.0
        %v1436 = vsel %vm1404, %v1242, 0.0
        %v1437 = vsel %vm1405, %v1243, 0.0
        %v1438 = vsel %vm1406, %v1244, 0.0
        %v1439 = vsel %vm1407, %v1245, 0.0
        %v1440 = vsel %vm1408, %v1246, 0.0
        %v1441 = vsel %vm1409, %v1247, 0.0
        %v1442 = vsel %vm1410, %v1248, 0.0
        %v1443 = vsel %vm1411, %v1249, 0.0
        %v1444 = vsel %vm1412, %v1250, 0.0
        %v1445 = vsel %vm1413, %v1251, 0.0
        %v1446 = vsel %vm1414, %v1252, 0.0
        %v1447 = vsel %vm1415, %v1253, 0.0
        %v1448 = vpack.c.bf16 %v1417, %v1416
        %v1449 = vpack.c.bf16 %v1419, %v1418
        %v1450 = vpack.c.bf16 %v1421, %v1420
        %v1451 = vpack.c.bf16 %v1423, %v1422
        %v1452 = vpack.c.bf16 %v1425, %v1424
        %v1453 = vpack.c.bf16 %v1427, %v1426
        %v1454 = vpack.c.bf16 %v1429, %v1428
        %v1455 = vpack.c.bf16 %v1431, %v1430
        %v1456 = vpack.c.bf16 %v1433, %v1432
        %v1457 = vpack.c.bf16 %v1435, %v1434
        %v1458 = vpack.c.bf16 %v1437, %v1436
        %v1459 = vpack.c.bf16 %v1439, %v1438
        %v1460 = vpack.c.bf16 %v1441, %v1440
        %v1461 = vpack.c.bf16 %v1443, %v1442
        %v1462 = vpack.c.bf16 %v1445, %v1444
        %v1463 = vpack.c.bf16 %v1447, %v1446
        %vm1464 = vcmask 261120
        %v1466 = vsel %vm1464, %v1448, 0
        %v1469 = vsel %vm1464, %v1449, 0
        %v1472 = vsel %vm1464, %v1450, 0
        %v1475 = vsel %vm1464, %v1451, 0
        %v1478 = vsel %vm1464, %v1452, 0
        %v1481 = vsel %vm1464, %v1453, 0
        %v1484 = vsel %vm1464, %v1454, 0
        %v1487 = vsel %vm1464, %v1455, 0
        %v1490 = vsel %vm1464, %v1456, 0
        %v1493 = vsel %vm1464, %v1457, 0
        %v1496 = vsel %vm1464, %v1458, 0
        %v1499 = vsel %vm1464, %v1459, 0
        %v1502 = vsel %vm1464, %v1460, 0
        %v1505 = vsel %vm1464, %v1461, 0
        %v1508 = vsel %vm1464, %v1462, 0
        %v1511 = vsel %vm1464, %v1463, 0
        %1513 = vmatprep.subr.bf16.mxu0 0
        %1514 = vmatpush1.bf16.xpose.msra.mxu0 %v1466
        %1515 = vmatprep.subr.bf16.mxu0 0
        %1516 = vmatpush1.bf16.xpose.msra.mxu0 %v1469
        %1517 = vmatprep.subr.bf16.mxu0 0
        %1518 = vmatpush1.bf16.xpose.msra.mxu0 %v1472
        %1519 = vmatprep.subr.bf16.mxu0 0
        %1520 = vmatpush1.bf16.xpose.msra.mxu0 %v1475
        %1521 = vmatprep.subr.bf16.mxu0 0
        %1522 = vmatpush1.bf16.xpose.msra.mxu0 %v1478
        %1523 = vmatprep.subr.bf16.mxu0 0
        %1524 = vmatpush1.bf16.xpose.msra.mxu0 %v1481
        %1525 = vmatprep.subr.bf16.mxu0 0
        %1526 = vmatpush1.bf16.xpose.msra.mxu0 %v1484
        %1527 = vmatprep.subr.bf16.mxu0 0
        %1528 = vmatpush1.bf16.xpose.msra.mxu0 %v1487
        %1529 = vmatprep.subr.bf16.mxu0 0
        %1530 = vmatpush1.bf16.xpose.msra.mxu0 %v1490
        %1531 = vmatprep.subr.bf16.mxu0 0
        %1532 = vmatpush1.bf16.xpose.msra.mxu0 %v1493
        %1533 = vmatprep.subr.bf16.mxu0 0
        %1534 = vmatpush1.bf16.xpose.msra.mxu0 %v1496
        %1535 = vmatprep.subr.bf16.mxu0 0
        %1536 = vmatpush1.bf16.xpose.msra.mxu0 %v1499
        %1537 = vmatprep.subr.bf16.mxu0 0
        %1538 = vmatpush1.bf16.xpose.msra.mxu0 %v1502
        %1539 = vmatprep.subr.bf16.mxu0 0
        %1540 = vmatpush1.bf16.xpose.msra.mxu0 %v1505
        %1541 = vmatprep.subr.bf16.mxu0 0
        %1542 = vmatpush1.bf16.xpose.msra.mxu0 %v1508
        %1543 = vmatprep.subr.bf16.mxu0 0
        %1544 = vmatpush1.bf16.xpose.msra.mxu0 %v1511
        %1545 = vmatprep.mubr.bf16.mxu0 0
        %1546 = vmatmul.mubr.bf16.gmra.mrb[0].mxu0 %v1466
        %v1547 = vpop.f32.mrb[0].mxu0
        %v1548 = vadd.f32 %v307, %v1547
        %v1549 = vpop.f32.mrb[0].mxu0
        %v1550 = vadd.f32 %v308, %v1549
        %v1551 = vpop.f32.mrb[0].mxu0
        %v1552 = vadd.f32 %v309, %v1551
        %v1553 = vpop.f32.mrb[0].mxu0
        %v1554 = vadd.f32 %v310, %v1553
        %1555 = vmatprep.mubr.bf16.mxu0 0
        %1556 = vmatmul.mubr.bf16.gmra.mrb[0].mxu0 %v1469
        %v1557 = vpop.f32.mrb[0].mxu0
        %v1558 = vadd.f32 %v311, %v1557
        %v1559 = vpop.f32.mrb[0].mxu0
        %v1560 = vadd.f32 %v312, %v1559
        %v1561 = vpop.f32.mrb[0].mxu0
        %v1562 = vadd.f32 %v313, %v1561
        %v1563 = vpop.f32.mrb[0].mxu0
        %v1564 = vadd.f32 %v314, %v1563
        %1565 = vmatprep.mubr.bf16.mxu0 0
        %1566 = vmatmul.mubr.bf16.gmra.mrb[0].mxu0 %v1472
        %v1567 = vpop.f32.mrb[0].mxu0
        %v1568 = vadd.f32 %v315, %v1567
        %v1569 = vpop.f32.mrb[0].mxu0
        %v1570 = vadd.f32 %v316, %v1569
        %v1571 = vpop.f32.mrb[0].mxu0
        %v1572 = vadd.f32 %v317, %v1571
        %v1573 = vpop.f32.mrb[0].mxu0
        %v1574 = vadd.f32 %v318, %v1573
        %1575 = vmatprep.mubr.bf16.mxu0 0
        %1576 = vmatmul.mubr.bf16.gmra.mrb[0].mxu0 %v1475
        %v1577 = vpop.f32.mrb[0].mxu0
        %v1578 = vadd.f32 %v319, %v1577
        %v1579 = vpop.f32.mrb[0].mxu0
        %v1580 = vadd.f32 %v320, %v1579
        %v1581 = vpop.f32.mrb[0].mxu0
        %v1582 = vadd.f32 %v321, %v1581
        %v1583 = vpop.f32.mrb[0].mxu0
        %v1584 = vadd.f32 %v322, %v1583
        %1585 = vmatprep.mubr.bf16.mxu0 0
        %1586 = vmatmul.mubr.bf16.gmra.mrb[0].mxu0 %v1478
        %v1587 = vpop.f32.mrb[0].mxu0
        %v1588 = vadd.f32 %v323, %v1587
        %v1589 = vpop.f32.mrb[0].mxu0
        %v1590 = vadd.f32 %v324, %v1589
        %v1591 = vpop.f32.mrb[0].mxu0
        %v1592 = vadd.f32 %v325, %v1591
        %v1593 = vpop.f32.mrb[0].mxu0
        %v1594 = vadd.f32 %v326, %v1593
        %1595 = vmatprep.mubr.bf16.mxu0 0
        %1596 = vmatmul.mubr.bf16.gmra.mrb[0].mxu0 %v1481
        %v1597 = vpop.f32.mrb[0].mxu0
        %v1598 = vadd.f32 %v327, %v1597
        %v1599 = vpop.f32.mrb[0].mxu0
        %v1600 = vadd.f32 %v328, %v1599
        %v1601 = vpop.f32.mrb[0].mxu0
        %v1602 = vadd.f32 %v329, %v1601
        %v1603 = vpop.f32.mrb[0].mxu0
        %v1604 = vadd.f32 %v330, %v1603
        %1605 = vmatprep.mubr.bf16.mxu0 0
        %1606 = vmatmul.mubr.bf16.gmra.mrb[0].mxu0 %v1484
        %v1607 = vpop.f32.mrb[0].mxu0
        %v1608 = vadd.f32 %v331, %v1607
        %v1609 = vpop.f32.mrb[0].mxu0
        %v1610 = vadd.f32 %v332, %v1609
        %v1611 = vpop.f32.mrb[0].mxu0
        %v1612 = vadd.f32 %v333, %v1611
        %v1613 = vpop.f32.mrb[0].mxu0
        %v1614 = vadd.f32 %v334, %v1613
        %1615 = vmatprep.mubr.bf16.mxu0 0
        %1616 = vmatmul.mubr.bf16.gmra.mrb[0].mxu0 %v1487
        %v1617 = vpop.f32.mrb[0].mxu0
        %v1618 = vadd.f32 %v335, %v1617
        %v1619 = vpop.f32.mrb[0].mxu0
        %v1620 = vadd.f32 %v336, %v1619
        %v1621 = vpop.f32.mrb[0].mxu0
        %v1622 = vadd.f32 %v337, %v1621
        %v1623 = vpop.f32.mrb[0].mxu0
        %v1624 = vadd.f32 %v338, %v1623
        %1625 = vmatprep.mubr.bf16.mxu0 0
        %1626 = vmatmul.mubr.bf16.gmra.mrb[0].mxu0 %v1490
        %v1627 = vpop.f32.mrb[0].mxu0
        %v1628 = vadd.f32 %v339, %v1627
        %v1629 = vpop.f32.mrb[0].mxu0
        %v1630 = vadd.f32 %v340, %v1629
        %v1631 = vpop.f32.mrb[0].mxu0
        %v1632 = vadd.f32 %v341, %v1631
        %v1633 = vpop.f32.mrb[0].mxu0
        %v1634 = vadd.f32 %v342, %v1633
        %1635 = vmatprep.mubr.bf16.mxu0 0
        %1636 = vmatmul.mubr.bf16.gmra.mrb[0].mxu0 %v1493
        %v1637 = vpop.f32.mrb[0].mxu0
        %v1638 = vadd.f32 %v343, %v1637
        %v1639 = vpop.f32.mrb[0].mxu0
        %v1640 = vadd.f32 %v344, %v1639
        %v1641 = vpop.f32.mrb[0].mxu0
        %v1642 = vadd.f32 %v345, %v1641
        %v1643 = vpop.f32.mrb[0].mxu0
        %v1644 = vadd.f32 %v346, %v1643
        %1645 = vmatprep.mubr.bf16.mxu0 0
        %1646 = vmatmul.mubr.bf16.gmra.mrb[0].mxu0 %v1496
        %v1647 = vpop.f32.mrb[0].mxu0
        %v1648 = vadd.f32 %v347, %v1647
        %v1649 = vpop.f32.mrb[0].mxu0
        %v1650 = vadd.f32 %v348, %v1649
        %v1651 = vpop.f32.mrb[0].mxu0
        %v1652 = vadd.f32 %v349, %v1651
        %v1653 = vpop.f32.mrb[0].mxu0
        %v1654 = vadd.f32 %v350, %v1653
        %1655 = vmatprep.mubr.bf16.mxu0 0
        %1656 = vmatmul.mubr.bf16.gmra.mrb[0].mxu0 %v1499
        %v1657 = vpop.f32.mrb[0].mxu0
        %v1658 = vadd.f32 %v351, %v1657
        %v1659 = vpop.f32.mrb[0].mxu0
        %v1660 = vadd.f32 %v352, %v1659
        %v1661 = vpop.f32.mrb[0].mxu0
        %v1662 = vadd.f32 %v353, %v1661
        %v1663 = vpop.f32.mrb[0].mxu0
        %v1664 = vadd.f32 %v354, %v1663
        %1665 = vmatprep.mubr.bf16.mxu0 0
        %1666 = vmatmul.mubr.bf16.gmra.mrb[0].mxu0 %v1502
        %v1667 = vpop.f32.mrb[0].mxu0
        %v1668 = vadd.f32 %v355, %v1667
        %v1669 = vpop.f32.mrb[0].mxu0
        %v1670 = vadd.f32 %v356, %v1669
        %v1671 = vpop.f32.mrb[0].mxu0
        %v1672 = vadd.f32 %v357, %v1671
        %v1673 = vpop.f32.mrb[0].mxu0
        %v1674 = vadd.f32 %v358, %v1673
        %1675 = vmatprep.mubr.bf16.mxu0 0
        %1676 = vmatmul.mubr.bf16.gmra.mrb[0].mxu0 %v1505
        %v1677 = vpop.f32.mrb[0].mxu0
        %v1678 = vadd.f32 %v359, %v1677
        %v1679 = vpop.f32.mrb[0].mxu0
        %v1680 = vadd.f32 %v360, %v1679
        %v1681 = vpop.f32.mrb[0].mxu0
        %v1682 = vadd.f32 %v361, %v1681
        %v1683 = vpop.f32.mrb[0].mxu0
        %v1684 = vadd.f32 %v362, %v1683
        %1685 = vmatprep.mubr.bf16.mxu0 0
        %1686 = vmatmul.mubr.bf16.gmra.mrb[0].mxu0 %v1508
        %v1687 = vpop.f32.mrb[0].mxu0
        %v1688 = vadd.f32 %v363, %v1687
        %v1689 = vpop.f32.mrb[0].mxu0
        %v1690 = vadd.f32 %v364, %v1689
        %v1691 = vpop.f32.mrb[0].mxu0
        %v1692 = vadd.f32 %v365, %v1691
        %v1693 = vpop.f32.mrb[0].mxu0
        %v1694 = vadd.f32 %v366, %v1693
        %1695 = vmatprep.mubr.bf16.mxu0 0
        %1696 = vmatmul.mubr.bf16.gmra.mrb[0].mxu0 %v1511
        %v1697 = vpop.f32.mrb[0].mxu0
        %v1698 = vadd.f32 %v367, %v1697
        %v1699 = vpop.f32.mrb[0].mxu0
        %v1700 = vadd.f32 %v368, %v1699
        %v1701 = vpop.f32.mrb[0].mxu0
        %v1702 = vadd.f32 %v369, %v1701
        %v1703 = vpop.f32.mrb[0].mxu0
        %v1704 = vadd.f32 %v370, %v1703
        %1705 = vdwg.mxu0
        %v1706 = vmax.f32 %v1548, %v1550
        %1707 = vmax.xlane.f32.xlu0 %v1706
        %v1708 = vpop.xlane.xlu0 %1707
        %v1709 = vmax.f32 %v1552, %v1554
        %1710 = vmax.xlane.f32.xlu0 %v1709
        %v1711 = vpop.xlane.xlu0 %1710
        %v1712 = vmax.f32 %v1558, %v1560
        %1713 = vmax.xlane.f32.xlu0 %v1712
        %v1714 = vpop.xlane.xlu0 %1713
        %v1715 = vmax.f32 %v1562, %v1564
        %1716 = vmax.xlane.f32.xlu0 %v1715
        %v1717 = vpop.xlane.xlu0 %1716
        %v1718 = vmax.f32 %v1568, %v1570
        %1719 = vmax.xlane.f32.xlu0 %v1718
        %v1720 = vpop.xlane.xlu0 %1719
        %v1721 = vmax.f32 %v1572, %v1574
        %1722 = vmax.xlane.f32.xlu0 %v1721
        %v1723 = vpop.xlane.xlu0 %1722
        %v1724 = vmax.f32 %v1578, %v1580
        %1725 = vmax.xlane.f32.xlu0 %v1724
        %v1726 = vpop.xlane.xlu0 %1725
        %v1727 = vmax.f32 %v1582, %v1584
        %1728 = vmax.xlane.f32.xlu0 %v1727
        %v1729 = vpop.xlane.xlu0 %1728
        %v1730 = vmax.f32 %v1588, %v1590
        %1731 = vmax.xlane.f32.xlu0 %v1730
        %v1732 = vpop.xlane.xlu0 %1731
        %v1733 = vmax.f32 %v1592, %v1594
        %1734 = vmax.xlane.f32.xlu0 %v1733
        %v1735 = vpop.xlane.xlu0 %1734
        %v1736 = vmax.f32 %v1598, %v1600
        %1737 = vmax.xlane.f32.xlu0 %v1736
        %v1738 = vpop.xlane.xlu0 %1737
        %v1739 = vmax.f32 %v1602, %v1604
        %1740 = vmax.xlane.f32.xlu0 %v1739
        %v1741 = vpop.xlane.xlu0 %1740
        %v1742 = vmax.f32 %v1608, %v1610
        %1743 = vmax.xlane.f32.xlu0 %v1742
        %v1744 = vpop.xlane.xlu0 %1743
        %v1745 = vmax.f32 %v1612, %v1614
        %1746 = vmax.xlane.f32.xlu0 %v1745
        %v1747 = vpop.xlane.xlu0 %1746
        %v1748 = vmax.f32 %v1618, %v1620
        %1749 = vmax.xlane.f32.xlu0 %v1748
        %v1750 = vpop.xlane.xlu0 %1749
        %v1751 = vmax.f32 %v1622, %v1624
        %1752 = vmax.xlane.f32.xlu0 %v1751
        %v1753 = vpop.xlane.xlu0 %1752
        %v1754 = vmax.f32 %v1628, %v1630
        %1755 = vmax.xlane.f32.xlu0 %v1754
        %v1756 = vpop.xlane.xlu0 %1755
        %v1757 = vmax.f32 %v1632, %v1634
        %1758 = vmax.xlane.f32.xlu0 %v1757
        %v1759 = vpop.xlane.xlu0 %1758
        %v1760 = vmax.f32 %v1638, %v1640
        %1761 = vmax.xlane.f32.xlu0 %v1760
        %v1762 = vpop.xlane.xlu0 %1761
        %v1763 = vmax.f32 %v1642, %v1644
        %1764 = vmax.xlane.f32.xlu0 %v1763
        %v1765 = vpop.xlane.xlu0 %1764
        %v1766 = vmax.f32 %v1648, %v1650
        %1767 = vmax.xlane.f32.xlu0 %v1766
        %v1768 = vpop.xlane.xlu0 %1767
        %v1769 = vmax.f32 %v1652, %v1654
        %1770 = vmax.xlane.f32.xlu0 %v1769
        %v1771 = vpop.xlane.xlu0 %1770
        %v1772 = vmax.f32 %v1658, %v1660
        %1773 = vmax.xlane.f32.xlu0 %v1772
        %v1774 = vpop.xlane.xlu0 %1773
        %v1775 = vmax.f32 %v1662, %v1664
        %1776 = vmax.xlane.f32.xlu0 %v1775
        %v1777 = vpop.xlane.xlu0 %1776
        %v1778 = vmax.f32 %v1668, %v1670
        %1779 = vmax.xlane.f32.xlu0 %v1778
        %v1780 = vpop.xlane.xlu0 %1779
        %v1781 = vmax.f32 %v1672, %v1674
        %1782 = vmax.xlane.f32.xlu0 %v1781
        %v1783 = vpop.xlane.xlu0 %1782
        %v1784 = vmax.f32 %v1678, %v1680
        %1785 = vmax.xlane.f32.xlu0 %v1784
        %v1786 = vpop.xlane.xlu0 %1785
        %v1787 = vmax.f32 %v1682, %v1684
        %1788 = vmax.xlane.f32.xlu0 %v1787
        %v1789 = vpop.xlane.xlu0 %1788
        %v1790 = vmax.f32 %v1688, %v1690
        %1791 = vmax.xlane.f32.xlu0 %v1790
        %v1792 = vpop.xlane.xlu0 %1791
        %v1793 = vmax.f32 %v1692, %v1694
        %1794 = vmax.xlane.f32.xlu0 %v1793
        %v1795 = vpop.xlane.xlu0 %1794
        %v1796 = vmax.f32 %v1698, %v1700
        %1797 = vmax.xlane.f32.xlu0 %v1796
        %v1798 = vpop.xlane.xlu0 %1797
        %v1799 = vmax.f32 %v1702, %v1704
        %1800 = vmax.xlane.f32.xlu0 %v1799
        %v1801 = vpop.xlane.xlu0 %1800
        %v1802 = vsub.f32 %v1548, %v1708
        %v1803 = vsub.f32 %v1550, %v1708
        %v1804 = vsub.f32 %v1552, %v1711
        %v1805 = vsub.f32 %v1554, %v1711
        %v1806 = vsub.f32 %v1558, %v1714
        %v1807 = vsub.f32 %v1560, %v1714
        %v1808 = vsub.f32 %v1562, %v1717
        %v1809 = vsub.f32 %v1564, %v1717
        %v1810 = vsub.f32 %v1568, %v1720
        %v1811 = vsub.f32 %v1570, %v1720
        %v1812 = vsub.f32 %v1572, %v1723
        %v1813 = vsub.f32 %v1574, %v1723
        %v1814 = vsub.f32 %v1578, %v1726
        %v1815 = vsub.f32 %v1580, %v1726
        %v1816 = vsub.f32 %v1582, %v1729
        %v1817 = vsub.f32 %v1584, %v1729
        %v1818 = vsub.f32 %v1588, %v1732
        %v1819 = vsub.f32 %v1590, %v1732
        %v1820 = vsub.f32 %v1592, %v1735
        %v1821 = vsub.f32 %v1594, %v1735
        %v1822 = vsub.f32 %v1598, %v1738
        %v1823 = vsub.f32 %v1600, %v1738
        %v1824 = vsub.f32 %v1602, %v1741
        %v1825 = vsub.f32 %v1604, %v1741
        %v1826 = vsub.f32 %v1608, %v1744
        %v1827 = vsub.f32 %v1610, %v1744
        %v1828 = vsub.f32 %v1612, %v1747
        %v1829 = vsub.f32 %v1614, %v1747
        %v1830 = vsub.f32 %v1618, %v1750
        %v1831 = vsub.f32 %v1620, %v1750
        %v1832 = vsub.f32 %v1622, %v1753
        %v1833 = vsub.f32 %v1624, %v1753
        %v1834 = vsub.f32 %v1628, %v1756
        %v1835 = vsub.f32 %v1630, %v1756
        %v1836 = vsub.f32 %v1632, %v1759
        %v1837 = vsub.f32 %v1634, %v1759
        %v1838 = vsub.f32 %v1638, %v1762
        %v1839 = vsub.f32 %v1640, %v1762
        %v1840 = vsub.f32 %v1642, %v1765
        %v1841 = vsub.f32 %v1644, %v1765
        %v1842 = vsub.f32 %v1648, %v1768
        %v1843 = vsub.f32 %v1650, %v1768
        %v1844 = vsub.f32 %v1652, %v1771
        %v1845 = vsub.f32 %v1654, %v1771
        %v1846 = vsub.f32 %v1658, %v1774
        %v1847 = vsub.f32 %v1660, %v1774
        %v1848 = vsub.f32 %v1662, %v1777
        %v1849 = vsub.f32 %v1664, %v1777
        %v1850 = vsub.f32 %v1668, %v1780
        %v1851 = vsub.f32 %v1670, %v1780
        %v1852 = vsub.f32 %v1672, %v1783
        %v1853 = vsub.f32 %v1674, %v1783
        %v1854 = vsub.f32 %v1678, %v1786
        %v1855 = vsub.f32 %v1680, %v1786
        %v1856 = vsub.f32 %v1682, %v1789
        %v1857 = vsub.f32 %v1684, %v1789
        %v1858 = vsub.f32 %v1688, %v1792
        %v1859 = vsub.f32 %v1690, %v1792
        %v1860 = vsub.f32 %v1692, %v1795
        %v1861 = vsub.f32 %v1694, %v1795
        %v1862 = vsub.f32 %v1698, %v1798
        %v1863 = vsub.f32 %v1700, %v1798
        %v1864 = vsub.f32 %v1702, %v1801
        %v1865 = vsub.f32 %v1704, %v1801
        %v1866 = vmul.f32 %v1802, 1.442695
        %v1867 = vpow.pop %v1866
        %v1868 = vmul.f32 %v1803, 1.442695
        %v1869 = vpow.pop %v1868
        %v1870 = vmul.f32 %v1804, 1.442695
        %v1871 = vpow.pop %v1870
        %v1872 = vmul.f32 %v1805, 1.442695
        %v1873 = vpow.pop %v1872
        %v1874 = vmul.f32 %v1806, 1.442695
        %v1875 = vpow.pop %v1874
        %v1876 = vmul.f32 %v1807, 1.442695
        %v1877 = vpow.pop %v1876
        %v1878 = vmul.f32 %v1808, 1.442695
        %v1879 = vpow.pop %v1878
        %v1880 = vmul.f32 %v1809, 1.442695
        %v1881 = vpow.pop %v1880
        %v1882 = vmul.f32 %v1810, 1.442695
        %v1883 = vpow.pop %v1882
        %v1884 = vmul.f32 %v1811, 1.442695
        %v1885 = vpow.pop %v1884
        %v1886 = vmul.f32 %v1812, 1.442695
        %v1887 = vpow.pop %v1886
        %v1888 = vmul.f32 %v1813, 1.442695
        %v1889 = vpow.pop %v1888
        %v1890 = vmul.f32 %v1814, 1.442695
        %v1891 = vpow.pop %v1890
        %v1892 = vmul.f32 %v1815, 1.442695
        %v1893 = vpow.pop %v1892
        %v1894 = vmul.f32 %v1816, 1.442695
        %v1895 = vpow.pop %v1894
        %v1896 = vmul.f32 %v1817, 1.442695
        %v1897 = vpow.pop %v1896
        %v1898 = vmul.f32 %v1818, 1.442695
        %v1899 = vpow.pop %v1898
        %v1900 = vmul.f32 %v1819, 1.442695
        %v1901 = vpow.pop %v1900
        %v1902 = vmul.f32 %v1820, 1.442695
        %v1903 = vpow.pop %v1902
        %v1904 = vmul.f32 %v1821, 1.442695
        %v1905 = vpow.pop %v1904
        %v1906 = vmul.f32 %v1822, 1.442695
        %v1907 = vpow.pop %v1906
        %v1908 = vmul.f32 %v1823, 1.442695
        %v1909 = vpow.pop %v1908
        %v1910 = vmul.f32 %v1824, 1.442695
        %v1911 = vpow.pop %v1910
        %v1912 = vmul.f32 %v1825, 1.442695
        %v1913 = vpow.pop %v1912
        %v1914 = vmul.f32 %v1826, 1.442695
        %v1915 = vpow.pop %v1914
        %v1916 = vmul.f32 %v1827, 1.442695
        %v1917 = vpow.pop %v1916
        %v1918 = vmul.f32 %v1828, 1.442695
        %v1919 = vpow.pop %v1918
        %v1920 = vmul.f32 %v1829, 1.442695
        %v1921 = vpow.pop %v1920
        %v1922 = vmul.f32 %v1830, 1.442695
        %v1923 = vpow.pop %v1922
        %v1924 = vmul.f32 %v1831, 1.442695
        %v1925 = vpow.pop %v1924
        %v1926 = vmul.f32 %v1832, 1.442695
        %v1927 = vpow.pop %v1926
        %v1928 = vmul.f32 %v1833, 1.442695
        %v1929 = vpow.pop %v1928
        %v1930 = vmul.f32 %v1834, 1.442695
        %v1931 = vpow.pop %v1930
        %v1932 = vmul.f32 %v1835, 1.442695
        %v1933 = vpow.pop %v1932
        %v1934 = vmul.f32 %v1836, 1.442695
        %v1935 = vpow.pop %v1934
        %v1936 = vmul.f32 %v1837, 1.442695
        %v1937 = vpow.pop %v1936
        %v1938 = vmul.f32 %v1838, 1.442695
        %v1939 = vpow.pop %v1938
        %v1940 = vmul.f32 %v1839, 1.442695
        %v1941 = vpow.pop %v1940
        %v1942 = vmul.f32 %v1840, 1.442695
        %v1943 = vpow.pop %v1942
        %v1944 = vmul.f32 %v1841, 1.442695
        %v1945 = vpow.pop %v1944
        %v1946 = vmul.f32 %v1842, 1.442695
        %v1947 = vpow.pop %v1946
        %v1948 = vmul.f32 %v1843, 1.442695
        %v1949 = vpow.pop %v1948
        %v1950 = vmul.f32 %v1844, 1.442695
        %v1951 = vpow.pop %v1950
        %v1952 = vmul.f32 %v1845, 1.442695
        %v1953 = vpow.pop %v1952
        %v1954 = vmul.f32 %v1846, 1.442695
        %v1955 = vpow.pop %v1954
        %v1956 = vmul.f32 %v1847, 1.442695
        %v1957 = vpow.pop %v1956
        %v1958 = vmul.f32 %v1848, 1.442695
        %v1959 = vpow.pop %v1958
        %v1960 = vmul.f32 %v1849, 1.442695
        %v1961 = vpow.pop %v1960
        %v1962 = vmul.f32 %v1850, 1.442695
        %v1963 = vpow.pop %v1962
        %v1964 = vmul.f32 %v1851, 1.442695
        %v1965 = vpow.pop %v1964
        %v1966 = vmul.f32 %v1852, 1.442695
        %v1967 = vpow.pop %v1966
        %v1968 = vmul.f32 %v1853, 1.442695
        %v1969 = vpow.pop %v1968
        %v1970 = vmul.f32 %v1854, 1.442695
        %v1971 = vpow.pop %v1970
        %v1972 = vmul.f32 %v1855, 1.442695
        %v1973 = vpow.pop %v1972
        %v1974 = vmul.f32 %v1856, 1.442695
        %v1975 = vpow.pop %v1974
        %v1976 = vmul.f32 %v1857, 1.442695
        %v1977 = vpow.pop %v1976
        %v1978 = vmul.f32 %v1858, 1.442695
        %v1979 = vpow.pop %v1978
        %v1980 = vmul.f32 %v1859, 1.442695
        %v1981 = vpow.pop %v1980
        %v1982 = vmul.f32 %v1860, 1.442695
        %v1983 = vpow.pop %v1982
        %v1984 = vmul.f32 %v1861, 1.442695
        %v1985 = vpow.pop %v1984
        %v1986 = vmul.f32 %v1862, 1.442695
        %v1987 = vpow.pop %v1986
        %v1988 = vmul.f32 %v1863, 1.442695
        %v1989 = vpow.pop %v1988
        %v1990 = vmul.f32 %v1864, 1.442695
        %v1991 = vpow.pop %v1990
        %v1992 = vmul.f32 %v1865, 1.442695
        %v1993 = vpow.pop %v1992
        %v1994 = vadd.f32 %v1867, %v1869
        %1995 = vadd.xlane.f32.xlu0 %v1994
        %v1996 = vpop.xlane.xlu0 %1995
        %v1997 = vadd.f32 %v1871, %v1873
        %1998 = vadd.xlane.f32.xlu0 %v1997
        %v1999 = vpop.xlane.xlu0 %1998
        %v2000 = vadd.f32 %v1875, %v1877
        %2001 = vadd.xlane.f32.xlu0 %v2000
        %v2002 = vpop.xlane.xlu0 %2001
        %v2003 = vadd.f32 %v1879, %v1881
        %2004 = vadd.xlane.f32.xlu0 %v2003
        %v2005 = vpop.xlane.xlu0 %2004
        %v2006 = vadd.f32 %v1883, %v1885
        %2007 = vadd.xlane.f32.xlu0 %v2006
        %v2008 = vpop.xlane.xlu0 %2007
        %v2009 = vadd.f32 %v1887, %v1889
        %2010 = vadd.xlane.f32.xlu0 %v2009
        %v2011 = vpop.xlane.xlu0 %2010
        %v2012 = vadd.f32 %v1891, %v1893
        %2013 = vadd.xlane.f32.xlu0 %v2012
        %v2014 = vpop.xlane.xlu0 %2013
        %v2015 = vadd.f32 %v1895, %v1897
        %2016 = vadd.xlane.f32.xlu0 %v2015
        %v2017 = vpop.xlane.xlu0 %2016
        %v2018 = vadd.f32 %v1899, %v1901
        %2019 = vadd.xlane.f32.xlu0 %v2018
        %v2020 = vpop.xlane.xlu0 %2019
        %v2021 = vadd.f32 %v1903, %v1905
        %2022 = vadd.xlane.f32.xlu0 %v2021
        %v2023 = vpop.xlane.xlu0 %2022
        %v2024 = vadd.f32 %v1907, %v1909
        %2025 = vadd.xlane.f32.xlu0 %v2024
        %v2026 = vpop.xlane.xlu0 %2025
        %v2027 = vadd.f32 %v1911, %v1913
        %2028 = vadd.xlane.f32.xlu0 %v2027
        %v2029 = vpop.xlane.xlu0 %2028
        %v2030 = vadd.f32 %v1915, %v1917
        %2031 = vadd.xlane.f32.xlu0 %v2030
        %v2032 = vpop.xlane.xlu0 %2031
        %v2033 = vadd.f32 %v1919, %v1921
        %2034 = vadd.xlane.f32.xlu0 %v2033
        %v2035 = vpop.xlane.xlu0 %2034
        %v2036 = vadd.f32 %v1923, %v1925
        %2037 = vadd.xlane.f32.xlu0 %v2036
        %v2038 = vpop.xlane.xlu0 %2037
        %v2039 = vadd.f32 %v1927, %v1929
        %2040 = vadd.xlane.f32.xlu0 %v2039
        %v2041 = vpop.xlane.xlu0 %2040
        %v2042 = vadd.f32 %v1931, %v1933
        %2043 = vadd.xlane.f32.xlu0 %v2042
        %v2044 = vpop.xlane.xlu0 %2043
        %v2045 = vadd.f32 %v1935, %v1937
        %2046 = vadd.xlane.f32.xlu0 %v2045
        %v2047 = vpop.xlane.xlu0 %2046
        %v2048 = vadd.f32 %v1939, %v1941
        %2049 = vadd.xlane.f32.xlu0 %v2048
        %v2050 = vpop.xlane.xlu0 %2049
        %v2051 = vadd.f32 %v1943, %v1945
        %2052 = vadd.xlane.f32.xlu0 %v2051
        %v2053 = vpop.xlane.xlu0 %2052
        %v2054 = vadd.f32 %v1947, %v1949
        %2055 = vadd.xlane.f32.xlu0 %v2054
        %v2056 = vpop.xlane.xlu0 %2055
        %v2057 = vadd.f32 %v1951, %v1953
        %2058 = vadd.xlane.f32.xlu0 %v2057
        %v2059 = vpop.xlane.xlu0 %2058
        %v2060 = vadd.f32 %v1955, %v1957
        %2061 = vadd.xlane.f32.xlu0 %v2060
        %v2062 = vpop.xlane.xlu0 %2061
        %v2063 = vadd.f32 %v1959, %v1961
        %2064 = vadd.xlane.f32.xlu0 %v2063
        %v2065 = vpop.xlane.xlu0 %2064
        %v2066 = vadd.f32 %v1963, %v1965
        %2067 = vadd.xlane.f32.xlu0 %v2066
        %v2068 = vpop.xlane.xlu0 %2067
        %v2069 = vadd.f32 %v1967, %v1969
        %2070 = vadd.xlane.f32.xlu0 %v2069
        %v2071 = vpop.xlane.xlu0 %2070
        %v2072 = vadd.f32 %v1971, %v1973
        %2073 = vadd.xlane.f32.xlu0 %v2072
        %v2074 = vpop.xlane.xlu0 %2073
        %v2075 = vadd.f32 %v1975, %v1977
        %2076 = vadd.xlane.f32.xlu0 %v2075
        %v2077 = vpop.xlane.xlu0 %2076
        %v2078 = vadd.f32 %v1979, %v1981
        %2079 = vadd.xlane.f32.xlu0 %v2078
        %v2080 = vpop.xlane.xlu0 %2079
        %v2081 = vadd.f32 %v1983, %v1985
        %2082 = vadd.xlane.f32.xlu0 %v2081
        %v2083 = vpop.xlane.xlu0 %2082
        %v2084 = vadd.f32 %v1987, %v1989
        %2085 = vadd.xlane.f32.xlu0 %v2084
        %v2086 = vpop.xlane.xlu0 %2085
        %v2087 = vadd.f32 %v1991, %v1993
        %2088 = vadd.xlane.f32.xlu0 %v2087
        %v2089 = vpop.xlane.xlu0 %2088
        %v2090 = vrcp.pop %v1996
        %v2091 = vmul.f32 1.0, %v2090
        %v2092 = vrcp.pop %v1999
        %v2093 = vmul.f32 1.0, %v2092
        %v2094 = vrcp.pop %v2002
        %v2095 = vmul.f32 1.0, %v2094
        %v2096 = vrcp.pop %v2005
        %v2097 = vmul.f32 1.0, %v2096
        %v2098 = vrcp.pop %v2008
        %v2099 = vmul.f32 1.0, %v2098
        %v2100 = vrcp.pop %v2011
        %v2101 = vmul.f32 1.0, %v2100
        %v2102 = vrcp.pop %v2014
        %v2103 = vmul.f32 1.0, %v2102
        %v2104 = vrcp.pop %v2017
        %v2105 = vmul.f32 1.0, %v2104
        %v2106 = vrcp.pop %v2020
        %v2107 = vmul.f32 1.0, %v2106
        %v2108 = vrcp.pop %v2023
        %v2109 = vmul.f32 1.0, %v2108
        %v2110 = vrcp.pop %v2026
        %v2111 = vmul.f32 1.0, %v2110
        %v2112 = vrcp.pop %v2029
        %v2113 = vmul.f32 1.0, %v2112
        %v2114 = vrcp.pop %v2032
        %v2115 = vmul.f32 1.0, %v2114
        %v2116 = vrcp.pop %v2035
        %v2117 = vmul.f32 1.0, %v2116
        %v2118 = vrcp.pop %v2038
        %v2119 = vmul.f32 1.0, %v2118
        %v2120 = vrcp.pop %v2041
        %v2121 = vmul.f32 1.0, %v2120
        %v2122 = vrcp.pop %v2044
        %v2123 = vmul.f32 1.0, %v2122
        %v2124 = vrcp.pop %v2047
        %v2125 = vmul.f32 1.0, %v2124
        %v2126 = vrcp.pop %v2050
        %v2127 = vmul.f32 1.0, %v2126
        %v2128 = vrcp.pop %v2053
        %v2129 = vmul.f32 1.0, %v2128
        %v2130 = vrcp.pop %v2056
        %v2131 = vmul.f32 1.0, %v2130
        %v2132 = vrcp.pop %v2059
        %v2133 = vmul.f32 1.0, %v2132
        %v2134 = vrcp.pop %v2062
        %v2135 = vmul.f32 1.0, %v2134
        %v2136 = vrcp.pop %v2065
        %v2137 = vmul.f32 1.0, %v2136
        %v2138 = vrcp.pop %v2068
        %v2139 = vmul.f32 1.0, %v2138
        %v2140 = vrcp.pop %v2071
        %v2141 = vmul.f32 1.0, %v2140
        %v2142 = vrcp.pop %v2074
        %v2143 = vmul.f32 1.0, %v2142
        %v2144 = vrcp.pop %v2077
        %v2145 = vmul.f32 1.0, %v2144
        %v2146 = vrcp.pop %v2080
        %v2147 = vmul.f32 1.0, %v2146
        %v2148 = vrcp.pop %v2083
        %v2149 = vmul.f32 1.0, %v2148
        %v2150 = vrcp.pop %v2086
        %v2151 = vmul.f32 1.0, %v2150
        %v2152 = vrcp.pop %v2089
        %v2153 = vmul.f32 1.0, %v2152
        %v2154 = vpack.c.bf16 %v1871, %v1867
        %v2155 = vpack.c.bf16 %v1873, %v1869
        %v2156 = vpack.c.bf16 %v1879, %v1875
        %v2157 = vpack.c.bf16 %v1881, %v1877
        %v2158 = vpack.c.bf16 %v1887, %v1883
        %v2159 = vpack.c.bf16 %v1889, %v1885
        %v2160 = vpack.c.bf16 %v1895, %v1891
        %v2161 = vpack.c.bf16 %v1897, %v1893
        %v2162 = vpack.c.bf16 %v1903, %v1899
        %v2163 = vpack.c.bf16 %v1905, %v1901
        %v2164 = vpack.c.bf16 %v1911, %v1907
        %v2165 = vpack.c.bf16 %v1913, %v1909
        %v2166 = vpack.c.bf16 %v1919, %v1915
        %v2167 = vpack.c.bf16 %v1921, %v1917
        %v2168 = vpack.c.bf16 %v1927, %v1923
        %v2169 = vpack.c.bf16 %v1929, %v1925
        %v2170 = vpack.c.bf16 %v1935, %v1931
        %v2171 = vpack.c.bf16 %v1937, %v1933
        %v2172 = vpack.c.bf16 %v1943, %v1939
        %v2173 = vpack.c.bf16 %v1945, %v1941
        %v2174 = vpack.c.bf16 %v1951, %v1947
        %v2175 = vpack.c.bf16 %v1953, %v1949
        %v2176 = vpack.c.bf16 %v1959, %v1955
        %v2177 = vpack.c.bf16 %v1961, %v1957
        %v2178 = vpack.c.bf16 %v1967, %v1963
        %v2179 = vpack.c.bf16 %v1969, %v1965
        %v2180 = vpack.c.bf16 %v1975, %v1971
        %v2181 = vpack.c.bf16 %v1977, %v1973
        %v2182 = vpack.c.bf16 %v1983, %v1979
        %v2183 = vpack.c.bf16 %v1985, %v1981
        %v2184 = vpack.c.bf16 %v1991, %v1987
        %v2185 = vpack.c.bf16 %v1993, %v1989
        %2186 = vmatprep.subr.bf16.mxu0 0
        %2187 = vmatpush1.bf16.msra.mxu0 %v1448
        %2188 = vmatprep.subr.bf16.mxu0 0
        %2189 = vmatpush1.bf16.msra.mxu0 %v1449
        %2190 = vmatprep.subr.bf16.mxu0 0
        %2191 = vmatpush1.bf16.msra.mxu0 %v1450
        %2192 = vmatprep.subr.bf16.mxu0 0
        %2193 = vmatpush1.bf16.msra.mxu0 %v1451
        %2194 = vmatprep.subr.bf16.mxu0 0
        %2195 = vmatpush1.bf16.msra.mxu0 %v1452
        %2196 = vmatprep.subr.bf16.mxu0 0
        %2197 = vmatpush1.bf16.msra.mxu0 %v1453
        %2198 = vmatprep.subr.bf16.mxu0 0
        %2199 = vmatpush1.bf16.msra.mxu0 %v1454
        %2200 = vmatprep.subr.bf16.mxu0 0
        %2201 = vmatpush1.bf16.msra.mxu0 %v1455
        %2202 = vmatprep.subr.bf16.mxu0 0
        %2203 = vmatpush1.bf16.msra.mxu0 %v1456
        %2204 = vmatprep.subr.bf16.mxu0 0
        %2205 = vmatpush1.bf16.msra.mxu0 %v1457
        %2206 = vmatprep.subr.bf16.mxu0 0
        %2207 = vmatpush1.bf16.msra.mxu0 %v1458
        %2208 = vmatprep.subr.bf16.mxu0 0
        %2209 = vmatpush1.bf16.msra.mxu0 %v1459
        %2210 = vmatprep.subr.bf16.mxu0 0
        %2211 = vmatpush1.bf16.msra.mxu0 %v1460
        %2212 = vmatprep.subr.bf16.mxu0 0
        %2213 = vmatpush1.bf16.msra.mxu0 %v1461
        %2214 = vmatprep.subr.bf16.mxu0 0
        %2215 = vmatpush1.bf16.msra.mxu0 %v1462
        %2216 = vmatprep.subr.bf16.mxu0 0
        %2217 = vmatpush1.bf16.msra.mxu0 %v1463
        %2218 = vmatprep.mubr.bf16.mxu0 %v2155
        %2219 = vmatmul.mubr.bf16.gmra.mrb[0].mxu0 %v2154
        %v2220 = vpop.f32.mrb[0].mxu0
        %v2221 = vadd.f32 0.0, %v2220
        %v2222 = vpop.f32.mrb[0].mxu0
        %v2223 = vpop.f32.mrb[0].mxu0
        %v2224 = vadd.f32 0.0, %v2223
        %v2225 = vpop.f32.mrb[0].mxu0
        %2226 = vmatprep.mubr.bf16.mxu0 %v2157
        %2227 = vmatmul.mubr.bf16.gmra.mrb[0].mxu0 %v2156
        %v2228 = vpop.f32.mrb[0].mxu0
        %v2229 = vadd.f32 0.0, %v2228
        %v2230 = vpop.f32.mrb[0].mxu0
        %v2231 = vpop.f32.mrb[0].mxu0
        %v2232 = vadd.f32 0.0, %v2231
        %v2233 = vpop.f32.mrb[0].mxu0
        %2234 = vmatprep.mubr.bf16.mxu0 %v2159
        %2235 = vmatmul.mubr.bf16.gmra.mrb[0].mxu0 %v2158
        %v2236 = vpop.f32.mrb[0].mxu0
        %v2237 = vadd.f32 0.0, %v2236
        %v2238 = vpop.f32.mrb[0].mxu0
        %v2239 = vpop.f32.mrb[0].mxu0
        %v2240 = vadd.f32 0.0, %v2239
        %v2241 = vpop.f32.mrb[0].mxu0
        %2242 = vmatprep.mubr.bf16.mxu0 %v2161
        %2243 = vmatmul.mubr.bf16.gmra.mrb[0].mxu0 %v2160
        %v2244 = vpop.f32.mrb[0].mxu0
        %v2245 = vadd.f32 0.0, %v2244
        %v2246 = vpop.f32.mrb[0].mxu0
        %v2247 = vpop.f32.mrb[0].mxu0
        %v2248 = vadd.f32 0.0, %v2247
        %v2249 = vpop.f32.mrb[0].mxu0
        %2250 = vmatprep.mubr.bf16.mxu0 %v2163
        %2251 = vmatmul.mubr.bf16.gmra.mrb[0].mxu0 %v2162
        %v2252 = vpop.f32.mrb[0].mxu0
        %v2253 = vadd.f32 0.0, %v2252
        %v2254 = vpop.f32.mrb[0].mxu0
        %v2255 = vpop.f32.mrb[0].mxu0
        %v2256 = vadd.f32 0.0, %v2255
        %v2257 = vpop.f32.mrb[0].mxu0
        %2258 = vmatprep.mubr.bf16.mxu0 %v2165
        %2259 = vmatmul.mubr.bf16.gmra.mrb[0].mxu0 %v2164
        %v2260 = vpop.f32.mrb[0].mxu0
        %v2261 = vadd.f32 0.0, %v2260
        %v2262 = vpop.f32.mrb[0].mxu0
        %v2263 = vpop.f32.mrb[0].mxu0
        %v2264 = vadd.f32 0.0, %v2263
        %v2265 = vpop.f32.mrb[0].mxu0
        %2266 = vmatprep.mubr.bf16.mxu0 %v2167
        %2267 = vmatmul.mubr.bf16.gmra.mrb[0].mxu0 %v2166
        %v2268 = vpop.f32.mrb[0].mxu0
        %v2269 = vadd.f32 0.0, %v2268
        %v2270 = vpop.f32.mrb[0].mxu0
        %v2271 = vpop.f32.mrb[0].mxu0
        %v2272 = vadd.f32 0.0, %v2271
        %v2273 = vpop.f32.mrb[0].mxu0
        %2274 = vmatprep.mubr.bf16.mxu0 %v2169
        %2275 = vmatmul.mubr.bf16.gmra.mrb[0].mxu0 %v2168
        %v2276 = vpop.f32.mrb[0].mxu0
        %v2277 = vadd.f32 0.0, %v2276
        %v2278 = vpop.f32.mrb[0].mxu0
        %v2279 = vpop.f32.mrb[0].mxu0
        %v2280 = vadd.f32 0.0, %v2279
        %v2281 = vpop.f32.mrb[0].mxu0
        %2282 = vmatprep.mubr.bf16.mxu0 %v2171
        %2283 = vmatmul.mubr.bf16.gmra.mrb[0].mxu0 %v2170
        %v2284 = vpop.f32.mrb[0].mxu0
        %v2285 = vadd.f32 0.0, %v2284
        %v2286 = vpop.f32.mrb[0].mxu0
        %v2287 = vpop.f32.mrb[0].mxu0
        %v2288 = vadd.f32 0.0, %v2287
        %v2289 = vpop.f32.mrb[0].mxu0
        %2290 = vmatprep.mubr.bf16.mxu0 %v2173
        %2291 = vmatmul.mubr.bf16.gmra.mrb[0].mxu0 %v2172
        %v2292 = vpop.f32.mrb[0].mxu0
        %v2293 = vadd.f32 0.0, %v2292
        %v2294 = vpop.f32.mrb[0].mxu0
        %v2295 = vpop.f32.mrb[0].mxu0
        %v2296 = vadd.f32 0.0, %v2295
        %v2297 = vpop.f32.mrb[0].mxu0
        %2298 = vmatprep.mubr.bf16.mxu0 %v2175
        %2299 = vmatmul.mubr.bf16.gmra.mrb[0].mxu0 %v2174
        %v2300 = vpop.f32.mrb[0].mxu0
        %v2301 = vadd.f32 0.0, %v2300
        %v2302 = vpop.f32.mrb[0].mxu0
        %v2303 = vpop.f32.mrb[0].mxu0
        %v2304 = vadd.f32 0.0, %v2303
        %v2305 = vpop.f32.mrb[0].mxu0
        %2306 = vmatprep.mubr.bf16.mxu0 %v2177
        %2307 = vmatmul.mubr.bf16.gmra.mrb[0].mxu0 %v2176
        %v2308 = vpop.f32.mrb[0].mxu0
        %v2309 = vadd.f32 0.0, %v2308
        %v2310 = vpop.f32.mrb[0].mxu0
        %v2311 = vpop.f32.mrb[0].mxu0
        %v2312 = vadd.f32 0.0, %v2311
        %v2313 = vpop.f32.mrb[0].mxu0
        %2314 = vmatprep.mubr.bf16.mxu0 %v2179
        %2315 = vmatmul.mubr.bf16.gmra.mrb[0].mxu0 %v2178
        %v2316 = vpop.f32.mrb[0].mxu0
        %v2317 = vadd.f32 0.0, %v2316
        %v2318 = vpop.f32.mrb[0].mxu0
        %v2319 = vpop.f32.mrb[0].mxu0
        %v2320 = vadd.f32 0.0, %v2319
        %v2321 = vpop.f32.mrb[0].mxu0
        %2322 = vmatprep.mubr.bf16.mxu0 %v2181
        %2323 = vmatmul.mubr.bf16.gmra.mrb[0].mxu0 %v2180
        %v2324 = vpop.f32.mrb[0].mxu0
        %v2325 = vadd.f32 0.0, %v2324
        %v2326 = vpop.f32.mrb[0].mxu0
        %v2327 = vpop.f32.mrb[0].mxu0
        %v2328 = vadd.f32 0.0, %v2327
        %v2329 = vpop.f32.mrb[0].mxu0
        %2330 = vmatprep.mubr.bf16.mxu0 %v2183
        %2331 = vmatmul.mubr.bf16.gmra.mrb[0].mxu0 %v2182
        %v2332 = vpop.f32.mrb[0].mxu0
        %v2333 = vadd.f32 0.0, %v2332
        %v2334 = vpop.f32.mrb[0].mxu0
        %v2335 = vpop.f32.mrb[0].mxu0
        %v2336 = vadd.f32 0.0, %v2335
        %v2337 = vpop.f32.mrb[0].mxu0
        %2338 = vmatprep.mubr.bf16.mxu0 %v2185
        %2339 = vmatmul.mubr.bf16.gmra.mrb[0].mxu0 %v2184
        %v2340 = vpop.f32.mrb[0].mxu0
        %v2341 = vadd.f32 0.0, %v2340
        %v2342 = vpop.f32.mrb[0].mxu0
        %v2343 = vpop.f32.mrb[0].mxu0
        %v2344 = vadd.f32 0.0, %v2343
        %v2345 = vpop.f32.mrb[0].mxu0
        %2346 = vdwg.mxu0
        %v2347 = vmul.f32 %v2221, %v2091
        %v2348 = vmul.f32 %v2224, %v2093
        %v2349 = vmul.f32 %v2229, %v2095
        %v2350 = vmul.f32 %v2232, %v2097
        %v2351 = vmul.f32 %v2237, %v2099
        %v2352 = vmul.f32 %v2240, %v2101
        %v2353 = vmul.f32 %v2245, %v2103
        %v2354 = vmul.f32 %v2248, %v2105
        %v2355 = vmul.f32 %v2253, %v2107
        %v2356 = vmul.f32 %v2256, %v2109
        %v2357 = vmul.f32 %v2261, %v2111
        %v2358 = vmul.f32 %v2264, %v2113
        %v2359 = vmul.f32 %v2269, %v2115
        %v2360 = vmul.f32 %v2272, %v2117
        %v2361 = vmul.f32 %v2277, %v2119
        %v2362 = vmul.f32 %v2280, %v2121
        %v2363 = vmul.f32 %v2285, %v2123
        %v2364 = vmul.f32 %v2288, %v2125
        %v2365 = vmul.f32 %v2293, %v2127
        %v2366 = vmul.f32 %v2296, %v2129
        %v2367 = vmul.f32 %v2301, %v2131
        %v2368 = vmul.f32 %v2304, %v2133
        %v2369 = vmul.f32 %v2309, %v2135
        %v2370 = vmul.f32 %v2312, %v2137
        %v2371 = vmul.f32 %v2317, %v2139
        %v2372 = vmul.f32 %v2320, %v2141
        %v2373 = vmul.f32 %v2325, %v2143
        %v2374 = vmul.f32 %v2328, %v2145
        %v2375 = vmul.f32 %v2333, %v2147
        %v2376 = vmul.f32 %v2336, %v2149
        %v2377 = vmul.f32 %v2341, %v2151
        %v2378 = vmul.f32 %v2344, %v2153
        %2380 = vset.pattern.permute.xlu0 0
        %2381 = vperm.xlu0 %2380, %v372
        %v2382 = vpop.permute.xlu0 %2381
        %v2385 = vsel %vm1464, %v371, 0
        %v2388 = vsel %vm1464, %v2347, 0
        %v2391 = vsel %vm1464, %v2348, 0
        %v2394 = vsel %vm1464, %v2349, 0
        %v2397 = vsel %vm1464, %v2350, 0
        %v2400 = vsel %vm1464, %v2351, 0
        %v2403 = vsel %vm1464, %v2352, 0
        %v2406 = vsel %vm1464, %v2353, 0
        %v2409 = vsel %vm1464, %v2354, 0
        %v2412 = vsel %vm1464, %v2355, 0
        %v2415 = vsel %vm1464, %v2356, 0
        %v2418 = vsel %vm1464, %v2357, 0
        %v2421 = vsel %vm1464, %v2358, 0
        %v2424 = vsel %vm1464, %v2359, 0
        %v2427 = vsel %vm1464, %v2360, 0
        %v2430 = vsel %vm1464, %v2361, 0
        %v2433 = vsel %vm1464, %v2362, 0
        %v2436 = vsel %vm1464, %v2363, 0
        %v2439 = vsel %vm1464, %v2364, 0
        %v2442 = vsel %vm1464, %v2365, 0
        %v2445 = vsel %vm1464, %v2366, 0
        %v2448 = vsel %vm1464, %v2367, 0
        %v2451 = vsel %vm1464, %v2368, 0
        %v2454 = vsel %vm1464, %v2369, 0
        %v2457 = vsel %vm1464, %v2370, 0
        %v2460 = vsel %vm1464, %v2371, 0
        %v2463 = vsel %vm1464, %v2372, 0
        %v2466 = vsel %vm1464, %v2373, 0
        %v2469 = vsel %vm1464, %v2374, 0
        %v2472 = vsel %vm1464, %v2375, 0
        %v2475 = vsel %vm1464, %v2376, 0
        %v2478 = vsel %vm1464, %v2377, 0
        %v2481 = vsel %vm1464, %v2378, 0
        %2483 = vmatprep.subr.mxu0 0.0
        %2484 = vmatpush1.xpose.msra.mxu0 %v2388
        %2485 = vmatprep.subr.mxu0 0.0
        %2486 = vmatpush1.xpose.msra.mxu0 %v2391
        %2487 = vmatprep.subr.mxu0 0.0
        %2488 = vmatpush1.xpose.msra.mxu0 %v2394
        %2489 = vmatprep.subr.mxu0 0.0
        %2490 = vmatpush1.xpose.msra.mxu0 %v2397
        %2491 = vmatprep.subr.mxu0 0.0
        %2492 = vmatpush1.xpose.msra.mxu0 %v2400
        %2493 = vmatprep.subr.mxu0 0.0
        %2494 = vmatpush1.xpose.msra.mxu0 %v2403
        %2495 = vmatprep.subr.mxu0 0.0
        %2496 = vmatpush1.xpose.msra.mxu0 %v2406
        %2497 = vmatprep.subr.mxu0 0.0
        %2498 = vmatpush1.xpose.msra.mxu0 %v2409
        %2499 = vmatprep.subr.mxu0 0.0
        %2500 = vmatpush1.xpose.msra.mxu0 %v2412
        %2501 = vmatprep.subr.mxu0 0.0
        %2502 = vmatpush1.xpose.msra.mxu0 %v2415
        %2503 = vmatprep.subr.mxu0 0.0
        %2504 = vmatpush1.xpose.msra.mxu0 %v2418
        %2505 = vmatprep.subr.mxu0 0.0
        %2506 = vmatpush1.xpose.msra.mxu0 %v2421
        %2507 = vmatprep.subr.mxu0 0.0
        %2508 = vmatpush1.xpose.msra.mxu0 %v2424
        %2509 = vmatprep.subr.mxu0 0.0
        %2510 = vmatpush1.xpose.msra.mxu0 %v2427
        %2511 = vmatprep.subr.mxu0 0.0
        %2512 = vmatpush1.xpose.msra.mxu0 %v2430
        %2513 = vmatprep.subr.mxu0 0.0
        %2514 = vmatpush1.xpose.msra.mxu0 %v2433
        %2515 = vmatprep.subr.mxu0 0.0
        %2516 = vmatpush1.xpose.msra.mxu0 %v2436
        %2517 = vmatprep.subr.mxu0 0.0
        %2518 = vmatpush1.xpose.msra.mxu0 %v2439
        %2519 = vmatprep.subr.mxu0 0.0
        %2520 = vmatpush1.xpose.msra.mxu0 %v2442
        %2521 = vmatprep.subr.mxu0 0.0
        %2522 = vmatpush1.xpose.msra.mxu0 %v2445
        %2523 = vmatprep.subr.mxu0 0.0
        %2524 = vmatpush1.xpose.msra.mxu0 %v2448
        %2525 = vmatprep.subr.mxu0 0.0
        %2526 = vmatpush1.xpose.msra.mxu0 %v2451
        %2527 = vmatprep.subr.mxu0 0.0
        %2528 = vmatpush1.xpose.msra.mxu0 %v2454
        %2529 = vmatprep.subr.mxu0 0.0
        %2530 = vmatpush1.xpose.msra.mxu0 %v2457
        %2531 = vmatprep.subr.mxu0 0.0
        %2532 = vmatpush1.xpose.msra.mxu0 %v2460
        %2533 = vmatprep.subr.mxu0 0.0
        %2534 = vmatpush1.xpose.msra.mxu0 %v2463
        %2535 = vmatprep.subr.mxu0 0.0
        %2536 = vmatpush1.xpose.msra.mxu0 %v2466
        %2537 = vmatprep.subr.mxu0 0.0
        %2538 = vmatpush1.xpose.msra.mxu0 %v2469
        %2539 = vmatprep.subr.mxu0 0.0
        %2540 = vmatpush1.xpose.msra.mxu0 %v2472
        %2541 = vmatprep.subr.mxu0 0.0
        %2542 = vmatpush1.xpose.msra.mxu0 %v2475
        %2543 = vmatprep.subr.mxu0 0.0
        %2544 = vmatpush1.xpose.msra.mxu0 %v2478
        %2545 = vmatprep.subr.mxu0 0.0
        %2546 = vmatpush1.xpose.msra.mxu0 %v2481
        %2547 = vmatprep.mubr.f32.mxu0 0.0
        %2548 = vmatmul.mubr.f32.gmra.mrb[0].mxu0 %v2385
        %v2549 = vpop.f32.mrb[0].mxu0
        %v2550 = vadd.f32 %v2382, %v2549
        %v2551 = vpop.f32.mrb[0].mxu0
        %v2552 = vadd.f32 %v2382, %v2551
        %2553 = vdwg.mxu0
        %v2556 = vcombine.low %v2550, %v2552
        %2558 = vst [vmem:[%s257] sm:$0xff] %v2556
        %v2559 = vld [vmem:[%s266 + $0x100] sm:$0xff]
        %v2560 = vld [vmem:[%s266 + $0x108] sm:$0xff]
        %v2561 = vld [vmem:[%s266 + $0x110] sm:$0xff]
        %v2562 = vld [vmem:[%s266 + $0x118] sm:$0xff]
        %v2563 = vld [vmem:[%s266 + $0x120] sm:$0xff]
        %v2564 = vld [vmem:[%s266 + $0x128] sm:$0xff]
        %v2565 = vld [vmem:[%s266 + $0x130] sm:$0xff]
        %v2566 = vld [vmem:[%s266 + $0x138] sm:$0xff]
        %v2567 = vld [vmem:[%s266 + $0x140] sm:$0xff]
        %v2568 = vld [vmem:[%s266 + $0x148] sm:$0xff]
        %v2569 = vld [vmem:[%s266 + $0x150] sm:$0xff]
        %v2570 = vld [vmem:[%s266 + $0x158] sm:$0xff]
        %v2571 = vld [vmem:[%s266 + $0x160] sm:$0xff]
        %v2572 = vld [vmem:[%s266 + $0x168] sm:$0xff]
        %v2573 = vld [vmem:[%s266 + $0x170] sm:$0xff]
        %v2574 = vld [vmem:[%s266 + $0x178] sm:$0xff]
        %v2575 = vld [vmem:[%s266 + $0x180] sm:$0xff]
        %v2576 = vld [vmem:[%s266 + $0x188] sm:$0xff]
        %v2577 = vld [vmem:[%s266 + $0x190] sm:$0xff]
        %v2578 = vld [vmem:[%s266 + $0x198] sm:$0xff]
        %v2579 = vld [vmem:[%s266 + $0x1a0] sm:$0xff]
        %v2580 = vld [vmem:[%s266 + $0x1a8] sm:$0xff]
        %v2581 = vld [vmem:[%s266 + $0x1b0] sm:$0xff]
        %v2582 = vld [vmem:[%s266 + $0x1b8] sm:$0xff]
        %v2583 = vld [vmem:[%s266 + $0x1c0] sm:$0xff]
        %v2584 = vld [vmem:[%s266 + $0x1c8] sm:$0xff]
        %v2585 = vld [vmem:[%s266 + $0x1d0] sm:$0xff]
        %v2586 = vld [vmem:[%s266 + $0x1d8] sm:$0xff]
        %v2587 = vld [vmem:[%s266 + $0x1e0] sm:$0xff]
        %v2588 = vld [vmem:[%s266 + $0x1e8] sm:$0xff]
        %v2589 = vld [vmem:[%s266 + $0x1f0] sm:$0xff]
        %v2590 = vld [vmem:[%s266 + $0x1f8] sm:$0xff]
        %2592 = vset.pattern.permute.xlu0 0
        %2593 = vperm.xlu0 %2592, %v2559
        %v2594 = vpop.permute.xlu0 %2593
        %2597 = vset.pattern.permute.xlu0 0
        %2598 = vperm.xlu0 %2597, %v2560
        %v2599 = vpop.permute.xlu0 %2598
        %2602 = vset.pattern.permute.xlu0 0
        %2603 = vperm.xlu0 %2602, %v2561
        %v2604 = vpop.permute.xlu0 %2603
        %2607 = vset.pattern.permute.xlu0 0
        %2608 = vperm.xlu0 %2607, %v2562
        %v2609 = vpop.permute.xlu0 %2608
        %2612 = vset.pattern.permute.xlu0 0
        %2613 = vperm.xlu0 %2612, %v2563
        %v2614 = vpop.permute.xlu0 %2613
        %2617 = vset.pattern.permute.xlu0 0
        %2618 = vperm.xlu0 %2617, %v2564
        %v2619 = vpop.permute.xlu0 %2618
        %2622 = vset.pattern.permute.xlu0 0
        %2623 = vperm.xlu0 %2622, %v2565
        %v2624 = vpop.permute.xlu0 %2623
        %2627 = vset.pattern.permute.xlu0 0
        %2628 = vperm.xlu0 %2627, %v2566
        %v2629 = vpop.permute.xlu0 %2628
        %2632 = vset.pattern.permute.xlu0 0
        %2633 = vperm.xlu0 %2632, %v2567
        %v2634 = vpop.permute.xlu0 %2633
        %2637 = vset.pattern.permute.xlu0 0
        %2638 = vperm.xlu0 %2637, %v2568
        %v2639 = vpop.permute.xlu0 %2638
        %2642 = vset.pattern.permute.xlu0 0
        %2643 = vperm.xlu0 %2642, %v2569
        %v2644 = vpop.permute.xlu0 %2643
        %2647 = vset.pattern.permute.xlu0 0
        %2648 = vperm.xlu0 %2647, %v2570
        %v2649 = vpop.permute.xlu0 %2648
        %2652 = vset.pattern.permute.xlu0 0
        %2653 = vperm.xlu0 %2652, %v2571
        %v2654 = vpop.permute.xlu0 %2653
        %2657 = vset.pattern.permute.xlu0 0
        %2658 = vperm.xlu0 %2657, %v2572
        %v2659 = vpop.permute.xlu0 %2658
        %2662 = vset.pattern.permute.xlu0 0
        %2663 = vperm.xlu0 %2662, %v2573
        %v2664 = vpop.permute.xlu0 %2663
        %2667 = vset.pattern.permute.xlu0 0
        %2668 = vperm.xlu0 %2667, %v2574
        %v2669 = vpop.permute.xlu0 %2668
        %2672 = vset.pattern.permute.xlu0 0
        %2673 = vperm.xlu0 %2672, %v2575
        %v2674 = vpop.permute.xlu0 %2673
        %2677 = vset.pattern.permute.xlu0 0
        %2678 = vperm.xlu0 %2677, %v2576
        %v2679 = vpop.permute.xlu0 %2678
        %2682 = vset.pattern.permute.xlu0 0
        %2683 = vperm.xlu0 %2682, %v2577
        %v2684 = vpop.permute.xlu0 %2683
        %2687 = vset.pattern.permute.xlu0 0
        %2688 = vperm.xlu0 %2687, %v2578
        %v2689 = vpop.permute.xlu0 %2688
        %2692 = vset.pattern.permute.xlu0 0
        %2693 = vperm.xlu0 %2692, %v2579
        %v2694 = vpop.permute.xlu0 %2693
        %2697 = vset.pattern.permute.xlu0 0
        %2698 = vperm.xlu0 %2697, %v2580
        %v2699 = vpop.permute.xlu0 %2698
        %2702 = vset.pattern.permute.xlu0 0
        %2703 = vperm.xlu0 %2702, %v2581
        %v2704 = vpop.permute.xlu0 %2703
        %2707 = vset.pattern.permute.xlu0 0
        %2708 = vperm.xlu0 %2707, %v2582
        %v2709 = vpop.permute.xlu0 %2708
        %2712 = vset.pattern.permute.xlu0 0
        %2713 = vperm.xlu0 %2712, %v2583
        %v2714 = vpop.permute.xlu0 %2713
        %2717 = vset.pattern.permute.xlu0 0
        %2718 = vperm.xlu0 %2717, %v2584
        %v2719 = vpop.permute.xlu0 %2718
        %2722 = vset.pattern.permute.xlu0 0
        %2723 = vperm.xlu0 %2722, %v2585
        %v2724 = vpop.permute.xlu0 %2723
        %2727 = vset.pattern.permute.xlu0 0
        %2728 = vperm.xlu0 %2727, %v2586
        %v2729 = vpop.permute.xlu0 %2728
        %2732 = vset.pattern.permute.xlu0 0
        %2733 = vperm.xlu0 %2732, %v2587
        %v2734 = vpop.permute.xlu0 %2733
        %2737 = vset.pattern.permute.xlu0 0
        %2738 = vperm.xlu0 %2737, %v2588
        %v2739 = vpop.permute.xlu0 %2738
        %2742 = vset.pattern.permute.xlu0 0
        %2743 = vperm.xlu0 %2742, %v2589
        %v2744 = vpop.permute.xlu0 %2743
        %2747 = vset.pattern.permute.xlu0 0
        %2748 = vperm.xlu0 %2747, %v2590
        %v2749 = vpop.permute.xlu0 %2748
        %v2751 = vmul.f32 %v2594, %v569
        %v2752 = vmul.f32 %v2599, %v569
        %v2753 = vmul.f32 %v2604, %v569
        %v2754 = vmul.f32 %v2609, %v569
        %v2755 = vmul.f32 %v2614, %v569
        %v2756 = vmul.f32 %v2619, %v569
        %v2757 = vmul.f32 %v2624, %v569
        %v2758 = vmul.f32 %v2629, %v569
        %v2759 = vmul.f32 %v2634, %v569
        %v2760 = vmul.f32 %v2639, %v569
        %v2761 = vmul.f32 %v2644, %v569
        %v2762 = vmul.f32 %v2649, %v569
        %v2763 = vmul.f32 %v2654, %v569
        %v2764 = vmul.f32 %v2659, %v569
        %v2765 = vmul.f32 %v2664, %v569
        %v2766 = vmul.f32 %v2669, %v569
        %v2767 = vmul.f32 %v2674, %v569
        %v2768 = vmul.f32 %v2679, %v569
        %v2769 = vmul.f32 %v2684, %v569
        %v2770 = vmul.f32 %v2689, %v569
        %v2771 = vmul.f32 %v2694, %v569
        %v2772 = vmul.f32 %v2699, %v569
        %v2773 = vmul.f32 %v2704, %v569
        %v2774 = vmul.f32 %v2709, %v569
        %v2775 = vmul.f32 %v2714, %v569
        %v2776 = vmul.f32 %v2719, %v569
        %v2777 = vmul.f32 %v2724, %v569
        %v2778 = vmul.f32 %v2729, %v569
        %v2779 = vmul.f32 %v2734, %v569
        %v2780 = vmul.f32 %v2739, %v569
        %v2781 = vmul.f32 %v2744, %v569
        %v2782 = vmul.f32 %v2749, %v569
        %v2783 = vadd.f32 %v275, %v2751
        %v2784 = vadd.f32 %v276, %v2752
        %v2785 = vadd.f32 %v277, %v2753
        %v2786 = vadd.f32 %v278, %v2754
        %v2787 = vadd.f32 %v279, %v2755
        %v2788 = vadd.f32 %v280, %v2756
        %v2789 = vadd.f32 %v281, %v2757
        %v2790 = vadd.f32 %v282, %v2758
        %v2791 = vadd.f32 %v283, %v2759
        %v2792 = vadd.f32 %v284, %v2760
        %v2793 = vadd.f32 %v285, %v2761
        %v2794 = vadd.f32 %v286, %v2762
        %v2795 = vadd.f32 %v287, %v2763
        %v2796 = vadd.f32 %v288, %v2764
        %v2797 = vadd.f32 %v289, %v2765
        %v2798 = vadd.f32 %v290, %v2766
        %v2799 = vadd.f32 %v291, %v2767
        %v2800 = vadd.f32 %v292, %v2768
        %v2801 = vadd.f32 %v293, %v2769
        %v2802 = vadd.f32 %v294, %v2770
        %v2803 = vadd.f32 %v295, %v2771
        %v2804 = vadd.f32 %v296, %v2772
        %v2805 = vadd.f32 %v297, %v2773
        %v2806 = vadd.f32 %v298, %v2774
        %v2807 = vadd.f32 %v299, %v2775
        %v2808 = vadd.f32 %v300, %v2776
        %v2809 = vadd.f32 %v301, %v2777
        %v2810 = vadd.f32 %v302, %v2778
        %v2811 = vadd.f32 %v303, %v2779
        %v2812 = vadd.f32 %v304, %v2780
        %v2813 = vadd.f32 %v305, %v2781
        %v2814 = vadd.f32 %v306, %v2782
        %2815 = vset.pattern.permute.xlu0 1
        %2816 = vperm.xlu0 %2815, %v2559
        %v2817 = vpop.permute.xlu0 %2816
        %2819 = vset.pattern.permute.xlu0 1
        %2820 = vperm.xlu0 %2819, %v2560
        %v2821 = vpop.permute.xlu0 %2820
        %2823 = vset.pattern.permute.xlu0 1
        %2824 = vperm.xlu0 %2823, %v2561
        %v2825 = vpop.permute.xlu0 %2824
        %2827 = vset.pattern.permute.xlu0 1
        %2828 = vperm.xlu0 %2827, %v2562
        %v2829 = vpop.permute.xlu0 %2828
        %2831 = vset.pattern.permute.xlu0 1
        %2832 = vperm.xlu0 %2831, %v2563
        %v2833 = vpop.permute.xlu0 %2832
        %2835 = vset.pattern.permute.xlu0 1
        %2836 = vperm.xlu0 %2835, %v2564
        %v2837 = vpop.permute.xlu0 %2836
        %2839 = vset.pattern.permute.xlu0 1
        %2840 = vperm.xlu0 %2839, %v2565
        %v2841 = vpop.permute.xlu0 %2840
        %2843 = vset.pattern.permute.xlu0 1
        %2844 = vperm.xlu0 %2843, %v2566
        %v2845 = vpop.permute.xlu0 %2844
        %2847 = vset.pattern.permute.xlu0 1
        %2848 = vperm.xlu0 %2847, %v2567
        %v2849 = vpop.permute.xlu0 %2848
        %2851 = vset.pattern.permute.xlu0 1
        %2852 = vperm.xlu0 %2851, %v2568
        %v2853 = vpop.permute.xlu0 %2852
        %2855 = vset.pattern.permute.xlu0 1
        %2856 = vperm.xlu0 %2855, %v2569
        %v2857 = vpop.permute.xlu0 %2856
        %2859 = vset.pattern.permute.xlu0 1
        %2860 = vperm.xlu0 %2859, %v2570
        %v2861 = vpop.permute.xlu0 %2860
        %2863 = vset.pattern.permute.xlu0 1
        %2864 = vperm.xlu0 %2863, %v2571
        %v2865 = vpop.permute.xlu0 %2864
        %2867 = vset.pattern.permute.xlu0 1
        %2868 = vperm.xlu0 %2867, %v2572
        %v2869 = vpop.permute.xlu0 %2868
        %2871 = vset.pattern.permute.xlu0 1
        %2872 = vperm.xlu0 %2871, %v2573
        %v2873 = vpop.permute.xlu0 %2872
        %2875 = vset.pattern.permute.xlu0 1
        %2876 = vperm.xlu0 %2875, %v2574
        %v2877 = vpop.permute.xlu0 %2876
        %2879 = vset.pattern.permute.xlu0 1
        %2880 = vperm.xlu0 %2879, %v2575
        %v2881 = vpop.permute.xlu0 %2880
        %2883 = vset.pattern.permute.xlu0 1
        %2884 = vperm.xlu0 %2883, %v2576
        %v2885 = vpop.permute.xlu0 %2884
        %2887 = vset.pattern.permute.xlu0 1
        %2888 = vperm.xlu0 %2887, %v2577
        %v2889 = vpop.permute.xlu0 %2888
        %2891 = vset.pattern.permute.xlu0 1
        %2892 = vperm.xlu0 %2891, %v2578
        %v2893 = vpop.permute.xlu0 %2892
        %2895 = vset.pattern.permute.xlu0 1
        %2896 = vperm.xlu0 %2895, %v2579
        %v2897 = vpop.permute.xlu0 %2896
        %2899 = vset.pattern.permute.xlu0 1
        %2900 = vperm.xlu0 %2899, %v2580
        %v2901 = vpop.permute.xlu0 %2900
        %2903 = vset.pattern.permute.xlu0 1
        %2904 = vperm.xlu0 %2903, %v2581
        %v2905 = vpop.permute.xlu0 %2904
        %2907 = vset.pattern.permute.xlu0 1
        %2908 = vperm.xlu0 %2907, %v2582
        %v2909 = vpop.permute.xlu0 %2908
        %2911 = vset.pattern.permute.xlu0 1
        %2912 = vperm.xlu0 %2911, %v2583
        %v2913 = vpop.permute.xlu0 %2912
        %2915 = vset.pattern.permute.xlu0 1
        %2916 = vperm.xlu0 %2915, %v2584
        %v2917 = vpop.permute.xlu0 %2916
        %2919 = vset.pattern.permute.xlu0 1
        %2920 = vperm.xlu0 %2919, %v2585
        %v2921 = vpop.permute.xlu0 %2920
        %2923 = vset.pattern.permute.xlu0 1
        %2924 = vperm.xlu0 %2923, %v2586
        %v2925 = vpop.permute.xlu0 %2924
        %2927 = vset.pattern.permute.xlu0 1
        %2928 = vperm.xlu0 %2927, %v2587
        %v2929 = vpop.permute.xlu0 %2928
        %2931 = vset.pattern.permute.xlu0 1
        %2932 = vperm.xlu0 %2931, %v2588
        %v2933 = vpop.permute.xlu0 %2932
        %2935 = vset.pattern.permute.xlu0 1
        %2936 = vperm.xlu0 %2935, %v2589
        %v2937 = vpop.permute.xlu0 %2936
        %2939 = vset.pattern.permute.xlu0 1
        %2940 = vperm.xlu0 %2939, %v2590
        %v2941 = vpop.permute.xlu0 %2940
        %v2943 = vmul.f32 %v2817, %v765
        %v2944 = vmul.f32 %v2821, %v765
        %v2945 = vmul.f32 %v2825, %v765
        %v2946 = vmul.f32 %v2829, %v765
        %v2947 = vmul.f32 %v2833, %v765
        %v2948 = vmul.f32 %v2837, %v765
        %v2949 = vmul.f32 %v2841, %v765
        %v2950 = vmul.f32 %v2845, %v765
        %v2951 = vmul.f32 %v2849, %v765
        %v2952 = vmul.f32 %v2853, %v765
        %v2953 = vmul.f32 %v2857, %v765
        %v2954 = vmul.f32 %v2861, %v765
        %v2955 = vmul.f32 %v2865, %v765
        %v2956 = vmul.f32 %v2869, %v765
        %v2957 = vmul.f32 %v2873, %v765
        %v2958 = vmul.f32 %v2877, %v765
        %v2959 = vmul.f32 %v2881, %v765
        %v2960 = vmul.f32 %v2885, %v765
        %v2961 = vmul.f32 %v2889, %v765
        %v2962 = vmul.f32 %v2893, %v765
        %v2963 = vmul.f32 %v2897, %v765
        %v2964 = vmul.f32 %v2901, %v765
        %v2965 = vmul.f32 %v2905, %v765
        %v2966 = vmul.f32 %v2909, %v765
        %v2967 = vmul.f32 %v2913, %v765
        %v2968 = vmul.f32 %v2917, %v765
        %v2969 = vmul.f32 %v2921, %v765
        %v2970 = vmul.f32 %v2925, %v765
        %v2971 = vmul.f32 %v2929, %v765
        %v2972 = vmul.f32 %v2933, %v765
        %v2973 = vmul.f32 %v2937, %v765
        %v2974 = vmul.f32 %v2941, %v765
        %v2975 = vadd.f32 %v2783, %v2943
        %v2976 = vadd.f32 %v2784, %v2944
        %v2977 = vadd.f32 %v2785, %v2945
        %v2978 = vadd.f32 %v2786, %v2946
        %v2979 = vadd.f32 %v2787, %v2947
        %v2980 = vadd.f32 %v2788, %v2948
        %v2981 = vadd.f32 %v2789, %v2949
        %v2982 = vadd.f32 %v2790, %v2950
        %v2983 = vadd.f32 %v2791, %v2951
        %v2984 = vadd.f32 %v2792, %v2952
        %v2985 = vadd.f32 %v2793, %v2953
        %v2986 = vadd.f32 %v2794, %v2954
        %v2987 = vadd.f32 %v2795, %v2955
        %v2988 = vadd.f32 %v2796, %v2956
        %v2989 = vadd.f32 %v2797, %v2957
        %v2990 = vadd.f32 %v2798, %v2958
        %v2991 = vadd.f32 %v2799, %v2959
        %v2992 = vadd.f32 %v2800, %v2960
        %v2993 = vadd.f32 %v2801, %v2961
        %v2994 = vadd.f32 %v2802, %v2962
        %v2995 = vadd.f32 %v2803, %v2963
        %v2996 = vadd.f32 %v2804, %v2964
        %v2997 = vadd.f32 %v2805, %v2965
        %v2998 = vadd.f32 %v2806, %v2966
        %v2999 = vadd.f32 %v2807, %v2967
        %v3000 = vadd.f32 %v2808, %v2968
        %v3001 = vadd.f32 %v2809, %v2969
        %v3002 = vadd.f32 %v2810, %v2970
        %v3003 = vadd.f32 %v2811, %v2971
        %v3004 = vadd.f32 %v2812, %v2972
        %v3005 = vadd.f32 %v2813, %v2973
        %v3006 = vadd.f32 %v2814, %v2974
        %3007 = vset.pattern.permute.xlu0 2
        %3008 = vperm.xlu0 %3007, %v2559
        %v3009 = vpop.permute.xlu0 %3008
        %3011 = vset.pattern.permute.xlu0 2
        %3012 = vperm.xlu0 %3011, %v2560
        %v3013 = vpop.permute.xlu0 %3012
        %3015 = vset.pattern.permute.xlu0 2
        %3016 = vperm.xlu0 %3015, %v2561
        %v3017 = vpop.permute.xlu0 %3016
        %3019 = vset.pattern.permute.xlu0 2
        %3020 = vperm.xlu0 %3019, %v2562
        %v3021 = vpop.permute.xlu0 %3020
        %3023 = vset.pattern.permute.xlu0 2
        %3024 = vperm.xlu0 %3023, %v2563
        %v3025 = vpop.permute.xlu0 %3024
        %3027 = vset.pattern.permute.xlu0 2
        %3028 = vperm.xlu0 %3027, %v2564
        %v3029 = vpop.permute.xlu0 %3028
        %3031 = vset.pattern.permute.xlu0 2
        %3032 = vperm.xlu0 %3031, %v2565
        %v3033 = vpop.permute.xlu0 %3032
        %3035 = vset.pattern.permute.xlu0 2
        %3036 = vperm.xlu0 %3035, %v2566
        %v3037 = vpop.permute.xlu0 %3036
        %3039 = vset.pattern.permute.xlu0 2
        %3040 = vperm.xlu0 %3039, %v2567
        %v3041 = vpop.permute.xlu0 %3040
        %3043 = vset.pattern.permute.xlu0 2
        %3044 = vperm.xlu0 %3043, %v2568
        %v3045 = vpop.permute.xlu0 %3044
        %3047 = vset.pattern.permute.xlu0 2
        %3048 = vperm.xlu0 %3047, %v2569
        %v3049 = vpop.permute.xlu0 %3048
        %3051 = vset.pattern.permute.xlu0 2
        %3052 = vperm.xlu0 %3051, %v2570
        %v3053 = vpop.permute.xlu0 %3052
        %3055 = vset.pattern.permute.xlu0 2
        %3056 = vperm.xlu0 %3055, %v2571
        %v3057 = vpop.permute.xlu0 %3056
        %3059 = vset.pattern.permute.xlu0 2
        %3060 = vperm.xlu0 %3059, %v2572
        %v3061 = vpop.permute.xlu0 %3060
        %3063 = vset.pattern.permute.xlu0 2
        %3064 = vperm.xlu0 %3063, %v2573
        %v3065 = vpop.permute.xlu0 %3064
        %3067 = vset.pattern.permute.xlu0 2
        %3068 = vperm.xlu0 %3067, %v2574
        %v3069 = vpop.permute.xlu0 %3068
        %3071 = vset.pattern.permute.xlu0 2
        %3072 = vperm.xlu0 %3071, %v2575
        %v3073 = vpop.permute.xlu0 %3072
        %3075 = vset.pattern.permute.xlu0 2
        %3076 = vperm.xlu0 %3075, %v2576
        %v3077 = vpop.permute.xlu0 %3076
        %3079 = vset.pattern.permute.xlu0 2
        %3080 = vperm.xlu0 %3079, %v2577
        %v3081 = vpop.permute.xlu0 %3080
        %3083 = vset.pattern.permute.xlu0 2
        %3084 = vperm.xlu0 %3083, %v2578
        %v3085 = vpop.permute.xlu0 %3084
        %3087 = vset.pattern.permute.xlu0 2
        %3088 = vperm.xlu0 %3087, %v2579
        %v3089 = vpop.permute.xlu0 %3088
        %3091 = vset.pattern.permute.xlu0 2
        %3092 = vperm.xlu0 %3091, %v2580
        %v3093 = vpop.permute.xlu0 %3092
        %3095 = vset.pattern.permute.xlu0 2
        %3096 = vperm.xlu0 %3095, %v2581
        %v3097 = vpop.permute.xlu0 %3096
        %3099 = vset.pattern.permute.xlu0 2
        %3100 = vperm.xlu0 %3099, %v2582
        %v3101 = vpop.permute.xlu0 %3100
        %3103 = vset.pattern.permute.xlu0 2
        %3104 = vperm.xlu0 %3103, %v2583
        %v3105 = vpop.permute.xlu0 %3104
        %3107 = vset.pattern.permute.xlu0 2
        %3108 = vperm.xlu0 %3107, %v2584
        %v3109 = vpop.permute.xlu0 %3108
        %3111 = vset.pattern.permute.xlu0 2
        %3112 = vperm.xlu0 %3111, %v2585
        %v3113 = vpop.permute.xlu0 %3112
        %3115 = vset.pattern.permute.xlu0 2
        %3116 = vperm.xlu0 %3115, %v2586
        %v3117 = vpop.permute.xlu0 %3116
        %3119 = vset.pattern.permute.xlu0 2
        %3120 = vperm.xlu0 %3119, %v2587
        %v3121 = vpop.permute.xlu0 %3120
        %3123 = vset.pattern.permute.xlu0 2
        %3124 = vperm.xlu0 %3123, %v2588
        %v3125 = vpop.permute.xlu0 %3124
        %3127 = vset.pattern.permute.xlu0 2
        %3128 = vperm.xlu0 %3127, %v2589
        %v3129 = vpop.permute.xlu0 %3128
        %3131 = vset.pattern.permute.xlu0 2
        %3132 = vperm.xlu0 %3131, %v2590
        %v3133 = vpop.permute.xlu0 %3132
        %v3135 = vmul.f32 %v3009, %v961
        %v3136 = vmul.f32 %v3013, %v961
        %v3137 = vmul.f32 %v3017, %v961
        %v3138 = vmul.f32 %v3021, %v961
        %v3139 = vmul.f32 %v3025, %v961
        %v3140 = vmul.f32 %v3029, %v961
        %v3141 = vmul.f32 %v3033, %v961
        %v3142 = vmul.f32 %v3037, %v961
        %v3143 = vmul.f32 %v3041, %v961
        %v3144 = vmul.f32 %v3045, %v961
        %v3145 = vmul.f32 %v3049, %v961
        %v3146 = vmul.f32 %v3053, %v961
        %v3147 = vmul.f32 %v3057, %v961
        %v3148 = vmul.f32 %v3061, %v961
        %v3149 = vmul.f32 %v3065, %v961
        %v3150 = vmul.f32 %v3069, %v961
        %v3151 = vmul.f32 %v3073, %v961
        %v3152 = vmul.f32 %v3077, %v961
        %v3153 = vmul.f32 %v3081, %v961
        %v3154 = vmul.f32 %v3085, %v961
        %v3155 = vmul.f32 %v3089, %v961
        %v3156 = vmul.f32 %v3093, %v961
        %v3157 = vmul.f32 %v3097, %v961
        %v3158 = vmul.f32 %v3101, %v961
        %v3159 = vmul.f32 %v3105, %v961
        %v3160 = vmul.f32 %v3109, %v961
        %v3161 = vmul.f32 %v3113, %v961
        %v3162 = vmul.f32 %v3117, %v961
        %v3163 = vmul.f32 %v3121, %v961
        %v3164 = vmul.f32 %v3125, %v961
        %v3165 = vmul.f32 %v3129, %v961
        %v3166 = vmul.f32 %v3133, %v961
        %v3167 = vadd.f32 %v2975, %v3135
        %v3168 = vadd.f32 %v2976, %v3136
        %v3169 = vadd.f32 %v2977, %v3137
        %v3170 = vadd.f32 %v2978, %v3138
        %v3171 = vadd.f32 %v2979, %v3139
        %v3172 = vadd.f32 %v2980, %v3140
        %v3173 = vadd.f32 %v2981, %v3141
        %v3174 = vadd.f32 %v2982, %v3142
        %v3175 = vadd.f32 %v2983, %v3143
        %v3176 = vadd.f32 %v2984, %v3144
        %v3177 = vadd.f32 %v2985, %v3145
        %v3178 = vadd.f32 %v2986, %v3146
        %v3179 = vadd.f32 %v2987, %v3147
        %v3180 = vadd.f32 %v2988, %v3148
        %v3181 = vadd.f32 %v2989, %v3149
        %v3182 = vadd.f32 %v2990, %v3150
        %v3183 = vadd.f32 %v2991, %v3151
        %v3184 = vadd.f32 %v2992, %v3152
        %v3185 = vadd.f32 %v2993, %v3153
        %v3186 = vadd.f32 %v2994, %v3154
        %v3187 = vadd.f32 %v2995, %v3155
        %v3188 = vadd.f32 %v2996, %v3156
        %v3189 = vadd.f32 %v2997, %v3157
        %v3190 = vadd.f32 %v2998, %v3158
        %v3191 = vadd.f32 %v2999, %v3159
        %v3192 = vadd.f32 %v3000, %v3160
        %v3193 = vadd.f32 %v3001, %v3161
        %v3194 = vadd.f32 %v3002, %v3162
        %v3195 = vadd.f32 %v3003, %v3163
        %v3196 = vadd.f32 %v3004, %v3164
        %v3197 = vadd.f32 %v3005, %v3165
        %v3198 = vadd.f32 %v3006, %v3166
        %3199 = vset.pattern.permute.xlu0 3
        %3200 = vperm.xlu0 %3199, %v2559
        %v3201 = vpop.permute.xlu0 %3200
        %3203 = vset.pattern.permute.xlu0 3
        %3204 = vperm.xlu0 %3203, %v2560
        %v3205 = vpop.permute.xlu0 %3204
        %3207 = vset.pattern.permute.xlu0 3
        %3208 = vperm.xlu0 %3207, %v2561
        %v3209 = vpop.permute.xlu0 %3208
        %3211 = vset.pattern.permute.xlu0 3
        %3212 = vperm.xlu0 %3211, %v2562
        %v3213 = vpop.permute.xlu0 %3212
        %3215 = vset.pattern.permute.xlu0 3
        %3216 = vperm.xlu0 %3215, %v2563
        %v3217 = vpop.permute.xlu0 %3216
        %3219 = vset.pattern.permute.xlu0 3
        %3220 = vperm.xlu0 %3219, %v2564
        %v3221 = vpop.permute.xlu0 %3220
        %3223 = vset.pattern.permute.xlu0 3
        %3224 = vperm.xlu0 %3223, %v2565
        %v3225 = vpop.permute.xlu0 %3224
        %3227 = vset.pattern.permute.xlu0 3
        %3228 = vperm.xlu0 %3227, %v2566
        %v3229 = vpop.permute.xlu0 %3228
        %3231 = vset.pattern.permute.xlu0 3
        %3232 = vperm.xlu0 %3231, %v2567
        %v3233 = vpop.permute.xlu0 %3232
        %3235 = vset.pattern.permute.xlu0 3
        %3236 = vperm.xlu0 %3235, %v2568
        %v3237 = vpop.permute.xlu0 %3236
        %3239 = vset.pattern.permute.xlu0 3
        %3240 = vperm.xlu0 %3239, %v2569
        %v3241 = vpop.permute.xlu0 %3240
        %3243 = vset.pattern.permute.xlu0 3
        %3244 = vperm.xlu0 %3243, %v2570
        %v3245 = vpop.permute.xlu0 %3244
        %3247 = vset.pattern.permute.xlu0 3
        %3248 = vperm.xlu0 %3247, %v2571
        %v3249 = vpop.permute.xlu0 %3248
        %3251 = vset.pattern.permute.xlu0 3
        %3252 = vperm.xlu0 %3251, %v2572
        %v3253 = vpop.permute.xlu0 %3252
        %3255 = vset.pattern.permute.xlu0 3
        %3256 = vperm.xlu0 %3255, %v2573
        %v3257 = vpop.permute.xlu0 %3256
        %3259 = vset.pattern.permute.xlu0 3
        %3260 = vperm.xlu0 %3259, %v2574
        %v3261 = vpop.permute.xlu0 %3260
        %3263 = vset.pattern.permute.xlu0 3
        %3264 = vperm.xlu0 %3263, %v2575
        %v3265 = vpop.permute.xlu0 %3264
        %3267 = vset.pattern.permute.xlu0 3
        %3268 = vperm.xlu0 %3267, %v2576
        %v3269 = vpop.permute.xlu0 %3268
        %3271 = vset.pattern.permute.xlu0 3
        %3272 = vperm.xlu0 %3271, %v2577
        %v3273 = vpop.permute.xlu0 %3272
        %3275 = vset.pattern.permute.xlu0 3
        %3276 = vperm.xlu0 %3275, %v2578
        %v3277 = vpop.permute.xlu0 %3276
        %3279 = vset.pattern.permute.xlu0 3
        %3280 = vperm.xlu0 %3279, %v2579
        %v3281 = vpop.permute.xlu0 %3280
        %3283 = vset.pattern.permute.xlu0 3
        %3284 = vperm.xlu0 %3283, %v2580
        %v3285 = vpop.permute.xlu0 %3284
        %3287 = vset.pattern.permute.xlu0 3
        %3288 = vperm.xlu0 %3287, %v2581
        %v3289 = vpop.permute.xlu0 %3288
        %3291 = vset.pattern.permute.xlu0 3
        %3292 = vperm.xlu0 %3291, %v2582
        %v3293 = vpop.permute.xlu0 %3292
        %3295 = vset.pattern.permute.xlu0 3
        %3296 = vperm.xlu0 %3295, %v2583
        %v3297 = vpop.permute.xlu0 %3296
        %3299 = vset.pattern.permute.xlu0 3
        %3300 = vperm.xlu0 %3299, %v2584
        %v3301 = vpop.permute.xlu0 %3300
        %3303 = vset.pattern.permute.xlu0 3
        %3304 = vperm.xlu0 %3303, %v2585
        %v3305 = vpop.permute.xlu0 %3304
        %3307 = vset.pattern.permute.xlu0 3
        %3308 = vperm.xlu0 %3307, %v2586
        %v3309 = vpop.permute.xlu0 %3308
        %3311 = vset.pattern.permute.xlu0 3
        %3312 = vperm.xlu0 %3311, %v2587
        %v3313 = vpop.permute.xlu0 %3312
        %3315 = vset.pattern.permute.xlu0 3
        %3316 = vperm.xlu0 %3315, %v2588
        %v3317 = vpop.permute.xlu0 %3316
        %3319 = vset.pattern.permute.xlu0 3
        %3320 = vperm.xlu0 %3319, %v2589
        %v3321 = vpop.permute.xlu0 %3320
        %3323 = vset.pattern.permute.xlu0 3
        %3324 = vperm.xlu0 %3323, %v2590
        %v3325 = vpop.permute.xlu0 %3324
        %v3327 = vmul.f32 %v3201, %v1157
        %v3328 = vmul.f32 %v3205, %v1157
        %v3329 = vmul.f32 %v3209, %v1157
        %v3330 = vmul.f32 %v3213, %v1157
        %v3331 = vmul.f32 %v3217, %v1157
        %v3332 = vmul.f32 %v3221, %v1157
        %v3333 = vmul.f32 %v3225, %v1157
        %v3334 = vmul.f32 %v3229, %v1157
        %v3335 = vmul.f32 %v3233, %v1157
        %v3336 = vmul.f32 %v3237, %v1157
        %v3337 = vmul.f32 %v3241, %v1157
        %v3338 = vmul.f32 %v3245, %v1157
        %v3339 = vmul.f32 %v3249, %v1157
        %v3340 = vmul.f32 %v3253, %v1157
        %v3341 = vmul.f32 %v3257, %v1157
        %v3342 = vmul.f32 %v3261, %v1157
        %v3343 = vmul.f32 %v3265, %v1157
        %v3344 = vmul.f32 %v3269, %v1157
        %v3345 = vmul.f32 %v3273, %v1157
        %v3346 = vmul.f32 %v3277, %v1157
        %v3347 = vmul.f32 %v3281, %v1157
        %v3348 = vmul.f32 %v3285, %v1157
        %v3349 = vmul.f32 %v3289, %v1157
        %v3350 = vmul.f32 %v3293, %v1157
        %v3351 = vmul.f32 %v3297, %v1157
        %v3352 = vmul.f32 %v3301, %v1157
        %v3353 = vmul.f32 %v3305, %v1157
        %v3354 = vmul.f32 %v3309, %v1157
        %v3355 = vmul.f32 %v3313, %v1157
        %v3356 = vmul.f32 %v3317, %v1157
        %v3357 = vmul.f32 %v3321, %v1157
        %v3358 = vmul.f32 %v3325, %v1157
        %v3359 = vadd.f32 %v3167, %v3327
        %v3360 = vadd.f32 %v3168, %v3328
        %v3361 = vadd.f32 %v3169, %v3329
        %v3362 = vadd.f32 %v3170, %v3330
        %v3363 = vadd.f32 %v3171, %v3331
        %v3364 = vadd.f32 %v3172, %v3332
        %v3365 = vadd.f32 %v3173, %v3333
        %v3366 = vadd.f32 %v3174, %v3334
        %v3367 = vadd.f32 %v3175, %v3335
        %v3368 = vadd.f32 %v3176, %v3336
        %v3369 = vadd.f32 %v3177, %v3337
        %v3370 = vadd.f32 %v3178, %v3338
        %v3371 = vadd.f32 %v3179, %v3339
        %v3372 = vadd.f32 %v3180, %v3340
        %v3373 = vadd.f32 %v3181, %v3341
        %v3374 = vadd.f32 %v3182, %v3342
        %v3375 = vadd.f32 %v3183, %v3343
        %v3376 = vadd.f32 %v3184, %v3344
        %v3377 = vadd.f32 %v3185, %v3345
        %v3378 = vadd.f32 %v3186, %v3346
        %v3379 = vadd.f32 %v3187, %v3347
        %v3380 = vadd.f32 %v3188, %v3348
        %v3381 = vadd.f32 %v3189, %v3349
        %v3382 = vadd.f32 %v3190, %v3350
        %v3383 = vadd.f32 %v3191, %v3351
        %v3384 = vadd.f32 %v3192, %v3352
        %v3385 = vadd.f32 %v3193, %v3353
        %v3386 = vadd.f32 %v3194, %v3354
        %v3387 = vadd.f32 %v3195, %v3355
        %v3388 = vadd.f32 %v3196, %v3356
        %v3389 = vadd.f32 %v3197, %v3357
        %v3390 = vadd.f32 %v3198, %v3358
        %v3391 = vmax.f32 %v3359, 0.0
        %v3392 = vmax.f32 %v3360, 0.0
        %v3393 = vmax.f32 %v3361, 0.0
        %v3394 = vmax.f32 %v3362, 0.0
        %v3395 = vmax.f32 %v3363, 0.0
        %v3396 = vmax.f32 %v3364, 0.0
        %v3397 = vmax.f32 %v3365, 0.0
        %v3398 = vmax.f32 %v3366, 0.0
        %v3399 = vmax.f32 %v3367, 0.0
        %v3400 = vmax.f32 %v3368, 0.0
        %v3401 = vmax.f32 %v3369, 0.0
        %v3402 = vmax.f32 %v3370, 0.0
        %v3403 = vmax.f32 %v3371, 0.0
        %v3404 = vmax.f32 %v3372, 0.0
        %v3405 = vmax.f32 %v3373, 0.0
        %v3406 = vmax.f32 %v3374, 0.0
        %v3407 = vmax.f32 %v3375, 0.0
        %v3408 = vmax.f32 %v3376, 0.0
        %v3409 = vmax.f32 %v3377, 0.0
        %v3410 = vmax.f32 %v3378, 0.0
        %v3411 = vmax.f32 %v3379, 0.0
        %v3412 = vmax.f32 %v3380, 0.0
        %v3413 = vmax.f32 %v3381, 0.0
        %v3414 = vmax.f32 %v3382, 0.0
        %v3415 = vmax.f32 %v3383, 0.0
        %v3416 = vmax.f32 %v3384, 0.0
        %v3417 = vmax.f32 %v3385, 0.0
        %v3418 = vmax.f32 %v3386, 0.0
        %v3419 = vmax.f32 %v3387, 0.0
        %v3420 = vmax.f32 %v3388, 0.0
        %v3421 = vmax.f32 %v3389, 0.0
        %v3422 = vmax.f32 %v3390, 0.0
        %s3423 = sadd.s32 %s373, 256
        %v3424 = vstv %s3423
        %v3425 = vadd.s32 %v3424, %v1255
        %v3426 = vadd.s32 %v3424, %v1256
        %v3427 = vadd.s32 %v3424, %v1257
        %v3428 = vadd.s32 %v3424, %v1258
        %v3429 = vadd.s32 %v3424, %v1259
        %v3430 = vadd.s32 %v3424, %v1260
        %v3431 = vadd.s32 %v3424, %v1261
        %v3432 = vadd.s32 %v3424, %v1262
        %v3433 = vadd.s32 %v3424, %v1263
        %v3434 = vadd.s32 %v3424, %v1264
        %v3435 = vadd.s32 %v3424, %v1265
        %v3436 = vadd.s32 %v3424, %v1266
        %v3437 = vadd.s32 %v3424, %v1267
        %v3438 = vadd.s32 %v3424, %v1268
        %v3439 = vadd.s32 %v3424, %v1269
        %v3440 = vadd.s32 %v3424, %v1270
        %v3441 = vadd.s32 %v3424, %v1271
        %v3442 = vadd.s32 %v3424, %v1272
        %v3443 = vadd.s32 %v3424, %v1273
        %v3444 = vadd.s32 %v3424, %v1274
        %v3445 = vadd.s32 %v3424, %v1275
        %v3446 = vadd.s32 %v3424, %v1276
        %v3447 = vadd.s32 %v3424, %v1277
        %v3448 = vadd.s32 %v3424, %v1278
        %v3449 = vadd.s32 %v3424, %v1279
        %v3450 = vadd.s32 %v3424, %v1280
        %v3451 = vadd.s32 %v3424, %v1281
        %v3452 = vadd.s32 %v3424, %v1282
        %v3453 = vadd.s32 %v3424, %v1283
        %v3454 = vadd.s32 %v3424, %v1284
        %v3455 = vadd.s32 %v3424, %v1285
        %v3456 = vadd.s32 %v3424, %v1286
        %vm3457 = vcmp.lt.s32.totalorder %v3425, 560
        %vm3458 = vcmp.lt.s32.totalorder %v3426, 560
        %vm3459 = vcmp.lt.s32.totalorder %v3427, 560
        %vm3460 = vcmp.lt.s32.totalorder %v3428, 560
        %vm3461 = vcmp.lt.s32.totalorder %v3429, 560
        %vm3462 = vcmp.lt.s32.totalorder %v3430, 560
        %vm3463 = vcmp.lt.s32.totalorder %v3431, 560
        %vm3464 = vcmp.lt.s32.totalorder %v3432, 560
        %vm3465 = vcmp.lt.s32.totalorder %v3433, 560
        %vm3466 = vcmp.lt.s32.totalorder %v3434, 560
        %vm3467 = vcmp.lt.s32.totalorder %v3435, 560
        %vm3468 = vcmp.lt.s32.totalorder %v3436, 560
        %vm3469 = vcmp.lt.s32.totalorder %v3437, 560
        %vm3470 = vcmp.lt.s32.totalorder %v3438, 560
        %vm3471 = vcmp.lt.s32.totalorder %v3439, 560
        %vm3472 = vcmp.lt.s32.totalorder %v3440, 560
        %vm3473 = vcmp.lt.s32.totalorder %v3441, 560
        %vm3474 = vcmp.lt.s32.totalorder %v3442, 560
        %vm3475 = vcmp.lt.s32.totalorder %v3443, 560
        %vm3476 = vcmp.lt.s32.totalorder %v3444, 560
        %vm3477 = vcmp.lt.s32.totalorder %v3445, 560
        %vm3478 = vcmp.lt.s32.totalorder %v3446, 560
        %vm3479 = vcmp.lt.s32.totalorder %v3447, 560
        %vm3480 = vcmp.lt.s32.totalorder %v3448, 560
        %vm3481 = vcmp.lt.s32.totalorder %v3449, 560
        %vm3482 = vcmp.lt.s32.totalorder %v3450, 560
        %vm3483 = vcmp.lt.s32.totalorder %v3451, 560
        %vm3484 = vcmp.lt.s32.totalorder %v3452, 560
        %vm3485 = vcmp.lt.s32.totalorder %v3453, 560
        %vm3486 = vcmp.lt.s32.totalorder %v3454, 560
        %vm3487 = vcmp.lt.s32.totalorder %v3455, 560
        %vm3488 = vcmp.lt.s32.totalorder %v3456, 560
        %v3489 = vsel %vm3457, 1, 0
        %v3490 = vsel %vm3458, 1, 0
        %v3491 = vsel %vm3459, 1, 0
        %v3492 = vsel %vm3460, 1, 0
        %v3493 = vsel %vm3461, 1, 0
        %v3494 = vsel %vm3462, 1, 0
        %v3495 = vsel %vm3463, 1, 0
        %v3496 = vsel %vm3464, 1, 0
        %v3497 = vsel %vm3465, 1, 0
        %v3498 = vsel %vm3466, 1, 0
        %v3499 = vsel %vm3467, 1, 0
        %v3500 = vsel %vm3468, 1, 0
        %v3501 = vsel %vm3469, 1, 0
        %v3502 = vsel %vm3470, 1, 0
        %v3503 = vsel %vm3471, 1, 0
        %v3504 = vsel %vm3472, 1, 0
        %v3505 = vsel %vm3473, 1, 0
        %v3506 = vsel %vm3474, 1, 0
        %v3507 = vsel %vm3475, 1, 0
        %v3508 = vsel %vm3476, 1, 0
        %v3509 = vsel %vm3477, 1, 0
        %v3510 = vsel %vm3478, 1, 0
        %v3511 = vsel %vm3479, 1, 0
        %v3512 = vsel %vm3480, 1, 0
        %v3513 = vsel %vm3481, 1, 0
        %v3514 = vsel %vm3482, 1, 0
        %v3515 = vsel %vm3483, 1, 0
        %v3516 = vsel %vm3484, 1, 0
        %v3517 = vsel %vm3485, 1, 0
        %v3518 = vsel %vm3486, 1, 0
        %v3519 = vsel %vm3487, 1, 0
        %v3520 = vsel %vm3488, 1, 0
        %vm3521 = vcmp.eq.s32.totalorder %v3489, 1
        %vm3522 = vcmp.eq.s32.totalorder %v3490, 1
        %vm3523 = vcmp.eq.s32.totalorder %v3491, 1
        %vm3524 = vcmp.eq.s32.totalorder %v3492, 1
        %vm3525 = vcmp.eq.s32.totalorder %v3493, 1
        %vm3526 = vcmp.eq.s32.totalorder %v3494, 1
        %vm3527 = vcmp.eq.s32.totalorder %v3495, 1
        %vm3528 = vcmp.eq.s32.totalorder %v3496, 1
        %vm3529 = vcmp.eq.s32.totalorder %v3497, 1
        %vm3530 = vcmp.eq.s32.totalorder %v3498, 1
        %vm3531 = vcmp.eq.s32.totalorder %v3499, 1
        %vm3532 = vcmp.eq.s32.totalorder %v3500, 1
        %vm3533 = vcmp.eq.s32.totalorder %v3501, 1
        %vm3534 = vcmp.eq.s32.totalorder %v3502, 1
        %vm3535 = vcmp.eq.s32.totalorder %v3503, 1
        %vm3536 = vcmp.eq.s32.totalorder %v3504, 1
        %vm3537 = vcmp.eq.s32.totalorder %v3505, 1
        %vm3538 = vcmp.eq.s32.totalorder %v3506, 1
        %vm3539 = vcmp.eq.s32.totalorder %v3507, 1
        %vm3540 = vcmp.eq.s32.totalorder %v3508, 1
        %vm3541 = vcmp.eq.s32.totalorder %v3509, 1
        %vm3542 = vcmp.eq.s32.totalorder %v3510, 1
        %vm3543 = vcmp.eq.s32.totalorder %v3511, 1
        %vm3544 = vcmp.eq.s32.totalorder %v3512, 1
        %vm3545 = vcmp.eq.s32.totalorder %v3513, 1
        %vm3546 = vcmp.eq.s32.totalorder %v3514, 1
        %vm3547 = vcmp.eq.s32.totalorder %v3515, 1
        %vm3548 = vcmp.eq.s32.totalorder %v3516, 1
        %vm3549 = vcmp.eq.s32.totalorder %v3517, 1
        %vm3550 = vcmp.eq.s32.totalorder %v3518, 1
        %vm3551 = vcmp.eq.s32.totalorder %v3519, 1
        %vm3552 = vcmp.eq.s32.totalorder %v3520, 1
        %v3553 = vsel %vm3521, %v3391, 0.0
        %v3554 = vsel %vm3522, %v3392, 0.0
        %v3555 = vsel %vm3523, %v3393, 0.0
        %v3556 = vsel %vm3524, %v3394, 0.0
        %v3557 = vsel %vm3525, %v3395, 0.0
        %v3558 = vsel %vm3526, %v3396, 0.0
        %v3559 = vsel %vm3527, %v3397, 0.0
        %v3560 = vsel %vm3528, %v3398, 0.0
        %v3561 = vsel %vm3529, %v3399, 0.0
        %v3562 = vsel %vm3530, %v3400, 0.0
        %v3563 = vsel %vm3531, %v3401, 0.0
        %v3564 = vsel %vm3532, %v3402, 0.0
        %v3565 = vsel %vm3533, %v3403, 0.0
        %v3566 = vsel %vm3534, %v3404, 0.0
        %v3567 = vsel %vm3535, %v3405, 0.0
        %v3568 = vsel %vm3536, %v3406, 0.0
        %v3569 = vsel %vm3537, %v3407, 0.0
        %v3570 = vsel %vm3538, %v3408, 0.0
        %v3571 = vsel %vm3539, %v3409, 0.0
        %v3572 = vsel %vm3540, %v3410, 0.0
        %v3573 = vsel %vm3541, %v3411, 0.0
        %v3574 = vsel %vm3542, %v3412, 0.0
        %v3575 = vsel %vm3543, %v3413, 0.0
        %v3576 = vsel %vm3544, %v3414, 0.0
        %v3577 = vsel %vm3545, %v3415, 0.0
        %v3578 = vsel %vm3546, %v3416, 0.0
        %v3579 = vsel %vm3547, %v3417, 0.0
        %v3580 = vsel %vm3548, %v3418, 0.0
        %v3581 = vsel %vm3549, %v3419, 0.0
        %v3582 = vsel %vm3550, %v3420, 0.0
        %v3583 = vsel %vm3551, %v3421, 0.0
        %v3584 = vsel %vm3552, %v3422, 0.0
        %v3585 = vpack.c.bf16 %v3554, %v3553
        %v3586 = vpack.c.bf16 %v3556, %v3555
        %v3587 = vpack.c.bf16 %v3558, %v3557
        %v3588 = vpack.c.bf16 %v3560, %v3559
        %v3589 = vpack.c.bf16 %v3562, %v3561
        %v3590 = vpack.c.bf16 %v3564, %v3563
        %v3591 = vpack.c.bf16 %v3566, %v3565
        %v3592 = vpack.c.bf16 %v3568, %v3567
        %v3593 = vpack.c.bf16 %v3570, %v3569
        %v3594 = vpack.c.bf16 %v3572, %v3571
        %v3595 = vpack.c.bf16 %v3574, %v3573
        %v3596 = vpack.c.bf16 %v3576, %v3575
        %v3597 = vpack.c.bf16 %v3578, %v3577
        %v3598 = vpack.c.bf16 %v3580, %v3579
        %v3599 = vpack.c.bf16 %v3582, %v3581
        %v3600 = vpack.c.bf16 %v3584, %v3583
        %v3602 = vsel %vm1464, %v3585, 0
        %v3605 = vsel %vm1464, %v3586, 0
        %v3608 = vsel %vm1464, %v3587, 0
        %v3611 = vsel %vm1464, %v3588, 0
        %v3614 = vsel %vm1464, %v3589, 0
        %v3617 = vsel %vm1464, %v3590, 0
        %v3620 = vsel %vm1464, %v3591, 0
        %v3623 = vsel %vm1464, %v3592, 0
        %v3626 = vsel %vm1464, %v3593, 0
        %v3629 = vsel %vm1464, %v3594, 0
        %v3632 = vsel %vm1464, %v3595, 0
        %v3635 = vsel %vm1464, %v3596, 0
        %v3638 = vsel %vm1464, %v3597, 0
        %v3641 = vsel %vm1464, %v3598, 0
        %v3644 = vsel %vm1464, %v3599, 0
        %v3647 = vsel %vm1464, %v3600, 0
        %3649 = vmatprep.subr.bf16.mxu0 0
        %3650 = vmatpush1.bf16.xpose.msra.mxu0 %v3602
        %3651 = vmatprep.subr.bf16.mxu0 0
        %3652 = vmatpush1.bf16.xpose.msra.mxu0 %v3605
        %3653 = vmatprep.subr.bf16.mxu0 0
        %3654 = vmatpush1.bf16.xpose.msra.mxu0 %v3608
        %3655 = vmatprep.subr.bf16.mxu0 0
        %3656 = vmatpush1.bf16.xpose.msra.mxu0 %v3611
        %3657 = vmatprep.subr.bf16.mxu0 0
        %3658 = vmatpush1.bf16.xpose.msra.mxu0 %v3614
        %3659 = vmatprep.subr.bf16.mxu0 0
        %3660 = vmatpush1.bf16.xpose.msra.mxu0 %v3617
        %3661 = vmatprep.subr.bf16.mxu0 0
        %3662 = vmatpush1.bf16.xpose.msra.mxu0 %v3620
        %3663 = vmatprep.subr.bf16.mxu0 0
        %3664 = vmatpush1.bf16.xpose.msra.mxu0 %v3623
        %3665 = vmatprep.subr.bf16.mxu0 0
        %3666 = vmatpush1.bf16.xpose.msra.mxu0 %v3626
        %3667 = vmatprep.subr.bf16.mxu0 0
        %3668 = vmatpush1.bf16.xpose.msra.mxu0 %v3629
        %3669 = vmatprep.subr.bf16.mxu0 0
        %3670 = vmatpush1.bf16.xpose.msra.mxu0 %v3632
        %3671 = vmatprep.subr.bf16.mxu0 0
        %3672 = vmatpush1.bf16.xpose.msra.mxu0 %v3635
        %3673 = vmatprep.subr.bf16.mxu0 0
        %3674 = vmatpush1.bf16.xpose.msra.mxu0 %v3638
        %3675 = vmatprep.subr.bf16.mxu0 0
        %3676 = vmatpush1.bf16.xpose.msra.mxu0 %v3641
        %3677 = vmatprep.subr.bf16.mxu0 0
        %3678 = vmatpush1.bf16.xpose.msra.mxu0 %v3644
        %3679 = vmatprep.subr.bf16.mxu0 0
        %3680 = vmatpush1.bf16.xpose.msra.mxu0 %v3647
        %3681 = vmatprep.mubr.bf16.mxu0 0
        %3682 = vmatmul.mubr.bf16.gmra.mrb[0].mxu0 %v3602
        %v3683 = vpop.f32.mrb[0].mxu0
        %v3684 = vadd.f32 %v307, %v3683
        %v3685 = vpop.f32.mrb[0].mxu0
        %v3686 = vadd.f32 %v308, %v3685
        %v3687 = vpop.f32.mrb[0].mxu0
        %v3688 = vadd.f32 %v309, %v3687
        %v3689 = vpop.f32.mrb[0].mxu0
        %v3690 = vadd.f32 %v310, %v3689
        %3691 = vmatprep.mubr.bf16.mxu0 0
        %3692 = vmatmul.mubr.bf16.gmra.mrb[0].mxu0 %v3605
        %v3693 = vpop.f32.mrb[0].mxu0
        %v3694 = vadd.f32 %v311, %v3693
        %v3695 = vpop.f32.mrb[0].mxu0
        %v3696 = vadd.f32 %v312, %v3695
        %v3697 = vpop.f32.mrb[0].mxu0
        %v3698 = vadd.f32 %v313, %v3697
        %v3699 = vpop.f32.mrb[0].mxu0
        %v3700 = vadd.f32 %v314, %v3699
        %3701 = vmatprep.mubr.bf16.mxu0 0
        %3702 = vmatmul.mubr.bf16.gmra.mrb[0].mxu0 %v3608
        %v3703 = vpop.f32.mrb[0].mxu0
        %v3704 = vadd.f32 %v315, %v3703
        %v3705 = vpop.f32.mrb[0].mxu0
        %v3706 = vadd.f32 %v316, %v3705
        %v3707 = vpop.f32.mrb[0].mxu0
        %v3708 = vadd.f32 %v317, %v3707
        %v3709 = vpop.f32.mrb[0].mxu0
        %v3710 = vadd.f32 %v318, %v3709
        %3711 = vmatprep.mubr.bf16.mxu0 0
        %3712 = vmatmul.mubr.bf16.gmra.mrb[0].mxu0 %v3611
        %v3713 = vpop.f32.mrb[0].mxu0
        %v3714 = vadd.f32 %v319, %v3713
        %v3715 = vpop.f32.mrb[0].mxu0
        %v3716 = vadd.f32 %v320, %v3715
        %v3717 = vpop.f32.mrb[0].mxu0
        %v3718 = vadd.f32 %v321, %v3717
        %v3719 = vpop.f32.mrb[0].mxu0
        %v3720 = vadd.f32 %v322, %v3719
        %3721 = vmatprep.mubr.bf16.mxu0 0
        %3722 = vmatmul.mubr.bf16.gmra.mrb[0].mxu0 %v3614
        %v3723 = vpop.f32.mrb[0].mxu0
        %v3724 = vadd.f32 %v323, %v3723
        %v3725 = vpop.f32.mrb[0].mxu0
        %v3726 = vadd.f32 %v324, %v3725
        %v3727 = vpop.f32.mrb[0].mxu0
        %v3728 = vadd.f32 %v325, %v3727
        %v3729 = vpop.f32.mrb[0].mxu0
        %v3730 = vadd.f32 %v326, %v3729
        %3731 = vmatprep.mubr.bf16.mxu0 0
        %3732 = vmatmul.mubr.bf16.gmra.mrb[0].mxu0 %v3617
        %v3733 = vpop.f32.mrb[0].mxu0
        %v3734 = vadd.f32 %v327, %v3733
        %v3735 = vpop.f32.mrb[0].mxu0
        %v3736 = vadd.f32 %v328, %v3735
        %v3737 = vpop.f32.mrb[0].mxu0
        %v3738 = vadd.f32 %v329, %v3737
        %v3739 = vpop.f32.mrb[0].mxu0
        %v3740 = vadd.f32 %v330, %v3739
        %3741 = vmatprep.mubr.bf16.mxu0 0
        %3742 = vmatmul.mubr.bf16.gmra.mrb[0].mxu0 %v3620
        %v3743 = vpop.f32.mrb[0].mxu0
        %v3744 = vadd.f32 %v331, %v3743
        %v3745 = vpop.f32.mrb[0].mxu0
        %v3746 = vadd.f32 %v332, %v3745
        %v3747 = vpop.f32.mrb[0].mxu0
        %v3748 = vadd.f32 %v333, %v3747
        %v3749 = vpop.f32.mrb[0].mxu0
        %v3750 = vadd.f32 %v334, %v3749
        %3751 = vmatprep.mubr.bf16.mxu0 0
        %3752 = vmatmul.mubr.bf16.gmra.mrb[0].mxu0 %v3623
        %v3753 = vpop.f32.mrb[0].mxu0
        %v3754 = vadd.f32 %v335, %v3753
        %v3755 = vpop.f32.mrb[0].mxu0
        %v3756 = vadd.f32 %v336, %v3755
        %v3757 = vpop.f32.mrb[0].mxu0
        %v3758 = vadd.f32 %v337, %v3757
        %v3759 = vpop.f32.mrb[0].mxu0
        %v3760 = vadd.f32 %v338, %v3759
        %3761 = vmatprep.mubr.bf16.mxu0 0
        %3762 = vmatmul.mubr.bf16.gmra.mrb[0].mxu0 %v3626
        %v3763 = vpop.f32.mrb[0].mxu0
        %v3764 = vadd.f32 %v339, %v3763
        %v3765 = vpop.f32.mrb[0].mxu0
        %v3766 = vadd.f32 %v340, %v3765
        %v3767 = vpop.f32.mrb[0].mxu0
        %v3768 = vadd.f32 %v341, %v3767
        %v3769 = vpop.f32.mrb[0].mxu0
        %v3770 = vadd.f32 %v342, %v3769
        %3771 = vmatprep.mubr.bf16.mxu0 0
        %3772 = vmatmul.mubr.bf16.gmra.mrb[0].mxu0 %v3629
        %v3773 = vpop.f32.mrb[0].mxu0
        %v3774 = vadd.f32 %v343, %v3773
        %v3775 = vpop.f32.mrb[0].mxu0
        %v3776 = vadd.f32 %v344, %v3775
        %v3777 = vpop.f32.mrb[0].mxu0
        %v3778 = vadd.f32 %v345, %v3777
        %v3779 = vpop.f32.mrb[0].mxu0
        %v3780 = vadd.f32 %v346, %v3779
        %3781 = vmatprep.mubr.bf16.mxu0 0
        %3782 = vmatmul.mubr.bf16.gmra.mrb[0].mxu0 %v3632
        %v3783 = vpop.f32.mrb[0].mxu0
        %v3784 = vadd.f32 %v347, %v3783
        %v3785 = vpop.f32.mrb[0].mxu0
        %v3786 = vadd.f32 %v348, %v3785
        %v3787 = vpop.f32.mrb[0].mxu0
        %v3788 = vadd.f32 %v349, %v3787
        %v3789 = vpop.f32.mrb[0].mxu0
        %v3790 = vadd.f32 %v350, %v3789
        %3791 = vmatprep.mubr.bf16.mxu0 0
        %3792 = vmatmul.mubr.bf16.gmra.mrb[0].mxu0 %v3635
        %v3793 = vpop.f32.mrb[0].mxu0
        %v3794 = vadd.f32 %v351, %v3793
        %v3795 = vpop.f32.mrb[0].mxu0
        %v3796 = vadd.f32 %v352, %v3795
        %v3797 = vpop.f32.mrb[0].mxu0
        %v3798 = vadd.f32 %v353, %v3797
        %v3799 = vpop.f32.mrb[0].mxu0
        %v3800 = vadd.f32 %v354, %v3799
        %3801 = vmatprep.mubr.bf16.mxu0 0
        %3802 = vmatmul.mubr.bf16.gmra.mrb[0].mxu0 %v3638
        %v3803 = vpop.f32.mrb[0].mxu0
        %v3804 = vadd.f32 %v355, %v3803
        %v3805 = vpop.f32.mrb[0].mxu0
        %v3806 = vadd.f32 %v356, %v3805
        %v3807 = vpop.f32.mrb[0].mxu0
        %v3808 = vadd.f32 %v357, %v3807
        %v3809 = vpop.f32.mrb[0].mxu0
        %v3810 = vadd.f32 %v358, %v3809
        %3811 = vmatprep.mubr.bf16.mxu0 0
        %3812 = vmatmul.mubr.bf16.gmra.mrb[0].mxu0 %v3641
        %v3813 = vpop.f32.mrb[0].mxu0
        %v3814 = vadd.f32 %v359, %v3813
        %v3815 = vpop.f32.mrb[0].mxu0
        %v3816 = vadd.f32 %v360, %v3815
        %v3817 = vpop.f32.mrb[0].mxu0
        %v3818 = vadd.f32 %v361, %v3817
        %v3819 = vpop.f32.mrb[0].mxu0
        %v3820 = vadd.f32 %v362, %v3819
        %3821 = vmatprep.mubr.bf16.mxu0 0
        %3822 = vmatmul.mubr.bf16.gmra.mrb[0].mxu0 %v3644
        %v3823 = vpop.f32.mrb[0].mxu0
        %v3824 = vadd.f32 %v363, %v3823
        %v3825 = vpop.f32.mrb[0].mxu0
        %v3826 = vadd.f32 %v364, %v3825
        %v3827 = vpop.f32.mrb[0].mxu0
        %v3828 = vadd.f32 %v365, %v3827
        %v3829 = vpop.f32.mrb[0].mxu0
        %v3830 = vadd.f32 %v366, %v3829
        %3831 = vmatprep.mubr.bf16.mxu0 0
        %3832 = vmatmul.mubr.bf16.gmra.mrb[0].mxu0 %v3647
        %v3833 = vpop.f32.mrb[0].mxu0
        %v3834 = vadd.f32 %v367, %v3833
        %v3835 = vpop.f32.mrb[0].mxu0
        %v3836 = vadd.f32 %v368, %v3835
        %v3837 = vpop.f32.mrb[0].mxu0
        %v3838 = vadd.f32 %v369, %v3837
        %v3839 = vpop.f32.mrb[0].mxu0
        %v3840 = vadd.f32 %v370, %v3839
        %3841 = vdwg.mxu0
        %v3842 = vmax.f32 %v3684, %v3686
        %3843 = vmax.xlane.f32.xlu0 %v3842
        %v3844 = vpop.xlane.xlu0 %3843
        %v3845 = vmax.f32 %v3688, %v3690
        %3846 = vmax.xlane.f32.xlu0 %v3845
        %v3847 = vpop.xlane.xlu0 %3846
        %v3848 = vmax.f32 %v3694, %v3696
        %3849 = vmax.xlane.f32.xlu0 %v3848
        %v3850 = vpop.xlane.xlu0 %3849
        %v3851 = vmax.f32 %v3698, %v3700
        %3852 = vmax.xlane.f32.xlu0 %v3851
        %v3853 = vpop.xlane.xlu0 %3852
        %v3854 = vmax.f32 %v3704, %v3706
        %3855 = vmax.xlane.f32.xlu0 %v3854
        %v3856 = vpop.xlane.xlu0 %3855
        %v3857 = vmax.f32 %v3708, %v3710
        %3858 = vmax.xlane.f32.xlu0 %v3857
        %v3859 = vpop.xlane.xlu0 %3858
        %v3860 = vmax.f32 %v3714, %v3716
        %3861 = vmax.xlane.f32.xlu0 %v3860
        %v3862 = vpop.xlane.xlu0 %3861
        %v3863 = vmax.f32 %v3718, %v3720
        %3864 = vmax.xlane.f32.xlu0 %v3863
        %v3865 = vpop.xlane.xlu0 %3864
        %v3866 = vmax.f32 %v3724, %v3726
        %3867 = vmax.xlane.f32.xlu0 %v3866
        %v3868 = vpop.xlane.xlu0 %3867
        %v3869 = vmax.f32 %v3728, %v3730
        %3870 = vmax.xlane.f32.xlu0 %v3869
        %v3871 = vpop.xlane.xlu0 %3870
        %v3872 = vmax.f32 %v3734, %v3736
        %3873 = vmax.xlane.f32.xlu0 %v3872
        %v3874 = vpop.xlane.xlu0 %3873
        %v3875 = vmax.f32 %v3738, %v3740
        %3876 = vmax.xlane.f32.xlu0 %v3875
        %v3877 = vpop.xlane.xlu0 %3876
        %v3878 = vmax.f32 %v3744, %v3746
        %3879 = vmax.xlane.f32.xlu0 %v3878
        %v3880 = vpop.xlane.xlu0 %3879
        %v3881 = vmax.f32 %v3748, %v3750
        %3882 = vmax.xlane.f32.xlu0 %v3881
        %v3883 = vpop.xlane.xlu0 %3882
        %v3884 = vmax.f32 %v3754, %v3756
        %3885 = vmax.xlane.f32.xlu0 %v3884
        %v3886 = vpop.xlane.xlu0 %3885
        %v3887 = vmax.f32 %v3758, %v3760
        %3888 = vmax.xlane.f32.xlu0 %v3887
        %v3889 = vpop.xlane.xlu0 %3888
        %v3890 = vmax.f32 %v3764, %v3766
        %3891 = vmax.xlane.f32.xlu0 %v3890
        %v3892 = vpop.xlane.xlu0 %3891
        %v3893 = vmax.f32 %v3768, %v3770
        %3894 = vmax.xlane.f32.xlu0 %v3893
        %v3895 = vpop.xlane.xlu0 %3894
        %v3896 = vmax.f32 %v3774, %v3776
        %3897 = vmax.xlane.f32.xlu0 %v3896
        %v3898 = vpop.xlane.xlu0 %3897
        %v3899 = vmax.f32 %v3778, %v3780
        %3900 = vmax.xlane.f32.xlu0 %v3899
        %v3901 = vpop.xlane.xlu0 %3900
        %v3902 = vmax.f32 %v3784, %v3786
        %3903 = vmax.xlane.f32.xlu0 %v3902
        %v3904 = vpop.xlane.xlu0 %3903
        %v3905 = vmax.f32 %v3788, %v3790
        %3906 = vmax.xlane.f32.xlu0 %v3905
        %v3907 = vpop.xlane.xlu0 %3906
        %v3908 = vmax.f32 %v3794, %v3796
        %3909 = vmax.xlane.f32.xlu0 %v3908
        %v3910 = vpop.xlane.xlu0 %3909
        %v3911 = vmax.f32 %v3798, %v3800
        %3912 = vmax.xlane.f32.xlu0 %v3911
        %v3913 = vpop.xlane.xlu0 %3912
        %v3914 = vmax.f32 %v3804, %v3806
        %3915 = vmax.xlane.f32.xlu0 %v3914
        %v3916 = vpop.xlane.xlu0 %3915
        %v3917 = vmax.f32 %v3808, %v3810
        %3918 = vmax.xlane.f32.xlu0 %v3917
        %v3919 = vpop.xlane.xlu0 %3918
        %v3920 = vmax.f32 %v3814, %v3816
        %3921 = vmax.xlane.f32.xlu0 %v3920
        %v3922 = vpop.xlane.xlu0 %3921
        %v3923 = vmax.f32 %v3818, %v3820
        %3924 = vmax.xlane.f32.xlu0 %v3923
        %v3925 = vpop.xlane.xlu0 %3924
        %v3926 = vmax.f32 %v3824, %v3826
        %3927 = vmax.xlane.f32.xlu0 %v3926
        %v3928 = vpop.xlane.xlu0 %3927
        %v3929 = vmax.f32 %v3828, %v3830
        %3930 = vmax.xlane.f32.xlu0 %v3929
        %v3931 = vpop.xlane.xlu0 %3930
        %v3932 = vmax.f32 %v3834, %v3836
        %3933 = vmax.xlane.f32.xlu0 %v3932
        %v3934 = vpop.xlane.xlu0 %3933
        %v3935 = vmax.f32 %v3838, %v3840
        %3936 = vmax.xlane.f32.xlu0 %v3935
        %v3937 = vpop.xlane.xlu0 %3936
        %v3938 = vsub.f32 %v3684, %v3844
        %v3939 = vsub.f32 %v3686, %v3844
        %v3940 = vsub.f32 %v3688, %v3847
        %v3941 = vsub.f32 %v3690, %v3847
        %v3942 = vsub.f32 %v3694, %v3850
        %v3943 = vsub.f32 %v3696, %v3850
        %v3944 = vsub.f32 %v3698, %v3853
        %v3945 = vsub.f32 %v3700, %v3853
        %v3946 = vsub.f32 %v3704, %v3856
        %v3947 = vsub.f32 %v3706, %v3856
        %v3948 = vsub.f32 %v3708, %v3859
        %v3949 = vsub.f32 %v3710, %v3859
        %v3950 = vsub.f32 %v3714, %v3862
        %v3951 = vsub.f32 %v3716, %v3862
        %v3952 = vsub.f32 %v3718, %v3865
        %v3953 = vsub.f32 %v3720, %v3865
        %v3954 = vsub.f32 %v3724, %v3868
        %v3955 = vsub.f32 %v3726, %v3868
        %v3956 = vsub.f32 %v3728, %v3871
        %v3957 = vsub.f32 %v3730, %v3871
        %v3958 = vsub.f32 %v3734, %v3874
        %v3959 = vsub.f32 %v3736, %v3874
        %v3960 = vsub.f32 %v3738, %v3877
        %v3961 = vsub.f32 %v3740, %v3877
        %v3962 = vsub.f32 %v3744, %v3880
        %v3963 = vsub.f32 %v3746, %v3880
        %v3964 = vsub.f32 %v3748, %v3883
        %v3965 = vsub.f32 %v3750, %v3883
        %v3966 = vsub.f32 %v3754, %v3886
        %v3967 = vsub.f32 %v3756, %v3886
        %v3968 = vsub.f32 %v3758, %v3889
        %v3969 = vsub.f32 %v3760, %v3889
        %v3970 = vsub.f32 %v3764, %v3892
        %v3971 = vsub.f32 %v3766, %v3892
        %v3972 = vsub.f32 %v3768, %v3895
        %v3973 = vsub.f32 %v3770, %v3895
        %v3974 = vsub.f32 %v3774, %v3898
        %v3975 = vsub.f32 %v3776, %v3898
        %v3976 = vsub.f32 %v3778, %v3901
        %v3977 = vsub.f32 %v3780, %v3901
        %v3978 = vsub.f32 %v3784, %v3904
        %v3979 = vsub.f32 %v3786, %v3904
        %v3980 = vsub.f32 %v3788, %v3907
        %v3981 = vsub.f32 %v3790, %v3907
        %v3982 = vsub.f32 %v3794, %v3910
        %v3983 = vsub.f32 %v3796, %v3910
        %v3984 = vsub.f32 %v3798, %v3913
        %v3985 = vsub.f32 %v3800, %v3913
        %v3986 = vsub.f32 %v3804, %v3916
        %v3987 = vsub.f32 %v3806, %v3916
        %v3988 = vsub.f32 %v3808, %v3919
        %v3989 = vsub.f32 %v3810, %v3919
        %v3990 = vsub.f32 %v3814, %v3922
        %v3991 = vsub.f32 %v3816, %v3922
        %v3992 = vsub.f32 %v3818, %v3925
        %v3993 = vsub.f32 %v3820, %v3925
        %v3994 = vsub.f32 %v3824, %v3928
        %v3995 = vsub.f32 %v3826, %v3928
        %v3996 = vsub.f32 %v3828, %v3931
        %v3997 = vsub.f32 %v3830, %v3931
        %v3998 = vsub.f32 %v3834, %v3934
        %v3999 = vsub.f32 %v3836, %v3934
        %v4000 = vsub.f32 %v3838, %v3937
        %v4001 = vsub.f32 %v3840, %v3937
        %v4002 = vmul.f32 %v3938, 1.442695
        %v4003 = vpow.pop %v4002
        %v4004 = vmul.f32 %v3939, 1.442695
        %v4005 = vpow.pop %v4004
        %v4006 = vmul.f32 %v3940, 1.442695
        %v4007 = vpow.pop %v4006
        %v4008 = vmul.f32 %v3941, 1.442695
        %v4009 = vpow.pop %v4008
        %v4010 = vmul.f32 %v3942, 1.442695
        %v4011 = vpow.pop %v4010
        %v4012 = vmul.f32 %v3943, 1.442695
        %v4013 = vpow.pop %v4012
        %v4014 = vmul.f32 %v3944, 1.442695
        %v4015 = vpow.pop %v4014
        %v4016 = vmul.f32 %v3945, 1.442695
        %v4017 = vpow.pop %v4016
        %v4018 = vmul.f32 %v3946, 1.442695
        %v4019 = vpow.pop %v4018
        %v4020 = vmul.f32 %v3947, 1.442695
        %v4021 = vpow.pop %v4020
        %v4022 = vmul.f32 %v3948, 1.442695
        %v4023 = vpow.pop %v4022
        %v4024 = vmul.f32 %v3949, 1.442695
        %v4025 = vpow.pop %v4024
        %v4026 = vmul.f32 %v3950, 1.442695
        %v4027 = vpow.pop %v4026
        %v4028 = vmul.f32 %v3951, 1.442695
        %v4029 = vpow.pop %v4028
        %v4030 = vmul.f32 %v3952, 1.442695
        %v4031 = vpow.pop %v4030
        %v4032 = vmul.f32 %v3953, 1.442695
        %v4033 = vpow.pop %v4032
        %v4034 = vmul.f32 %v3954, 1.442695
        %v4035 = vpow.pop %v4034
        %v4036 = vmul.f32 %v3955, 1.442695
        %v4037 = vpow.pop %v4036
        %v4038 = vmul.f32 %v3956, 1.442695
        %v4039 = vpow.pop %v4038
        %v4040 = vmul.f32 %v3957, 1.442695
        %v4041 = vpow.pop %v4040
        %v4042 = vmul.f32 %v3958, 1.442695
        %v4043 = vpow.pop %v4042
        %v4044 = vmul.f32 %v3959, 1.442695
        %v4045 = vpow.pop %v4044
        %v4046 = vmul.f32 %v3960, 1.442695
        %v4047 = vpow.pop %v4046
        %v4048 = vmul.f32 %v3961, 1.442695
        %v4049 = vpow.pop %v4048
        %v4050 = vmul.f32 %v3962, 1.442695
        %v4051 = vpow.pop %v4050
        %v4052 = vmul.f32 %v3963, 1.442695
        %v4053 = vpow.pop %v4052
        %v4054 = vmul.f32 %v3964, 1.442695
        %v4055 = vpow.pop %v4054
        %v4056 = vmul.f32 %v3965, 1.442695
        %v4057 = vpow.pop %v4056
        %v4058 = vmul.f32 %v3966, 1.442695
        %v4059 = vpow.pop %v4058
        %v4060 = vmul.f32 %v3967, 1.442695
        %v4061 = vpow.pop %v4060
        %v4062 = vmul.f32 %v3968, 1.442695
        %v4063 = vpow.pop %v4062
        %v4064 = vmul.f32 %v3969, 1.442695
        %v4065 = vpow.pop %v4064
        %v4066 = vmul.f32 %v3970, 1.442695
        %v4067 = vpow.pop %v4066
        %v4068 = vmul.f32 %v3971, 1.442695
        %v4069 = vpow.pop %v4068
        %v4070 = vmul.f32 %v3972, 1.442695
        %v4071 = vpow.pop %v4070
        %v4072 = vmul.f32 %v3973, 1.442695
        %v4073 = vpow.pop %v4072
        %v4074 = vmul.f32 %v3974, 1.442695
        %v4075 = vpow.pop %v4074
        %v4076 = vmul.f32 %v3975, 1.442695
        %v4077 = vpow.pop %v4076
        %v4078 = vmul.f32 %v3976, 1.442695
        %v4079 = vpow.pop %v4078
        %v4080 = vmul.f32 %v3977, 1.442695
        %v4081 = vpow.pop %v4080
        %v4082 = vmul.f32 %v3978, 1.442695
        %v4083 = vpow.pop %v4082
        %v4084 = vmul.f32 %v3979, 1.442695
        %v4085 = vpow.pop %v4084
        %v4086 = vmul.f32 %v3980, 1.442695
        %v4087 = vpow.pop %v4086
        %v4088 = vmul.f32 %v3981, 1.442695
        %v4089 = vpow.pop %v4088
        %v4090 = vmul.f32 %v3982, 1.442695
        %v4091 = vpow.pop %v4090
        %v4092 = vmul.f32 %v3983, 1.442695
        %v4093 = vpow.pop %v4092
        %v4094 = vmul.f32 %v3984, 1.442695
        %v4095 = vpow.pop %v4094
        %v4096 = vmul.f32 %v3985, 1.442695
        %v4097 = vpow.pop %v4096
        %v4098 = vmul.f32 %v3986, 1.442695
        %v4099 = vpow.pop %v4098
        %v4100 = vmul.f32 %v3987, 1.442695
        %v4101 = vpow.pop %v4100
        %v4102 = vmul.f32 %v3988, 1.442695
        %v4103 = vpow.pop %v4102
        %v4104 = vmul.f32 %v3989, 1.442695
        %v4105 = vpow.pop %v4104
        %v4106 = vmul.f32 %v3990, 1.442695
        %v4107 = vpow.pop %v4106
        %v4108 = vmul.f32 %v3991, 1.442695
        %v4109 = vpow.pop %v4108
        %v4110 = vmul.f32 %v3992, 1.442695
        %v4111 = vpow.pop %v4110
        %v4112 = vmul.f32 %v3993, 1.442695
        %v4113 = vpow.pop %v4112
        %v4114 = vmul.f32 %v3994, 1.442695
        %v4115 = vpow.pop %v4114
        %v4116 = vmul.f32 %v3995, 1.442695
        %v4117 = vpow.pop %v4116
        %v4118 = vmul.f32 %v3996, 1.442695
        %v4119 = vpow.pop %v4118
        %v4120 = vmul.f32 %v3997, 1.442695
        %v4121 = vpow.pop %v4120
        %v4122 = vmul.f32 %v3998, 1.442695
        %v4123 = vpow.pop %v4122
        %v4124 = vmul.f32 %v3999, 1.442695
        %v4125 = vpow.pop %v4124
        %v4126 = vmul.f32 %v4000, 1.442695
        %v4127 = vpow.pop %v4126
        %v4128 = vmul.f32 %v4001, 1.442695
        %v4129 = vpow.pop %v4128
        %v4130 = vadd.f32 %v4003, %v4005
        %4131 = vadd.xlane.f32.xlu0 %v4130
        %v4132 = vpop.xlane.xlu0 %4131
        %v4133 = vadd.f32 %v4007, %v4009
        %4134 = vadd.xlane.f32.xlu0 %v4133
        %v4135 = vpop.xlane.xlu0 %4134
        %v4136 = vadd.f32 %v4011, %v4013
        %4137 = vadd.xlane.f32.xlu0 %v4136
        %v4138 = vpop.xlane.xlu0 %4137
        %v4139 = vadd.f32 %v4015, %v4017
        %4140 = vadd.xlane.f32.xlu0 %v4139
        %v4141 = vpop.xlane.xlu0 %4140
        %v4142 = vadd.f32 %v4019, %v4021
        %4143 = vadd.xlane.f32.xlu0 %v4142
        %v4144 = vpop.xlane.xlu0 %4143
        %v4145 = vadd.f32 %v4023, %v4025
        %4146 = vadd.xlane.f32.xlu0 %v4145
        %v4147 = vpop.xlane.xlu0 %4146
        %v4148 = vadd.f32 %v4027, %v4029
        %4149 = vadd.xlane.f32.xlu0 %v4148
        %v4150 = vpop.xlane.xlu0 %4149
        %v4151 = vadd.f32 %v4031, %v4033
        %4152 = vadd.xlane.f32.xlu0 %v4151
        %v4153 = vpop.xlane.xlu0 %4152
        %v4154 = vadd.f32 %v4035, %v4037
        %4155 = vadd.xlane.f32.xlu0 %v4154
        %v4156 = vpop.xlane.xlu0 %4155
        %v4157 = vadd.f32 %v4039, %v4041
        %4158 = vadd.xlane.f32.xlu0 %v4157
        %v4159 = vpop.xlane.xlu0 %4158
        %v4160 = vadd.f32 %v4043, %v4045
        %4161 = vadd.xlane.f32.xlu0 %v4160
        %v4162 = vpop.xlane.xlu0 %4161
        %v4163 = vadd.f32 %v4047, %v4049
        %4164 = vadd.xlane.f32.xlu0 %v4163
        %v4165 = vpop.xlane.xlu0 %4164
        %v4166 = vadd.f32 %v4051, %v4053
        %4167 = vadd.xlane.f32.xlu0 %v4166
        %v4168 = vpop.xlane.xlu0 %4167
        %v4169 = vadd.f32 %v4055, %v4057
        %4170 = vadd.xlane.f32.xlu0 %v4169
        %v4171 = vpop.xlane.xlu0 %4170
        %v4172 = vadd.f32 %v4059, %v4061
        %4173 = vadd.xlane.f32.xlu0 %v4172
        %v4174 = vpop.xlane.xlu0 %4173
        %v4175 = vadd.f32 %v4063, %v4065
        %4176 = vadd.xlane.f32.xlu0 %v4175
        %v4177 = vpop.xlane.xlu0 %4176
        %v4178 = vadd.f32 %v4067, %v4069
        %4179 = vadd.xlane.f32.xlu0 %v4178
        %v4180 = vpop.xlane.xlu0 %4179
        %v4181 = vadd.f32 %v4071, %v4073
        %4182 = vadd.xlane.f32.xlu0 %v4181
        %v4183 = vpop.xlane.xlu0 %4182
        %v4184 = vadd.f32 %v4075, %v4077
        %4185 = vadd.xlane.f32.xlu0 %v4184
        %v4186 = vpop.xlane.xlu0 %4185
        %v4187 = vadd.f32 %v4079, %v4081
        %4188 = vadd.xlane.f32.xlu0 %v4187
        %v4189 = vpop.xlane.xlu0 %4188
        %v4190 = vadd.f32 %v4083, %v4085
        %4191 = vadd.xlane.f32.xlu0 %v4190
        %v4192 = vpop.xlane.xlu0 %4191
        %v4193 = vadd.f32 %v4087, %v4089
        %4194 = vadd.xlane.f32.xlu0 %v4193
        %v4195 = vpop.xlane.xlu0 %4194
        %v4196 = vadd.f32 %v4091, %v4093
        %4197 = vadd.xlane.f32.xlu0 %v4196
        %v4198 = vpop.xlane.xlu0 %4197
        %v4199 = vadd.f32 %v4095, %v4097
        %4200 = vadd.xlane.f32.xlu0 %v4199
        %v4201 = vpop.xlane.xlu0 %4200
        %v4202 = vadd.f32 %v4099, %v4101
        %4203 = vadd.xlane.f32.xlu0 %v4202
        %v4204 = vpop.xlane.xlu0 %4203
        %v4205 = vadd.f32 %v4103, %v4105
        %4206 = vadd.xlane.f32.xlu0 %v4205
        %v4207 = vpop.xlane.xlu0 %4206
        %v4208 = vadd.f32 %v4107, %v4109
        %4209 = vadd.xlane.f32.xlu0 %v4208
        %v4210 = vpop.xlane.xlu0 %4209
        %v4211 = vadd.f32 %v4111, %v4113
        %4212 = vadd.xlane.f32.xlu0 %v4211
        %v4213 = vpop.xlane.xlu0 %4212
        %v4214 = vadd.f32 %v4115, %v4117
        %4215 = vadd.xlane.f32.xlu0 %v4214
        %v4216 = vpop.xlane.xlu0 %4215
        %v4217 = vadd.f32 %v4119, %v4121
        %4218 = vadd.xlane.f32.xlu0 %v4217
        %v4219 = vpop.xlane.xlu0 %4218
        %v4220 = vadd.f32 %v4123, %v4125
        %4221 = vadd.xlane.f32.xlu0 %v4220
        %v4222 = vpop.xlane.xlu0 %4221
        %v4223 = vadd.f32 %v4127, %v4129
        %4224 = vadd.xlane.f32.xlu0 %v4223
        %v4225 = vpop.xlane.xlu0 %4224
        %v4226 = vrcp.pop %v4132
        %v4227 = vmul.f32 1.0, %v4226
        %v4228 = vrcp.pop %v4135
        %v4229 = vmul.f32 1.0, %v4228
        %v4230 = vrcp.pop %v4138
        %v4231 = vmul.f32 1.0, %v4230
        %v4232 = vrcp.pop %v4141
        %v4233 = vmul.f32 1.0, %v4232
        %v4234 = vrcp.pop %v4144
        %v4235 = vmul.f32 1.0, %v4234
        %v4236 = vrcp.pop %v4147
        %v4237 = vmul.f32 1.0, %v4236
        %v4238 = vrcp.pop %v4150
        %v4239 = vmul.f32 1.0, %v4238
        %v4240 = vrcp.pop %v4153
        %v4241 = vmul.f32 1.0, %v4240
        %v4242 = vrcp.pop %v4156
        %v4243 = vmul.f32 1.0, %v4242
        %v4244 = vrcp.pop %v4159
        %v4245 = vmul.f32 1.0, %v4244
        %v4246 = vrcp.pop %v4162
        %v4247 = vmul.f32 1.0, %v4246
        %v4248 = vrcp.pop %v4165
        %v4249 = vmul.f32 1.0, %v4248
        %v4250 = vrcp.pop %v4168
        %v4251 = vmul.f32 1.0, %v4250
        %v4252 = vrcp.pop %v4171
        %v4253 = vmul.f32 1.0, %v4252
        %v4254 = vrcp.pop %v4174
        %v4255 = vmul.f32 1.0, %v4254
        %v4256 = vrcp.pop %v4177
        %v4257 = vmul.f32 1.0, %v4256
        %v4258 = vrcp.pop %v4180
        %v4259 = vmul.f32 1.0, %v4258
        %v4260 = vrcp.pop %v4183
        %v4261 = vmul.f32 1.0, %v4260
        %v4262 = vrcp.pop %v4186
        %v4263 = vmul.f32 1.0, %v4262
        %v4264 = vrcp.pop %v4189
        %v4265 = vmul.f32 1.0, %v4264
        %v4266 = vrcp.pop %v4192
        %v4267 = vmul.f32 1.0, %v4266
        %v4268 = vrcp.pop %v4195
        %v4269 = vmul.f32 1.0, %v4268
        %v4270 = vrcp.pop %v4198
        %v4271 = vmul.f32 1.0, %v4270
        %v4272 = vrcp.pop %v4201
        %v4273 = vmul.f32 1.0, %v4272
        %v4274 = vrcp.pop %v4204
        %v4275 = vmul.f32 1.0, %v4274
        %v4276 = vrcp.pop %v4207
        %v4277 = vmul.f32 1.0, %v4276
        %v4278 = vrcp.pop %v4210
        %v4279 = vmul.f32 1.0, %v4278
        %v4280 = vrcp.pop %v4213
        %v4281 = vmul.f32 1.0, %v4280
        %v4282 = vrcp.pop %v4216
        %v4283 = vmul.f32 1.0, %v4282
        %v4284 = vrcp.pop %v4219
        %v4285 = vmul.f32 1.0, %v4284
        %v4286 = vrcp.pop %v4222
        %v4287 = vmul.f32 1.0, %v4286
        %v4288 = vrcp.pop %v4225
        %v4289 = vmul.f32 1.0, %v4288
        %v4290 = vpack.c.bf16 %v4007, %v4003
        %v4291 = vpack.c.bf16 %v4009, %v4005
        %v4292 = vpack.c.bf16 %v4015, %v4011
        %v4293 = vpack.c.bf16 %v4017, %v4013
        %v4294 = vpack.c.bf16 %v4023, %v4019
        %v4295 = vpack.c.bf16 %v4025, %v4021
        %v4296 = vpack.c.bf16 %v4031, %v4027
        %v4297 = vpack.c.bf16 %v4033, %v4029
        %v4298 = vpack.c.bf16 %v4039, %v4035
        %v4299 = vpack.c.bf16 %v4041, %v4037
        %v4300 = vpack.c.bf16 %v4047, %v4043
        %v4301 = vpack.c.bf16 %v4049, %v4045
        %v4302 = vpack.c.bf16 %v4055, %v4051
        %v4303 = vpack.c.bf16 %v4057, %v4053
        %v4304 = vpack.c.bf16 %v4063, %v4059
        %v4305 = vpack.c.bf16 %v4065, %v4061
        %v4306 = vpack.c.bf16 %v4071, %v4067
        %v4307 = vpack.c.bf16 %v4073, %v4069
        %v4308 = vpack.c.bf16 %v4079, %v4075
        %v4309 = vpack.c.bf16 %v4081, %v4077
        %v4310 = vpack.c.bf16 %v4087, %v4083
        %v4311 = vpack.c.bf16 %v4089, %v4085
        %v4312 = vpack.c.bf16 %v4095, %v4091
        %v4313 = vpack.c.bf16 %v4097, %v4093
        %v4314 = vpack.c.bf16 %v4103, %v4099
        %v4315 = vpack.c.bf16 %v4105, %v4101
        %v4316 = vpack.c.bf16 %v4111, %v4107
        %v4317 = vpack.c.bf16 %v4113, %v4109
        %v4318 = vpack.c.bf16 %v4119, %v4115
        %v4319 = vpack.c.bf16 %v4121, %v4117
        %v4320 = vpack.c.bf16 %v4127, %v4123
        %v4321 = vpack.c.bf16 %v4129, %v4125
        %4322 = vmatprep.subr.bf16.mxu0 0
        %4323 = vmatpush1.bf16.msra.mxu0 %v3585
        %4324 = vmatprep.subr.bf16.mxu0 0
        %4325 = vmatpush1.bf16.msra.mxu0 %v3586
        %4326 = vmatprep.subr.bf16.mxu0 0
        %4327 = vmatpush1.bf16.msra.mxu0 %v3587
        %4328 = vmatprep.subr.bf16.mxu0 0
        %4329 = vmatpush1.bf16.msra.mxu0 %v3588
        %4330 = vmatprep.subr.bf16.mxu0 0
        %4331 = vmatpush1.bf16.msra.mxu0 %v3589
        %4332 = vmatprep.subr.bf16.mxu0 0
        %4333 = vmatpush1.bf16.msra.mxu0 %v3590
        %4334 = vmatprep.subr.bf16.mxu0 0
        %4335 = vmatpush1.bf16.msra.mxu0 %v3591
        %4336 = vmatprep.subr.bf16.mxu0 0
        %4337 = vmatpush1.bf16.msra.mxu0 %v3592
        %4338 = vmatprep.subr.bf16.mxu0 0
        %4339 = vmatpush1.bf16.msra.mxu0 %v3593
        %4340 = vmatprep.subr.bf16.mxu0 0
        %4341 = vmatpush1.bf16.msra.mxu0 %v3594
        %4342 = vmatprep.subr.bf16.mxu0 0
        %4343 = vmatpush1.bf16.msra.mxu0 %v3595
        %4344 = vmatprep.subr.bf16.mxu0 0
        %4345 = vmatpush1.bf16.msra.mxu0 %v3596
        %4346 = vmatprep.subr.bf16.mxu0 0
        %4347 = vmatpush1.bf16.msra.mxu0 %v3597
        %4348 = vmatprep.subr.bf16.mxu0 0
        %4349 = vmatpush1.bf16.msra.mxu0 %v3598
        %4350 = vmatprep.subr.bf16.mxu0 0
        %4351 = vmatpush1.bf16.msra.mxu0 %v3599
        %4352 = vmatprep.subr.bf16.mxu0 0
        %4353 = vmatpush1.bf16.msra.mxu0 %v3600
        %4354 = vmatprep.mubr.bf16.mxu0 %v4291
        %4355 = vmatmul.mubr.bf16.gmra.mrb[0].mxu0 %v4290
        %v4356 = vpop.f32.mrb[0].mxu0
        %v4357 = vadd.f32 0.0, %v4356
        %v4358 = vpop.f32.mrb[0].mxu0
        %v4359 = vpop.f32.mrb[0].mxu0
        %v4360 = vadd.f32 0.0, %v4359
        %v4361 = vpop.f32.mrb[0].mxu0
        %4362 = vmatprep.mubr.bf16.mxu0 %v4293
        %4363 = vmatmul.mubr.bf16.gmra.mrb[0].mxu0 %v4292
        %v4364 = vpop.f32.mrb[0].mxu0
        %v4365 = vadd.f32 0.0, %v4364
        %v4366 = vpop.f32.mrb[0].mxu0
        %v4367 = vpop.f32.mrb[0].mxu0
        %v4368 = vadd.f32 0.0, %v4367
        %v4369 = vpop.f32.mrb[0].mxu0
        %4370 = vmatprep.mubr.bf16.mxu0 %v4295
        %4371 = vmatmul.mubr.bf16.gmra.mrb[0].mxu0 %v4294
        %v4372 = vpop.f32.mrb[0].mxu0
        %v4373 = vadd.f32 0.0, %v4372
        %v4374 = vpop.f32.mrb[0].mxu0
        %v4375 = vpop.f32.mrb[0].mxu0
        %v4376 = vadd.f32 0.0, %v4375
        %v4377 = vpop.f32.mrb[0].mxu0
        %4378 = vmatprep.mubr.bf16.mxu0 %v4297
        %4379 = vmatmul.mubr.bf16.gmra.mrb[0].mxu0 %v4296
        %v4380 = vpop.f32.mrb[0].mxu0
        %v4381 = vadd.f32 0.0, %v4380
        %v4382 = vpop.f32.mrb[0].mxu0
        %v4383 = vpop.f32.mrb[0].mxu0
        %v4384 = vadd.f32 0.0, %v4383
        %v4385 = vpop.f32.mrb[0].mxu0
        %4386 = vmatprep.mubr.bf16.mxu0 %v4299
        %4387 = vmatmul.mubr.bf16.gmra.mrb[0].mxu0 %v4298
        %v4388 = vpop.f32.mrb[0].mxu0
        %v4389 = vadd.f32 0.0, %v4388
        %v4390 = vpop.f32.mrb[0].mxu0
        %v4391 = vpop.f32.mrb[0].mxu0
        %v4392 = vadd.f32 0.0, %v4391
        %v4393 = vpop.f32.mrb[0].mxu0
        %4394 = vmatprep.mubr.bf16.mxu0 %v4301
        %4395 = vmatmul.mubr.bf16.gmra.mrb[0].mxu0 %v4300
        %v4396 = vpop.f32.mrb[0].mxu0
        %v4397 = vadd.f32 0.0, %v4396
        %v4398 = vpop.f32.mrb[0].mxu0
        %v4399 = vpop.f32.mrb[0].mxu0
        %v4400 = vadd.f32 0.0, %v4399
        %v4401 = vpop.f32.mrb[0].mxu0
        %4402 = vmatprep.mubr.bf16.mxu0 %v4303
        %4403 = vmatmul.mubr.bf16.gmra.mrb[0].mxu0 %v4302
        %v4404 = vpop.f32.mrb[0].mxu0
        %v4405 = vadd.f32 0.0, %v4404
        %v4406 = vpop.f32.mrb[0].mxu0
        %v4407 = vpop.f32.mrb[0].mxu0
        %v4408 = vadd.f32 0.0, %v4407
        %v4409 = vpop.f32.mrb[0].mxu0
        %4410 = vmatprep.mubr.bf16.mxu0 %v4305
        %4411 = vmatmul.mubr.bf16.gmra.mrb[0].mxu0 %v4304
        %v4412 = vpop.f32.mrb[0].mxu0
        %v4413 = vadd.f32 0.0, %v4412
        %v4414 = vpop.f32.mrb[0].mxu0
        %v4415 = vpop.f32.mrb[0].mxu0
        %v4416 = vadd.f32 0.0, %v4415
        %v4417 = vpop.f32.mrb[0].mxu0
        %4418 = vmatprep.mubr.bf16.mxu0 %v4307
        %4419 = vmatmul.mubr.bf16.gmra.mrb[0].mxu0 %v4306
        %v4420 = vpop.f32.mrb[0].mxu0
        %v4421 = vadd.f32 0.0, %v4420
        %v4422 = vpop.f32.mrb[0].mxu0
        %v4423 = vpop.f32.mrb[0].mxu0
        %v4424 = vadd.f32 0.0, %v4423
        %v4425 = vpop.f32.mrb[0].mxu0
        %4426 = vmatprep.mubr.bf16.mxu0 %v4309
        %4427 = vmatmul.mubr.bf16.gmra.mrb[0].mxu0 %v4308
        %v4428 = vpop.f32.mrb[0].mxu0
        %v4429 = vadd.f32 0.0, %v4428
        %v4430 = vpop.f32.mrb[0].mxu0
        %v4431 = vpop.f32.mrb[0].mxu0
        %v4432 = vadd.f32 0.0, %v4431
        %v4433 = vpop.f32.mrb[0].mxu0
        %4434 = vmatprep.mubr.bf16.mxu0 %v4311
        %4435 = vmatmul.mubr.bf16.gmra.mrb[0].mxu0 %v4310
        %v4436 = vpop.f32.mrb[0].mxu0
        %v4437 = vadd.f32 0.0, %v4436
        %v4438 = vpop.f32.mrb[0].mxu0
        %v4439 = vpop.f32.mrb[0].mxu0
        %v4440 = vadd.f32 0.0, %v4439
        %v4441 = vpop.f32.mrb[0].mxu0
        %4442 = vmatprep.mubr.bf16.mxu0 %v4313
        %4443 = vmatmul.mubr.bf16.gmra.mrb[0].mxu0 %v4312
        %v4444 = vpop.f32.mrb[0].mxu0
        %v4445 = vadd.f32 0.0, %v4444
        %v4446 = vpop.f32.mrb[0].mxu0
        %v4447 = vpop.f32.mrb[0].mxu0
        %v4448 = vadd.f32 0.0, %v4447
        %v4449 = vpop.f32.mrb[0].mxu0
        %4450 = vmatprep.mubr.bf16.mxu0 %v4315
        %4451 = vmatmul.mubr.bf16.gmra.mrb[0].mxu0 %v4314
        %v4452 = vpop.f32.mrb[0].mxu0
        %v4453 = vadd.f32 0.0, %v4452
        %v4454 = vpop.f32.mrb[0].mxu0
        %v4455 = vpop.f32.mrb[0].mxu0
        %v4456 = vadd.f32 0.0, %v4455
        %v4457 = vpop.f32.mrb[0].mxu0
        %4458 = vmatprep.mubr.bf16.mxu0 %v4317
        %4459 = vmatmul.mubr.bf16.gmra.mrb[0].mxu0 %v4316
        %v4460 = vpop.f32.mrb[0].mxu0
        %v4461 = vadd.f32 0.0, %v4460
        %v4462 = vpop.f32.mrb[0].mxu0
        %v4463 = vpop.f32.mrb[0].mxu0
        %v4464 = vadd.f32 0.0, %v4463
        %v4465 = vpop.f32.mrb[0].mxu0
        %4466 = vmatprep.mubr.bf16.mxu0 %v4319
        %4467 = vmatmul.mubr.bf16.gmra.mrb[0].mxu0 %v4318
        %v4468 = vpop.f32.mrb[0].mxu0
        %v4469 = vadd.f32 0.0, %v4468
        %v4470 = vpop.f32.mrb[0].mxu0
        %v4471 = vpop.f32.mrb[0].mxu0
        %v4472 = vadd.f32 0.0, %v4471
        %v4473 = vpop.f32.mrb[0].mxu0
        %4474 = vmatprep.mubr.bf16.mxu0 %v4321
        %4475 = vmatmul.mubr.bf16.gmra.mrb[0].mxu0 %v4320
        %v4476 = vpop.f32.mrb[0].mxu0
        %v4477 = vadd.f32 0.0, %v4476
        %v4478 = vpop.f32.mrb[0].mxu0
        %v4479 = vpop.f32.mrb[0].mxu0
        %v4480 = vadd.f32 0.0, %v4479
        %v4481 = vpop.f32.mrb[0].mxu0
        %4482 = vdwg.mxu0
        %v4483 = vmul.f32 %v4357, %v4227
        %v4484 = vmul.f32 %v4360, %v4229
        %v4485 = vmul.f32 %v4365, %v4231
        %v4486 = vmul.f32 %v4368, %v4233
        %v4487 = vmul.f32 %v4373, %v4235
        %v4488 = vmul.f32 %v4376, %v4237
        %v4489 = vmul.f32 %v4381, %v4239
        %v4490 = vmul.f32 %v4384, %v4241
        %v4491 = vmul.f32 %v4389, %v4243
        %v4492 = vmul.f32 %v4392, %v4245
        %v4493 = vmul.f32 %v4397, %v4247
        %v4494 = vmul.f32 %v4400, %v4249
        %v4495 = vmul.f32 %v4405, %v4251
        %v4496 = vmul.f32 %v4408, %v4253
        %v4497 = vmul.f32 %v4413, %v4255
        %v4498 = vmul.f32 %v4416, %v4257
        %v4499 = vmul.f32 %v4421, %v4259
        %v4500 = vmul.f32 %v4424, %v4261
        %v4501 = vmul.f32 %v4429, %v4263
        %v4502 = vmul.f32 %v4432, %v4265
        %v4503 = vmul.f32 %v4437, %v4267
        %v4504 = vmul.f32 %v4440, %v4269
        %v4505 = vmul.f32 %v4445, %v4271
        %v4506 = vmul.f32 %v4448, %v4273
        %v4507 = vmul.f32 %v4453, %v4275
        %v4508 = vmul.f32 %v4456, %v4277
        %v4509 = vmul.f32 %v4461, %v4279
        %v4510 = vmul.f32 %v4464, %v4281
        %v4511 = vmul.f32 %v4469, %v4283
        %v4512 = vmul.f32 %v4472, %v4285
        %v4513 = vmul.f32 %v4477, %v4287
        %v4514 = vmul.f32 %v4480, %v4289
        %v4516 = vsel %vm1464, %v4483, 0
        %v4519 = vsel %vm1464, %v4484, 0
        %v4522 = vsel %vm1464, %v4485, 0
        %v4525 = vsel %vm1464, %v4486, 0
        %v4528 = vsel %vm1464, %v4487, 0
        %v4531 = vsel %vm1464, %v4488, 0
        %v4534 = vsel %vm1464, %v4489, 0
        %v4537 = vsel %vm1464, %v4490, 0
        %v4540 = vsel %vm1464, %v4491, 0
        %v4543 = vsel %vm1464, %v4492, 0
        %v4546 = vsel %vm1464, %v4493, 0
        %v4549 = vsel %vm1464, %v4494, 0
        %v4552 = vsel %vm1464, %v4495, 0
        %v4555 = vsel %vm1464, %v4496, 0
        %v4558 = vsel %vm1464, %v4497, 0
        %v4561 = vsel %vm1464, %v4498, 0
        %v4564 = vsel %vm1464, %v4499, 0
        %v4567 = vsel %vm1464, %v4500, 0
        %v4570 = vsel %vm1464, %v4501, 0
        %v4573 = vsel %vm1464, %v4502, 0
        %v4576 = vsel %vm1464, %v4503, 0
        %v4579 = vsel %vm1464, %v4504, 0
        %v4582 = vsel %vm1464, %v4505, 0
        %v4585 = vsel %vm1464, %v4506, 0
        %v4588 = vsel %vm1464, %v4507, 0
        %v4591 = vsel %vm1464, %v4508, 0
        %v4594 = vsel %vm1464, %v4509, 0
        %v4597 = vsel %vm1464, %v4510, 0
        %v4600 = vsel %vm1464, %v4511, 0
        %v4603 = vsel %vm1464, %v4512, 0
        %v4606 = vsel %vm1464, %v4513, 0
        %v4609 = vsel %vm1464, %v4514, 0
        %4611 = vmatprep.subr.mxu0 0.0
        %4612 = vmatpush1.xpose.msra.mxu0 %v4516
        %4613 = vmatprep.subr.mxu0 0.0
        %4614 = vmatpush1.xpose.msra.mxu0 %v4519
        %4615 = vmatprep.subr.mxu0 0.0
        %4616 = vmatpush1.xpose.msra.mxu0 %v4522
        %4617 = vmatprep.subr.mxu0 0.0
        %4618 = vmatpush1.xpose.msra.mxu0 %v4525
        %4619 = vmatprep.subr.mxu0 0.0
        %4620 = vmatpush1.xpose.msra.mxu0 %v4528
        %4621 = vmatprep.subr.mxu0 0.0
        %4622 = vmatpush1.xpose.msra.mxu0 %v4531
        %4623 = vmatprep.subr.mxu0 0.0
        %4624 = vmatpush1.xpose.msra.mxu0 %v4534
        %4625 = vmatprep.subr.mxu0 0.0
        %4626 = vmatpush1.xpose.msra.mxu0 %v4537
        %4627 = vmatprep.subr.mxu0 0.0
        %4628 = vmatpush1.xpose.msra.mxu0 %v4540
        %4629 = vmatprep.subr.mxu0 0.0
        %4630 = vmatpush1.xpose.msra.mxu0 %v4543
        %4631 = vmatprep.subr.mxu0 0.0
        %4632 = vmatpush1.xpose.msra.mxu0 %v4546
        %4633 = vmatprep.subr.mxu0 0.0
        %4634 = vmatpush1.xpose.msra.mxu0 %v4549
        %4635 = vmatprep.subr.mxu0 0.0
        %4636 = vmatpush1.xpose.msra.mxu0 %v4552
        %4637 = vmatprep.subr.mxu0 0.0
        %4638 = vmatpush1.xpose.msra.mxu0 %v4555
        %4639 = vmatprep.subr.mxu0 0.0
        %4640 = vmatpush1.xpose.msra.mxu0 %v4558
        %4641 = vmatprep.subr.mxu0 0.0
        %4642 = vmatpush1.xpose.msra.mxu0 %v4561
        %4643 = vmatprep.subr.mxu0 0.0
        %4644 = vmatpush1.xpose.msra.mxu0 %v4564
        %4645 = vmatprep.subr.mxu0 0.0
        %4646 = vmatpush1.xpose.msra.mxu0 %v4567
        %4647 = vmatprep.subr.mxu0 0.0
        %4648 = vmatpush1.xpose.msra.mxu0 %v4570
        %4649 = vmatprep.subr.mxu0 0.0
        %4650 = vmatpush1.xpose.msra.mxu0 %v4573
        %4651 = vmatprep.subr.mxu0 0.0
        %4652 = vmatpush1.xpose.msra.mxu0 %v4576
        %4653 = vmatprep.subr.mxu0 0.0
        %4654 = vmatpush1.xpose.msra.mxu0 %v4579
        %4655 = vmatprep.subr.mxu0 0.0
        %4656 = vmatpush1.xpose.msra.mxu0 %v4582
        %4657 = vmatprep.subr.mxu0 0.0
        %4658 = vmatpush1.xpose.msra.mxu0 %v4585
        %4659 = vmatprep.subr.mxu0 0.0
        %4660 = vmatpush1.xpose.msra.mxu0 %v4588
        %4661 = vmatprep.subr.mxu0 0.0
        %4662 = vmatpush1.xpose.msra.mxu0 %v4591
        %4663 = vmatprep.subr.mxu0 0.0
        %4664 = vmatpush1.xpose.msra.mxu0 %v4594
        %4665 = vmatprep.subr.mxu0 0.0
        %4666 = vmatpush1.xpose.msra.mxu0 %v4597
        %4667 = vmatprep.subr.mxu0 0.0
        %4668 = vmatpush1.xpose.msra.mxu0 %v4600
        %4669 = vmatprep.subr.mxu0 0.0
        %4670 = vmatpush1.xpose.msra.mxu0 %v4603
        %4671 = vmatprep.subr.mxu0 0.0
        %4672 = vmatpush1.xpose.msra.mxu0 %v4606
        %4673 = vmatprep.subr.mxu0 0.0
        %4674 = vmatpush1.xpose.msra.mxu0 %v4609
        %4675 = vmatprep.mubr.f32.mxu0 0.0
        %4676 = vmatmul.mubr.f32.gmra.mrb[0].mxu0 %v2385
        %v4677 = vpop.f32.mrb[0].mxu0
        %v4678 = vadd.f32 %v2382, %v4677
        %v4679 = vpop.f32.mrb[0].mxu0
        %v4680 = vadd.f32 %v2382, %v4679
        %4681 = vdwg.mxu0
        %v4684 = vcombine.low %v4678, %v4680
        %s4686 = scalar_lea.vmem %s257, 8 [#allocation2]
        %4687 = vst [vmem:[%s4686] sm:$0xff] %v4684
        %s4688 = sand.u32 %s159, 1
        %s4689 = scalar_lea.sflag [#allocation3], %s4688
        %s4690 = sand.u32 %s159, 1
        %s4691 = smul.addr %s4690, 16
        %s4692 = scalar_lea.vmem [#allocation2], %s4691
        // Predicated region
        $region45: #{tpu_custom_call.1} parent=43 // pred_check
          %p4693 = pneg %p169
        $region46: #{tpu_custom_call.1} parent=43 // pred_check_branch
          %4695 = sbr.rel (%p4693) target = $region48
        $region47: #{tpu_custom_call.1} parent=43 // pred_region
          %s4696 = smul.u32 2, %s20
          %s4698 = ssub.s32 256, 256
          %4699 = vsyncadd %s4689, %s4698
          %s4700 = smul.addr %s4696, 2
          %s4701 = smul.addr %s4700, 64
          %s4702 = scalar_lea.hbm %s6, %s4701
          %s4703 = sshll.u32 %s4692, 4
          %s4704 = int_to_ptr.vmem [resolvable:$true] %s4703
          %4709 = dma.vmem_to_hbm [thread:$0]  %s4704, 256, %s4702, %s4689, 128, 128, 8
        $region48: #{tpu_custom_call.1} parent=43 // pred_fallthru
          _
      $region44: #{tpu_custom_call.1} parent=5 // pred_fallthru
        _
      %p4710 = scmp.le.s32.totalorder 2, %s15
      // Predicated region
      $region49: #{tpu_custom_call.1} parent=5 // pred_check
        %p4711 = pneg %p4710
      $region50: #{tpu_custom_call.1} parent=5 // pred_check_branch
        %4713 = sbr.rel (%p4711) target = $region52
      $region51: #{tpu_custom_call.1} parent=5 // pred_region
        %s4714 = ssub.s32 %s15, 2
        // Predicated region
        $region53: #{tpu_custom_call.1} parent=51 // pred_check
          %p4715 = pneg %p175
        $region54: #{tpu_custom_call.1} parent=51 // pred_check_branch
          %4717 = sbr.rel (%p4715) target = $region56
        $region55: #{tpu_custom_call.1} parent=51 // pred_region
          %s4718 = sand.u32 %s160, 1
          %s4719 = scalar_lea.sflag [#allocation3], %s4718
          %s4720 = sand.u32 %s160, 1
          %s4721 = smul.addr %s4720, 16
          %s4722 = scalar_lea.vmem [#allocation2], %s4721
          %4723 = dma.done %s4719, 256
        $region56: #{tpu_custom_call.1} parent=51 // pred_fallthru
          _
      $region52: #{tpu_custom_call.1} parent=5 // pred_fallthru
        _
    $region6: #{tpu_custom_call.1} parent=1 // loop_footer
      %s19 = sadd.s32 1, %s15
    $region7: #{tpu_custom_call.1} parent=1 // loop_footer_branch
      %14 = sbr.rel target = $region3
    $region8: #{tpu_custom_call.1} parent=1 // loop_exit
      _
    %4724 = vsyncpa [#allocation3], 1
    %s4725 = scalar_lea.sflag [#allocation3], 1
    %4726 = vsyncpa %s4725, 1

</llo_original>
